<compile_context>
chip_gen: v6e
topology: v6e:2x2x1
jax: 0.10.0
libtpu: 0.0.40
codegen_flags: <defaults>
</compile_context>

<pallas_src>
import jax
import jax.numpy as jnp
from jax import lax
from jax.experimental import pallas as pl
from jax.experimental.pallas import tpu as pltpu  # noqa: F401  (grid/compiler params if tiled later)

LEAKY_SLOPE = 0.01
BN_EPS = 1e-5
K = 5
PAD = 2


# --------------------------- fused per-layer conv + BN + LeakyReLU ---------------------------
def _conv_bn_lrelu_block(a, w_ref, gamma, beta):
    """Conv1d(k=5, pad=2, bias folded into BN) + BatchNorm1d(training stats) + LeakyReLU.

    a:      (B, L, Cin) f32 channels-last activation (VMEM value)
    w_ref:  Ref to (K, Cin, Cout) bf16 with w_ref[k][ci, co] == torch_weight[co, ci, k]
    gamma, beta: (1, Cout) f32
    returns (B, L, Cout) f32
    """
    B, L, Cin = a.shape

    # "same" padding halo built in-kernel (sublane-axis concat, cheap).
    zpad = jnp.zeros((B, PAD, Cin), jnp.float32)
    xp = jnp.concatenate([zpad, a, zpad], axis=1).astype(jnp.bfloat16)   # (B, L+4, Cin)

    # K accumulated MXU dots over shifted views (f32 accumulation) instead of a lane-axis
    # im2col concat: avoids the 5x activation copy and the lane relayout.
    acc = jnp.dot(xp[:, 0:L, :].reshape(B * L, Cin), w_ref[0],
                  preferred_element_type=jnp.float32)                    # (B*L, Cout)
    for k in range(1, K):
        acc = acc + jnp.dot(xp[:, k:k + L, :].reshape(B * L, Cin), w_ref[k],
                            preferred_element_type=jnp.float32)

    # BatchNorm1d training mode folded into one scale/shift: biased variance via
    # E[y^2] - mean^2 (single pass over acc), eps inside rsqrt — matches PyTorch.
    mean = jnp.mean(acc, axis=0, keepdims=True)                          # (1, Cout)
    mean_sq = jnp.mean(acc * acc, axis=0, keepdims=True)
    var = mean_sq - mean * mean
    scale = gamma * lax.rsqrt(var + BN_EPS)
    shift = beta - mean * scale
    y = acc * scale + shift

    # LeakyReLU(0.01): slope < 1 so max(y, slope*y) is exact.
    y = jnp.maximum(y, LEAKY_SLOPE * y)
    return y.reshape(B, L, a.shape[-1] * 0 + y.shape[-1])  # (B, L, Cout)


# ------------------------------------ fused encoder kernel -----------------------------------
def encoder_kernel(*refs):
    # refs layout: x_cl, (w, gamma, beta) * 5, wih, whh, b_lstm, o_ref
    x_ref = refs[0]
    conv_refs = refs[1:16]
    wih_ref, whh_ref, bl_ref = refs[16], refs[17], refs[18]
    o_ref = refs[19]

    B, L, _ = x_ref.shape
    H = o_ref.shape[-1]           # koopman size == LSTM hidden size

    # Input already channels-last (B, L, C_in) from the wrapper — no in-kernel transposes.
    a = x_ref[...]

    # ----- conv stack: activations stay resident in VMEM between layers -----
    for i in range(5):
        w_ref = conv_refs[3 * i]
        gamma = conv_refs[3 * i + 1][...]
        beta = conv_refs[3 * i + 2][...]
        a = _conv_bn_lrelu_block(a, w_ref, gamma, beta)                   # (B, L, C_i)

    # ----- LSTM, gate column order [i | f | o | g] (re-packed at init) -----
    wih = wih_ref[...]            # (H, 4H) bf16 == weight_ih_l0.T (gate cols permuted)
    whh = whh_ref[...]            # (H, 4H) bf16 == weight_hh_l0.T (gate cols permuted)
    b = bl_ref[...]               # (1, 4H) f32 == b_ih + b_hh

    # Hoisted input projection: all timesteps in one lane-dense (B*L, 4H) matmul.
    xg = jnp.dot(a.reshape(B * L, H).astype(jnp.bfloat16), wih,
                 preferred_element_type=jnp.float32) + b                  # (B*L, 4H)
    xg = xg.reshape(B, L, 4 * H)

    h = jnp.zeros((B, H), jnp.float32)
    c = jnp.zeros((B, H), jnp.float32)
    # Fully unrolled recurrence (L small & static): one tiny h @ W_hh dot per step,
    # 2 EUP launches per step (one sigmoid over i|f|o, one tanh), f32 cell state.
    for t in range(L):
        g = xg[:, t, :] + jnp.dot(h.astype(jnp.bfloat16), whh,
                                  preferred_element_type=jnp.float32)     # (B, 4H)
        s = jax.nn.sigmoid(g[:, 0:3 * H])        # i | f | o in a single contiguous slice
        i_g = s[:, 0 * H:1 * H]
        f_g = s[:, 1 * H:2 * H]
        o_g = s[:, 2 * H:3 * H]
        g_g = jnp.tanh(g[:, 3 * H:4 * H])
        c = f_g * c + i_g * g_g
        h = o_g * jnp.tanh(c)
        o_ref[:, t, :] = h                        # direct writeback, no list / transposes


# ----------------------------------------- wrapper -------------------------------------------
def encoder_forward(x, convs, lstm_params):
    """x: (B, C_in, L) float32 -> (B, koopman_size, L) float32 (single fused pallas_call)."""
    B, C_in, L = x.shape
    H = lstm_params[0].shape[0]

    # Layout plumbing in XLA (cheap): channels-last input, lane-dense (B, L, H) kernel output.
    x_cl = jnp.transpose(x, (0, 2, 1)).astype(jnp.float32)               # (B, L, C_in)

    flat_args = [x_cl]
    for (w, gamma, beta) in convs:
        flat_args += [w, gamma, beta]
    flat_args += list(lstm_params)

    out_blh = pl.pallas_call(
        encoder_kernel,
        out_shape=jax.ShapeDtypeStruct((B, L, H), jnp.float32),
    )(*flat_args)

    return jnp.transpose(out_blh, (0, 2, 1))                             # (B, H, L)


# ------------------------------------- parameter setup ---------------------------------------
def init_params(key, in_channels, koopman_size):
    channels = [in_channels, 32, 64, 128, 256, koopman_size]
    convs = []
    for i in range(5):
        cin, cout = channels[i], channels[i + 1]
        key, k1 = jax.random.split(key)
        bound = 1.0 / (cin * K) ** 0.5
        # bf16 weights in HBM, layout (K, Cin, Cout); w[k, ci, co] == torch weight [co, ci, k].
        w = jax.random.uniform(k1, (K, cin, cout), jnp.float32,
                               -bound, bound).astype(jnp.bfloat16)
        gamma = jnp.ones((1, cout), jnp.float32)   # BN weight init
        beta = jnp.zeros((1, cout), jnp.float32)   # BN bias init
        # Conv bias intentionally omitted: BN training-mode mean subtraction cancels it.
        convs.append((w, gamma, beta))

    H = koopman_size
    key, k1, k2, k3, k4 = jax.random.split(key, 5)
    bound = 1.0 / H ** 0.5
    # bf16 packed (H, 4H) == PyTorch weight_*_l0.T with gate blocks reordered [i | f | o | g]
    # (a pure column permutation of PyTorch's [i|f|g|o] packing).
    wih = jax.random.uniform(k1, (H, 4 * H), jnp.float32, -bound, bound).astype(jnp.bfloat16)
    whh = jax.random.uniform(k2, (H, 4 * H), jnp.float32, -bound, bound).astype(jnp.bfloat16)
    b_ih = jax.random.uniform(k3, (1, 4 * H), jnp.float32, -bound, bound)
    b_hh = jax.random.uniform(k4, (1, 4 * H), jnp.float32, -bound, bound)
    lstm = (wih, whh, b_ih + b_hh)
    return convs, lstm


if __name__ == "__main__":
    B, C_IN, L, KOOPMAN = 2, 4, 16, 32

    key = jax.random.PRNGKey(0)
    key, kx, kp = jax.random.split(key, 3)
    x = jax.random.normal(kx, (B, C_IN, L), jnp.float32)
    convs, lstm_params = init_params(kp, C_IN, KOOPMAN)

    fwd = jax.jit(encoder_forward)
    out = jax.block_until_ready(fwd(x, convs, lstm_params))

    assert out.shape == (B, KOOPMAN, L), out.shape
    assert jnp.all(jnp.isfinite(out))
    print("KERNEL_OK")
</pallas_src>

<mosaic_0001>
module attributes {stable_mosaic.version = 11 : i64} {
  func.func @encoder_kernel(%arg0: memref<2x16x4xf32, #tpu.memory_space<vmem>>, %arg1: memref<5x4x32xbf16, #tpu.memory_space<vmem>>, %arg2: memref<1x32xf32, #tpu.memory_space<vmem>>, %arg3: memref<1x32xf32, #tpu.memory_space<vmem>>, %arg4: memref<5x32x64xbf16, #tpu.memory_space<vmem>>, %arg5: memref<1x64xf32, #tpu.memory_space<vmem>>, %arg6: memref<1x64xf32, #tpu.memory_space<vmem>>, %arg7: memref<5x64x128xbf16, #tpu.memory_space<vmem>>, %arg8: memref<1x128xf32, #tpu.memory_space<vmem>>, %arg9: memref<1x128xf32, #tpu.memory_space<vmem>>, %arg10: memref<5x128x256xbf16, #tpu.memory_space<vmem>>, %arg11: memref<1x256xf32, #tpu.memory_space<vmem>>, %arg12: memref<1x256xf32, #tpu.memory_space<vmem>>, %arg13: memref<5x256x32xbf16, #tpu.memory_space<vmem>>, %arg14: memref<1x32xf32, #tpu.memory_space<vmem>>, %arg15: memref<1x32xf32, #tpu.memory_space<vmem>>, %arg16: memref<32x128xbf16, #tpu.memory_space<vmem>>, %arg17: memref<32x128xbf16, #tpu.memory_space<vmem>>, %arg18: memref<1x128xf32, #tpu.memory_space<vmem>>, %arg19: memref<2x16x32xf32, #tpu.memory_space<vmem>>) attributes {dimension_semantics = [], scalar_prefetch = 0 : i64, scratch_operands = 0 : i64, tpu.core_type = #tpu.core_type<tc>} {
    %c0 = arith.constant 0 : index
    %c0_0 = arith.constant 0 : index
    %c0_1 = arith.constant 0 : index
    %0 = vector.load %arg0[%c0, %c0_0, %c0_1] : memref<2x16x4xf32, #tpu.memory_space<vmem>>, vector<2x16x4xf32>
    %c0_2 = arith.constant 0 : index
    %c0_3 = arith.constant 0 : index
    %1 = vector.load %arg2[%c0_2, %c0_3] : memref<1x32xf32, #tpu.memory_space<vmem>>, vector<1x32xf32>
    %c0_4 = arith.constant 0 : index
    %c0_5 = arith.constant 0 : index
    %2 = vector.load %arg3[%c0_4, %c0_5] : memref<1x32xf32, #tpu.memory_space<vmem>>, vector<1x32xf32>
    %cst = arith.constant 0.000000e+00 : f32
    %3 = vector.broadcast %cst : f32 to vector<2x2x4xf32>
    %4 = tpu.concatenate %3, %0, %3 in 1 : vector<2x2x4xf32>, vector<2x16x4xf32>, vector<2x2x4xf32> -> vector<2x20x4xf32>
    %5 = arith.truncf %4 : vector<2x20x4xf32> to vector<2x20x4xbf16>
    %6 = vector.extract_strided_slice %5 {offsets = [0, 0, 0], sizes = [2, 16, 4], strides = [1, 1, 1]} : vector<2x20x4xbf16> to vector<2x16x4xbf16>
    %7 = vector.shape_cast %6 : vector<2x16x4xbf16> to vector<32x4xbf16>
    %c0_6 = arith.constant 0 : index
    %c0_7 = arith.constant 0 : index
    %c0_8 = arith.constant 0 : index
    %8 = vector.load %arg1[%c0_6, %c0_7, %c0_8] : memref<5x4x32xbf16, #tpu.memory_space<vmem>>, vector<1x4x32xbf16>
    %9 = vector.shape_cast %8 : vector<1x4x32xbf16> to vector<4x32xbf16>
    %cst_9 = arith.constant dense<0.000000e+00> : vector<32x32xf32>
    %10 = tpu.matmul %7, %9, %cst_9 {dimension_numbers = #tpu.dot_dimension_numbers<[1], [0], [0], [1], [0, 0, 1, 1], [], []>} : vector<32x4xbf16>, vector<4x32xbf16>, vector<32x32xf32> -> vector<32x32xf32>
    %11 = vector.extract_strided_slice %5 {offsets = [0, 1, 0], sizes = [2, 16, 4], strides = [1, 1, 1]} : vector<2x20x4xbf16> to vector<2x16x4xbf16>
    %12 = vector.shape_cast %11 : vector<2x16x4xbf16> to vector<32x4xbf16>
    %c1 = arith.constant 1 : index
    %c0_10 = arith.constant 0 : index
    %c0_11 = arith.constant 0 : index
    %13 = vector.load %arg1[%c1, %c0_10, %c0_11] : memref<5x4x32xbf16, #tpu.memory_space<vmem>>, vector<1x4x32xbf16>
    %14 = vector.shape_cast %13 : vector<1x4x32xbf16> to vector<4x32xbf16>
    %cst_12 = arith.constant dense<0.000000e+00> : vector<32x32xf32>
    %15 = tpu.matmul %12, %14, %cst_12 {dimension_numbers = #tpu.dot_dimension_numbers<[1], [0], [0], [1], [0, 0, 1, 1], [], []>} : vector<32x4xbf16>, vector<4x32xbf16>, vector<32x32xf32> -> vector<32x32xf32>
    %16 = arith.addf %10, %15 : vector<32x32xf32>
    %17 = vector.extract_strided_slice %5 {offsets = [0, 2, 0], sizes = [2, 16, 4], strides = [1, 1, 1]} : vector<2x20x4xbf16> to vector<2x16x4xbf16>
    %18 = vector.shape_cast %17 : vector<2x16x4xbf16> to vector<32x4xbf16>
    %c2 = arith.constant 2 : index
    %c0_13 = arith.constant 0 : index
    %c0_14 = arith.constant 0 : index
    %19 = vector.load %arg1[%c2, %c0_13, %c0_14] : memref<5x4x32xbf16, #tpu.memory_space<vmem>>, vector<1x4x32xbf16>
    %20 = vector.shape_cast %19 : vector<1x4x32xbf16> to vector<4x32xbf16>
    %cst_15 = arith.constant dense<0.000000e+00> : vector<32x32xf32>
    %21 = tpu.matmul %18, %20, %cst_15 {dimension_numbers = #tpu.dot_dimension_numbers<[1], [0], [0], [1], [0, 0, 1, 1], [], []>} : vector<32x4xbf16>, vector<4x32xbf16>, vector<32x32xf32> -> vector<32x32xf32>
    %22 = arith.addf %16, %21 : vector<32x32xf32>
    %23 = vector.extract_strided_slice %5 {offsets = [0, 3, 0], sizes = [2, 16, 4], strides = [1, 1, 1]} : vector<2x20x4xbf16> to vector<2x16x4xbf16>
    %24 = vector.shape_cast %23 : vector<2x16x4xbf16> to vector<32x4xbf16>
    %c3 = arith.constant 3 : index
    %c0_16 = arith.constant 0 : index
    %c0_17 = arith.constant 0 : index
    %25 = vector.load %arg1[%c3, %c0_16, %c0_17] : memref<5x4x32xbf16, #tpu.memory_space<vmem>>, vector<1x4x32xbf16>
    %26 = vector.shape_cast %25 : vector<1x4x32xbf16> to vector<4x32xbf16>
    %cst_18 = arith.constant dense<0.000000e+00> : vector<32x32xf32>
    %27 = tpu.matmul %24, %26, %cst_18 {dimension_numbers = #tpu.dot_dimension_numbers<[1], [0], [0], [1], [0, 0, 1, 1], [], []>} : vector<32x4xbf16>, vector<4x32xbf16>, vector<32x32xf32> -> vector<32x32xf32>
    %28 = arith.addf %22, %27 : vector<32x32xf32>
    %29 = vector.extract_strided_slice %5 {offsets = [0, 4, 0], sizes = [2, 16, 4], strides = [1, 1, 1]} : vector<2x20x4xbf16> to vector<2x16x4xbf16>
    %30 = vector.shape_cast %29 : vector<2x16x4xbf16> to vector<32x4xbf16>
    %c4 = arith.constant 4 : index
    %c0_19 = arith.constant 0 : index
    %c0_20 = arith.constant 0 : index
    %31 = vector.load %arg1[%c4, %c0_19, %c0_20] : memref<5x4x32xbf16, #tpu.memory_space<vmem>>, vector<1x4x32xbf16>
    %32 = vector.shape_cast %31 : vector<1x4x32xbf16> to vector<4x32xbf16>
    %cst_21 = arith.constant dense<0.000000e+00> : vector<32x32xf32>
    %33 = tpu.matmul %30, %32, %cst_21 {dimension_numbers = #tpu.dot_dimension_numbers<[1], [0], [0], [1], [0, 0, 1, 1], [], []>} : vector<32x4xbf16>, vector<4x32xbf16>, vector<32x32xf32> -> vector<32x32xf32>
    %34 = arith.addf %28, %33 : vector<32x32xf32>
    %cst_22 = arith.constant dense<0.000000e+00> : vector<32xf32>
    %35 = vector.multi_reduction <add>, %34, %cst_22 [0] : vector<32x32xf32> to vector<32xf32>
    %36 = vector.shape_cast %35 : vector<32xf32> to vector<1x32xf32>
    %cst_23 = arith.constant 3.200000e+01 : f32
    %37 = vector.broadcast %cst_23 : f32 to vector<1x32xf32>
    %38 = arith.divf %36, %37 : vector<1x32xf32>
    %39 = arith.mulf %34, %34 : vector<32x32xf32>
    %cst_24 = arith.constant dense<0.000000e+00> : vector<32xf32>
    %40 = vector.multi_reduction <add>, %39, %cst_24 [0] : vector<32x32xf32> to vector<32xf32>
    %41 = vector.shape_cast %40 : vector<32xf32> to vector<1x32xf32>
    %cst_25 = arith.constant 3.200000e+01 : f32
    %42 = vector.broadcast %cst_25 : f32 to vector<1x32xf32>
    %43 = arith.divf %41, %42 : vector<1x32xf32>
    %44 = arith.mulf %38, %38 : vector<1x32xf32>
    %45 = arith.subf %43, %44 : vector<1x32xf32>
    %cst_26 = arith.constant 9.99999974E-6 : f32
    %46 = vector.broadcast %cst_26 : f32 to vector<1x32xf32>
    %47 = arith.addf %45, %46 : vector<1x32xf32>
    %48 = math.rsqrt %47 : vector<1x32xf32>
    %49 = arith.mulf %1, %48 : vector<1x32xf32>
    %50 = arith.mulf %38, %49 : vector<1x32xf32>
    %51 = arith.subf %2, %50 : vector<1x32xf32>
    %52 = vector.broadcast %49 : vector<1x32xf32> to vector<32x32xf32>
    %53 = arith.mulf %34, %52 : vector<32x32xf32>
    %54 = vector.broadcast %51 : vector<1x32xf32> to vector<32x32xf32>
    %55 = arith.addf %53, %54 : vector<32x32xf32>
    %cst_27 = arith.constant 0.00999999977 : f32
    %56 = vector.broadcast %cst_27 : f32 to vector<32x32xf32>
    %57 = arith.mulf %56, %55 : vector<32x32xf32>
    %58 = arith.maximumf %55, %57 : vector<32x32xf32>
    %59 = vector.shape_cast %58 : vector<32x32xf32> to vector<2x16x32xf32>
    %c0_28 = arith.constant 0 : index
    %c0_29 = arith.constant 0 : index
    %60 = vector.load %arg5[%c0_28, %c0_29] : memref<1x64xf32, #tpu.memory_space<vmem>>, vector<1x64xf32>
    %c0_30 = arith.constant 0 : index
    %c0_31 = arith.constant 0 : index
    %61 = vector.load %arg6[%c0_30, %c0_31] : memref<1x64xf32, #tpu.memory_space<vmem>>, vector<1x64xf32>
    %cst_32 = arith.constant 0.000000e+00 : f32
    %62 = vector.broadcast %cst_32 : f32 to vector<2x2x32xf32>
    %63 = tpu.concatenate %62, %59, %62 in 1 : vector<2x2x32xf32>, vector<2x16x32xf32>, vector<2x2x32xf32> -> vector<2x20x32xf32>
    %64 = arith.truncf %63 : vector<2x20x32xf32> to vector<2x20x32xbf16>
    %65 = vector.extract_strided_slice %64 {offsets = [0, 0, 0], sizes = [2, 16, 32], strides = [1, 1, 1]} : vector<2x20x32xbf16> to vector<2x16x32xbf16>
    %66 = vector.shape_cast %65 : vector<2x16x32xbf16> to vector<32x32xbf16>
    %c0_33 = arith.constant 0 : index
    %c0_34 = arith.constant 0 : index
    %c0_35 = arith.constant 0 : index
    %67 = vector.load %arg4[%c0_33, %c0_34, %c0_35] : memref<5x32x64xbf16, #tpu.memory_space<vmem>>, vector<1x32x64xbf16>
    %68 = vector.shape_cast %67 : vector<1x32x64xbf16> to vector<32x64xbf16>
    %cst_36 = arith.constant dense<0.000000e+00> : vector<32x64xf32>
    %69 = tpu.matmul %66, %68, %cst_36 {dimension_numbers = #tpu.dot_dimension_numbers<[1], [0], [0], [1], [0, 0, 1, 1], [], []>} : vector<32x32xbf16>, vector<32x64xbf16>, vector<32x64xf32> -> vector<32x64xf32>
    %70 = vector.extract_strided_slice %64 {offsets = [0, 1, 0], sizes = [2, 16, 32], strides = [1, 1, 1]} : vector<2x20x32xbf16> to vector<2x16x32xbf16>
    %71 = vector.shape_cast %70 : vector<2x16x32xbf16> to vector<32x32xbf16>
    %c1_37 = arith.constant 1 : index
    %c0_38 = arith.constant 0 : index
    %c0_39 = arith.constant 0 : index
    %72 = vector.load %arg4[%c1_37, %c0_38, %c0_39] : memref<5x32x64xbf16, #tpu.memory_space<vmem>>, vector<1x32x64xbf16>
    %73 = vector.shape_cast %72 : vector<1x32x64xbf16> to vector<32x64xbf16>
    %cst_40 = arith.constant dense<0.000000e+00> : vector<32x64xf32>
    %74 = tpu.matmul %71, %73, %cst_40 {dimension_numbers = #tpu.dot_dimension_numbers<[1], [0], [0], [1], [0, 0, 1, 1], [], []>} : vector<32x32xbf16>, vector<32x64xbf16>, vector<32x64xf32> -> vector<32x64xf32>
    %75 = arith.addf %69, %74 : vector<32x64xf32>
    %76 = vector.extract_strided_slice %64 {offsets = [0, 2, 0], sizes = [2, 16, 32], strides = [1, 1, 1]} : vector<2x20x32xbf16> to vector<2x16x32xbf16>
    %77 = vector.shape_cast %76 : vector<2x16x32xbf16> to vector<32x32xbf16>
    %c2_41 = arith.constant 2 : index
    %c0_42 = arith.constant 0 : index
    %c0_43 = arith.constant 0 : index
    %78 = vector.load %arg4[%c2_41, %c0_42, %c0_43] : memref<5x32x64xbf16, #tpu.memory_space<vmem>>, vector<1x32x64xbf16>
    %79 = vector.shape_cast %78 : vector<1x32x64xbf16> to vector<32x64xbf16>
    %cst_44 = arith.constant dense<0.000000e+00> : vector<32x64xf32>
    %80 = tpu.matmul %77, %79, %cst_44 {dimension_numbers = #tpu.dot_dimension_numbers<[1], [0], [0], [1], [0, 0, 1, 1], [], []>} : vector<32x32xbf16>, vector<32x64xbf16>, vector<32x64xf32> -> vector<32x64xf32>
    %81 = arith.addf %75, %80 : vector<32x64xf32>
    %82 = vector.extract_strided_slice %64 {offsets = [0, 3, 0], sizes = [2, 16, 32], strides = [1, 1, 1]} : vector<2x20x32xbf16> to vector<2x16x32xbf16>
    %83 = vector.shape_cast %82 : vector<2x16x32xbf16> to vector<32x32xbf16>
    %c3_45 = arith.constant 3 : index
    %c0_46 = arith.constant 0 : index
    %c0_47 = arith.constant 0 : index
    %84 = vector.load %arg4[%c3_45, %c0_46, %c0_47] : memref<5x32x64xbf16, #tpu.memory_space<vmem>>, vector<1x32x64xbf16>
    %85 = vector.shape_cast %84 : vector<1x32x64xbf16> to vector<32x64xbf16>
    %cst_48 = arith.constant dense<0.000000e+00> : vector<32x64xf32>
    %86 = tpu.matmul %83, %85, %cst_48 {dimension_numbers = #tpu.dot_dimension_numbers<[1], [0], [0], [1], [0, 0, 1, 1], [], []>} : vector<32x32xbf16>, vector<32x64xbf16>, vector<32x64xf32> -> vector<32x64xf32>
    %87 = arith.addf %81, %86 : vector<32x64xf32>
    %88 = vector.extract_strided_slice %64 {offsets = [0, 4, 0], sizes = [2, 16, 32], strides = [1, 1, 1]} : vector<2x20x32xbf16> to vector<2x16x32xbf16>
    %89 = vector.shape_cast %88 : vector<2x16x32xbf16> to vector<32x32xbf16>
    %c4_49 = arith.constant 4 : index
    %c0_50 = arith.constant 0 : index
    %c0_51 = arith.constant 0 : index
    %90 = vector.load %arg4[%c4_49, %c0_50, %c0_51] : memref<5x32x64xbf16, #tpu.memory_space<vmem>>, vector<1x32x64xbf16>
    %91 = vector.shape_cast %90 : vector<1x32x64xbf16> to vector<32x64xbf16>
    %cst_52 = arith.constant dense<0.000000e+00> : vector<32x64xf32>
    %92 = tpu.matmul %89, %91, %cst_52 {dimension_numbers = #tpu.dot_dimension_numbers<[1], [0], [0], [1], [0, 0, 1, 1], [], []>} : vector<32x32xbf16>, vector<32x64xbf16>, vector<32x64xf32> -> vector<32x64xf32>
    %93 = arith.addf %87, %92 : vector<32x64xf32>
    %cst_53 = arith.constant dense<0.000000e+00> : vector<64xf32>
    %94 = vector.multi_reduction <add>, %93, %cst_53 [0] : vector<32x64xf32> to vector<64xf32>
    %95 = vector.shape_cast %94 : vector<64xf32> to vector<1x64xf32>
    %cst_54 = arith.constant 3.200000e+01 : f32
    %96 = vector.broadcast %cst_54 : f32 to vector<1x64xf32>
    %97 = arith.divf %95, %96 : vector<1x64xf32>
    %98 = arith.mulf %93, %93 : vector<32x64xf32>
    %cst_55 = arith.constant dense<0.000000e+00> : vector<64xf32>
    %99 = vector.multi_reduction <add>, %98, %cst_55 [0] : vector<32x64xf32> to vector<64xf32>
    %100 = vector.shape_cast %99 : vector<64xf32> to vector<1x64xf32>
    %cst_56 = arith.constant 3.200000e+01 : f32
    %101 = vector.broadcast %cst_56 : f32 to vector<1x64xf32>
    %102 = arith.divf %100, %101 : vector<1x64xf32>
    %103 = arith.mulf %97, %97 : vector<1x64xf32>
    %104 = arith.subf %102, %103 : vector<1x64xf32>
    %cst_57 = arith.constant 9.99999974E-6 : f32
    %105 = vector.broadcast %cst_57 : f32 to vector<1x64xf32>
    %106 = arith.addf %104, %105 : vector<1x64xf32>
    %107 = math.rsqrt %106 : vector<1x64xf32>
    %108 = arith.mulf %60, %107 : vector<1x64xf32>
    %109 = arith.mulf %97, %108 : vector<1x64xf32>
    %110 = arith.subf %61, %109 : vector<1x64xf32>
    %111 = vector.broadcast %108 : vector<1x64xf32> to vector<32x64xf32>
    %112 = arith.mulf %93, %111 : vector<32x64xf32>
    %113 = vector.broadcast %110 : vector<1x64xf32> to vector<32x64xf32>
    %114 = arith.addf %112, %113 : vector<32x64xf32>
    %cst_58 = arith.constant 0.00999999977 : f32
    %115 = vector.broadcast %cst_58 : f32 to vector<32x64xf32>
    %116 = arith.mulf %115, %114 : vector<32x64xf32>
    %117 = arith.maximumf %114, %116 : vector<32x64xf32>
    %118 = vector.shape_cast %117 : vector<32x64xf32> to vector<2x16x64xf32>
    %c0_59 = arith.constant 0 : index
    %c0_60 = arith.constant 0 : index
    %119 = vector.load %arg8[%c0_59, %c0_60] : memref<1x128xf32, #tpu.memory_space<vmem>>, vector<1x128xf32>
    %c0_61 = arith.constant 0 : index
    %c0_62 = arith.constant 0 : index
    %120 = vector.load %arg9[%c0_61, %c0_62] : memref<1x128xf32, #tpu.memory_space<vmem>>, vector<1x128xf32>
    %cst_63 = arith.constant 0.000000e+00 : f32
    %121 = vector.broadcast %cst_63 : f32 to vector<2x2x64xf32>
    %122 = tpu.concatenate %121, %118, %121 in 1 : vector<2x2x64xf32>, vector<2x16x64xf32>, vector<2x2x64xf32> -> vector<2x20x64xf32>
    %123 = arith.truncf %122 : vector<2x20x64xf32> to vector<2x20x64xbf16>
    %124 = vector.extract_strided_slice %123 {offsets = [0, 0, 0], sizes = [2, 16, 64], strides = [1, 1, 1]} : vector<2x20x64xbf16> to vector<2x16x64xbf16>
    %125 = vector.shape_cast %124 : vector<2x16x64xbf16> to vector<32x64xbf16>
    %c0_64 = arith.constant 0 : index
    %c0_65 = arith.constant 0 : index
    %c0_66 = arith.constant 0 : index
    %126 = vector.load %arg7[%c0_64, %c0_65, %c0_66] : memref<5x64x128xbf16, #tpu.memory_space<vmem>>, vector<1x64x128xbf16>
    %127 = vector.shape_cast %126 : vector<1x64x128xbf16> to vector<64x128xbf16>
    %cst_67 = arith.constant dense<0.000000e+00> : vector<32x128xf32>
    %128 = tpu.matmul %125, %127, %cst_67 {dimension_numbers = #tpu.dot_dimension_numbers<[1], [0], [0], [1], [0, 0, 1, 1], [], []>} : vector<32x64xbf16>, vector<64x128xbf16>, vector<32x128xf32> -> vector<32x128xf32>
    %129 = vector.extract_strided_slice %123 {offsets = [0, 1, 0], sizes = [2, 16, 64], strides = [1, 1, 1]} : vector<2x20x64xbf16> to vector<2x16x64xbf16>
    %130 = vector.shape_cast %129 : vector<2x16x64xbf16> to vector<32x64xbf16>
    %c1_68 = arith.constant 1 : index
    %c0_69 = arith.constant 0 : index
    %c0_70 = arith.constant 0 : index
    %131 = vector.load %arg7[%c1_68, %c0_69, %c0_70] : memref<5x64x128xbf16, #tpu.memory_space<vmem>>, vector<1x64x128xbf16>
    %132 = vector.shape_cast %131 : vector<1x64x128xbf16> to vector<64x128xbf16>
    %cst_71 = arith.constant dense<0.000000e+00> : vector<32x128xf32>
    %133 = tpu.matmul %130, %132, %cst_71 {dimension_numbers = #tpu.dot_dimension_numbers<[1], [0], [0], [1], [0, 0, 1, 1], [], []>} : vector<32x64xbf16>, vector<64x128xbf16>, vector<32x128xf32> -> vector<32x128xf32>
    %134 = arith.addf %128, %133 : vector<32x128xf32>
    %135 = vector.extract_strided_slice %123 {offsets = [0, 2, 0], sizes = [2, 16, 64], strides = [1, 1, 1]} : vector<2x20x64xbf16> to vector<2x16x64xbf16>
    %136 = vector.shape_cast %135 : vector<2x16x64xbf16> to vector<32x64xbf16>
    %c2_72 = arith.constant 2 : index
    %c0_73 = arith.constant 0 : index
    %c0_74 = arith.constant 0 : index
    %137 = vector.load %arg7[%c2_72, %c0_73, %c0_74] : memref<5x64x128xbf16, #tpu.memory_space<vmem>>, vector<1x64x128xbf16>
    %138 = vector.shape_cast %137 : vector<1x64x128xbf16> to vector<64x128xbf16>
    %cst_75 = arith.constant dense<0.000000e+00> : vector<32x128xf32>
    %139 = tpu.matmul %136, %138, %cst_75 {dimension_numbers = #tpu.dot_dimension_numbers<[1], [0], [0], [1], [0, 0, 1, 1], [], []>} : vector<32x64xbf16>, vector<64x128xbf16>, vector<32x128xf32> -> vector<32x128xf32>
    %140 = arith.addf %134, %139 : vector<32x128xf32>
    %141 = vector.extract_strided_slice %123 {offsets = [0, 3, 0], sizes = [2, 16, 64], strides = [1, 1, 1]} : vector<2x20x64xbf16> to vector<2x16x64xbf16>
    %142 = vector.shape_cast %141 : vector<2x16x64xbf16> to vector<32x64xbf16>
    %c3_76 = arith.constant 3 : index
    %c0_77 = arith.constant 0 : index
    %c0_78 = arith.constant 0 : index
    %143 = vector.load %arg7[%c3_76, %c0_77, %c0_78] : memref<5x64x128xbf16, #tpu.memory_space<vmem>>, vector<1x64x128xbf16>
    %144 = vector.shape_cast %143 : vector<1x64x128xbf16> to vector<64x128xbf16>
    %cst_79 = arith.constant dense<0.000000e+00> : vector<32x128xf32>
    %145 = tpu.matmul %142, %144, %cst_79 {dimension_numbers = #tpu.dot_dimension_numbers<[1], [0], [0], [1], [0, 0, 1, 1], [], []>} : vector<32x64xbf16>, vector<64x128xbf16>, vector<32x128xf32> -> vector<32x128xf32>
    %146 = arith.addf %140, %145 : vector<32x128xf32>
    %147 = vector.extract_strided_slice %123 {offsets = [0, 4, 0], sizes = [2, 16, 64], strides = [1, 1, 1]} : vector<2x20x64xbf16> to vector<2x16x64xbf16>
    %148 = vector.shape_cast %147 : vector<2x16x64xbf16> to vector<32x64xbf16>
    %c4_80 = arith.constant 4 : index
    %c0_81 = arith.constant 0 : index
    %c0_82 = arith.constant 0 : index
    %149 = vector.load %arg7[%c4_80, %c0_81, %c0_82] : memref<5x64x128xbf16, #tpu.memory_space<vmem>>, vector<1x64x128xbf16>
    %150 = vector.shape_cast %149 : vector<1x64x128xbf16> to vector<64x128xbf16>
    %cst_83 = arith.constant dense<0.000000e+00> : vector<32x128xf32>
    %151 = tpu.matmul %148, %150, %cst_83 {dimension_numbers = #tpu.dot_dimension_numbers<[1], [0], [0], [1], [0, 0, 1, 1], [], []>} : vector<32x64xbf16>, vector<64x128xbf16>, vector<32x128xf32> -> vector<32x128xf32>
    %152 = arith.addf %146, %151 : vector<32x128xf32>
    %cst_84 = arith.constant dense<0.000000e+00> : vector<128xf32>
    %153 = vector.multi_reduction <add>, %152, %cst_84 [0] : vector<32x128xf32> to vector<128xf32>
    %154 = vector.shape_cast %153 : vector<128xf32> to vector<1x128xf32>
    %cst_85 = arith.constant 3.200000e+01 : f32
    %155 = vector.broadcast %cst_85 : f32 to vector<1x128xf32>
    %156 = arith.divf %154, %155 : vector<1x128xf32>
    %157 = arith.mulf %152, %152 : vector<32x128xf32>
    %cst_86 = arith.constant dense<0.000000e+00> : vector<128xf32>
    %158 = vector.multi_reduction <add>, %157, %cst_86 [0] : vector<32x128xf32> to vector<128xf32>
    %159 = vector.shape_cast %158 : vector<128xf32> to vector<1x128xf32>
    %cst_87 = arith.constant 3.200000e+01 : f32
    %160 = vector.broadcast %cst_87 : f32 to vector<1x128xf32>
    %161 = arith.divf %159, %160 : vector<1x128xf32>
    %162 = arith.mulf %156, %156 : vector<1x128xf32>
    %163 = arith.subf %161, %162 : vector<1x128xf32>
    %cst_88 = arith.constant 9.99999974E-6 : f32
    %164 = vector.broadcast %cst_88 : f32 to vector<1x128xf32>
    %165 = arith.addf %163, %164 : vector<1x128xf32>
    %166 = math.rsqrt %165 : vector<1x128xf32>
    %167 = arith.mulf %119, %166 : vector<1x128xf32>
    %168 = arith.mulf %156, %167 : vector<1x128xf32>
    %169 = arith.subf %120, %168 : vector<1x128xf32>
    %170 = vector.broadcast %167 : vector<1x128xf32> to vector<32x128xf32>
    %171 = arith.mulf %152, %170 : vector<32x128xf32>
    %172 = vector.broadcast %169 : vector<1x128xf32> to vector<32x128xf32>
    %173 = arith.addf %171, %172 : vector<32x128xf32>
    %cst_89 = arith.constant 0.00999999977 : f32
    %174 = vector.broadcast %cst_89 : f32 to vector<32x128xf32>
    %175 = arith.mulf %174, %173 : vector<32x128xf32>
    %176 = arith.maximumf %173, %175 : vector<32x128xf32>
    %177 = vector.shape_cast %176 : vector<32x128xf32> to vector<2x16x128xf32>
    %c0_90 = arith.constant 0 : index
    %c0_91 = arith.constant 0 : index
    %178 = vector.load %arg11[%c0_90, %c0_91] : memref<1x256xf32, #tpu.memory_space<vmem>>, vector<1x256xf32>
    %c0_92 = arith.constant 0 : index
    %c0_93 = arith.constant 0 : index
    %179 = vector.load %arg12[%c0_92, %c0_93] : memref<1x256xf32, #tpu.memory_space<vmem>>, vector<1x256xf32>
    %cst_94 = arith.constant 0.000000e+00 : f32
    %180 = vector.broadcast %cst_94 : f32 to vector<2x2x128xf32>
    %181 = tpu.concatenate %180, %177, %180 in 1 : vector<2x2x128xf32>, vector<2x16x128xf32>, vector<2x2x128xf32> -> vector<2x20x128xf32>
    %182 = arith.truncf %181 : vector<2x20x128xf32> to vector<2x20x128xbf16>
    %183 = vector.extract_strided_slice %182 {offsets = [0, 0, 0], sizes = [2, 16, 128], strides = [1, 1, 1]} : vector<2x20x128xbf16> to vector<2x16x128xbf16>
    %184 = vector.shape_cast %183 : vector<2x16x128xbf16> to vector<32x128xbf16>
    %c0_95 = arith.constant 0 : index
    %c0_96 = arith.constant 0 : index
    %c0_97 = arith.constant 0 : index
    %185 = vector.load %arg10[%c0_95, %c0_96, %c0_97] : memref<5x128x256xbf16, #tpu.memory_space<vmem>>, vector<1x128x256xbf16>
    %186 = vector.shape_cast %185 : vector<1x128x256xbf16> to vector<128x256xbf16>
    %cst_98 = arith.constant dense<0.000000e+00> : vector<32x256xf32>
    %187 = tpu.matmul %184, %186, %cst_98 {dimension_numbers = #tpu.dot_dimension_numbers<[1], [0], [0], [1], [0, 0, 1, 1], [], []>} : vector<32x128xbf16>, vector<128x256xbf16>, vector<32x256xf32> -> vector<32x256xf32>
    %188 = vector.extract_strided_slice %182 {offsets = [0, 1, 0], sizes = [2, 16, 128], strides = [1, 1, 1]} : vector<2x20x128xbf16> to vector<2x16x128xbf16>
    %189 = vector.shape_cast %188 : vector<2x16x128xbf16> to vector<32x128xbf16>
    %c1_99 = arith.constant 1 : index
    %c0_100 = arith.constant 0 : index
    %c0_101 = arith.constant 0 : index
    %190 = vector.load %arg10[%c1_99, %c0_100, %c0_101] : memref<5x128x256xbf16, #tpu.memory_space<vmem>>, vector<1x128x256xbf16>
    %191 = vector.shape_cast %190 : vector<1x128x256xbf16> to vector<128x256xbf16>
    %cst_102 = arith.constant dense<0.000000e+00> : vector<32x256xf32>
    %192 = tpu.matmul %189, %191, %cst_102 {dimension_numbers = #tpu.dot_dimension_numbers<[1], [0], [0], [1], [0, 0, 1, 1], [], []>} : vector<32x128xbf16>, vector<128x256xbf16>, vector<32x256xf32> -> vector<32x256xf32>
    %193 = arith.addf %187, %192 : vector<32x256xf32>
    %194 = vector.extract_strided_slice %182 {offsets = [0, 2, 0], sizes = [2, 16, 128], strides = [1, 1, 1]} : vector<2x20x128xbf16> to vector<2x16x128xbf16>
    %195 = vector.shape_cast %194 : vector<2x16x128xbf16> to vector<32x128xbf16>
    %c2_103 = arith.constant 2 : index
    %c0_104 = arith.constant 0 : index
    %c0_105 = arith.constant 0 : index
    %196 = vector.load %arg10[%c2_103, %c0_104, %c0_105] : memref<5x128x256xbf16, #tpu.memory_space<vmem>>, vector<1x128x256xbf16>
    %197 = vector.shape_cast %196 : vector<1x128x256xbf16> to vector<128x256xbf16>
    %cst_106 = arith.constant dense<0.000000e+00> : vector<32x256xf32>
    %198 = tpu.matmul %195, %197, %cst_106 {dimension_numbers = #tpu.dot_dimension_numbers<[1], [0], [0], [1], [0, 0, 1, 1], [], []>} : vector<32x128xbf16>, vector<128x256xbf16>, vector<32x256xf32> -> vector<32x256xf32>
    %199 = arith.addf %193, %198 : vector<32x256xf32>
    %200 = vector.extract_strided_slice %182 {offsets = [0, 3, 0], sizes = [2, 16, 128], strides = [1, 1, 1]} : vector<2x20x128xbf16> to vector<2x16x128xbf16>
    %201 = vector.shape_cast %200 : vector<2x16x128xbf16> to vector<32x128xbf16>
    %c3_107 = arith.constant 3 : index
    %c0_108 = arith.constant 0 : index
    %c0_109 = arith.constant 0 : index
    %202 = vector.load %arg10[%c3_107, %c0_108, %c0_109] : memref<5x128x256xbf16, #tpu.memory_space<vmem>>, vector<1x128x256xbf16>
    %203 = vector.shape_cast %202 : vector<1x128x256xbf16> to vector<128x256xbf16>
    %cst_110 = arith.constant dense<0.000000e+00> : vector<32x256xf32>
    %204 = tpu.matmul %201, %203, %cst_110 {dimension_numbers = #tpu.dot_dimension_numbers<[1], [0], [0], [1], [0, 0, 1, 1], [], []>} : vector<32x128xbf16>, vector<128x256xbf16>, vector<32x256xf32> -> vector<32x256xf32>
    %205 = arith.addf %199, %204 : vector<32x256xf32>
    %206 = vector.extract_strided_slice %182 {offsets = [0, 4, 0], sizes = [2, 16, 128], strides = [1, 1, 1]} : vector<2x20x128xbf16> to vector<2x16x128xbf16>
    %207 = vector.shape_cast %206 : vector<2x16x128xbf16> to vector<32x128xbf16>
    %c4_111 = arith.constant 4 : index
    %c0_112 = arith.constant 0 : index
    %c0_113 = arith.constant 0 : index
    %208 = vector.load %arg10[%c4_111, %c0_112, %c0_113] : memref<5x128x256xbf16, #tpu.memory_space<vmem>>, vector<1x128x256xbf16>
    %209 = vector.shape_cast %208 : vector<1x128x256xbf16> to vector<128x256xbf16>
    %cst_114 = arith.constant dense<0.000000e+00> : vector<32x256xf32>
    %210 = tpu.matmul %207, %209, %cst_114 {dimension_numbers = #tpu.dot_dimension_numbers<[1], [0], [0], [1], [0, 0, 1, 1], [], []>} : vector<32x128xbf16>, vector<128x256xbf16>, vector<32x256xf32> -> vector<32x256xf32>
    %211 = arith.addf %205, %210 : vector<32x256xf32>
    %cst_115 = arith.constant dense<0.000000e+00> : vector<256xf32>
    %212 = vector.multi_reduction <add>, %211, %cst_115 [0] : vector<32x256xf32> to vector<256xf32>
    %213 = vector.shape_cast %212 : vector<256xf32> to vector<1x256xf32>
    %cst_116 = arith.constant 3.200000e+01 : f32
    %214 = vector.broadcast %cst_116 : f32 to vector<1x256xf32>
    %215 = arith.divf %213, %214 : vector<1x256xf32>
    %216 = arith.mulf %211, %211 : vector<32x256xf32>
    %cst_117 = arith.constant dense<0.000000e+00> : vector<256xf32>
    %217 = vector.multi_reduction <add>, %216, %cst_117 [0] : vector<32x256xf32> to vector<256xf32>
    %218 = vector.shape_cast %217 : vector<256xf32> to vector<1x256xf32>
    %cst_118 = arith.constant 3.200000e+01 : f32
    %219 = vector.broadcast %cst_118 : f32 to vector<1x256xf32>
    %220 = arith.divf %218, %219 : vector<1x256xf32>
    %221 = arith.mulf %215, %215 : vector<1x256xf32>
    %222 = arith.subf %220, %221 : vector<1x256xf32>
    %cst_119 = arith.constant 9.99999974E-6 : f32
    %223 = vector.broadcast %cst_119 : f32 to vector<1x256xf32>
    %224 = arith.addf %222, %223 : vector<1x256xf32>
    %225 = math.rsqrt %224 : vector<1x256xf32>
    %226 = arith.mulf %178, %225 : vector<1x256xf32>
    %227 = arith.mulf %215, %226 : vector<1x256xf32>
    %228 = arith.subf %179, %227 : vector<1x256xf32>
    %229 = vector.broadcast %226 : vector<1x256xf32> to vector<32x256xf32>
    %230 = arith.mulf %211, %229 : vector<32x256xf32>
    %231 = vector.broadcast %228 : vector<1x256xf32> to vector<32x256xf32>
    %232 = arith.addf %230, %231 : vector<32x256xf32>
    %cst_120 = arith.constant 0.00999999977 : f32
    %233 = vector.broadcast %cst_120 : f32 to vector<32x256xf32>
    %234 = arith.mulf %233, %232 : vector<32x256xf32>
    %235 = arith.maximumf %232, %234 : vector<32x256xf32>
    %236 = vector.shape_cast %235 : vector<32x256xf32> to vector<2x16x256xf32>
    %c0_121 = arith.constant 0 : index
    %c0_122 = arith.constant 0 : index
    %237 = vector.load %arg14[%c0_121, %c0_122] : memref<1x32xf32, #tpu.memory_space<vmem>>, vector<1x32xf32>
    %c0_123 = arith.constant 0 : index
    %c0_124 = arith.constant 0 : index
    %238 = vector.load %arg15[%c0_123, %c0_124] : memref<1x32xf32, #tpu.memory_space<vmem>>, vector<1x32xf32>
    %cst_125 = arith.constant 0.000000e+00 : f32
    %239 = vector.broadcast %cst_125 : f32 to vector<2x2x256xf32>
    %240 = tpu.concatenate %239, %236, %239 in 1 : vector<2x2x256xf32>, vector<2x16x256xf32>, vector<2x2x256xf32> -> vector<2x20x256xf32>
    %241 = arith.truncf %240 : vector<2x20x256xf32> to vector<2x20x256xbf16>
    %242 = vector.extract_strided_slice %241 {offsets = [0, 0, 0], sizes = [2, 16, 256], strides = [1, 1, 1]} : vector<2x20x256xbf16> to vector<2x16x256xbf16>
    %243 = vector.shape_cast %242 : vector<2x16x256xbf16> to vector<32x256xbf16>
    %c0_126 = arith.constant 0 : index
    %c0_127 = arith.constant 0 : index
    %c0_128 = arith.constant 0 : index
    %244 = vector.load %arg13[%c0_126, %c0_127, %c0_128] : memref<5x256x32xbf16, #tpu.memory_space<vmem>>, vector<1x256x32xbf16>
    %245 = vector.shape_cast %244 : vector<1x256x32xbf16> to vector<256x32xbf16>
    %cst_129 = arith.constant dense<0.000000e+00> : vector<32x32xf32>
    %246 = tpu.matmul %243, %245, %cst_129 {dimension_numbers = #tpu.dot_dimension_numbers<[1], [0], [0], [1], [0, 0, 1, 1], [], []>} : vector<32x256xbf16>, vector<256x32xbf16>, vector<32x32xf32> -> vector<32x32xf32>
    %247 = vector.extract_strided_slice %241 {offsets = [0, 1, 0], sizes = [2, 16, 256], strides = [1, 1, 1]} : vector<2x20x256xbf16> to vector<2x16x256xbf16>
    %248 = vector.shape_cast %247 : vector<2x16x256xbf16> to vector<32x256xbf16>
    %c1_130 = arith.constant 1 : index
    %c0_131 = arith.constant 0 : index
    %c0_132 = arith.constant 0 : index
    %249 = vector.load %arg13[%c1_130, %c0_131, %c0_132] : memref<5x256x32xbf16, #tpu.memory_space<vmem>>, vector<1x256x32xbf16>
    %250 = vector.shape_cast %249 : vector<1x256x32xbf16> to vector<256x32xbf16>
    %cst_133 = arith.constant dense<0.000000e+00> : vector<32x32xf32>
    %251 = tpu.matmul %248, %250, %cst_133 {dimension_numbers = #tpu.dot_dimension_numbers<[1], [0], [0], [1], [0, 0, 1, 1], [], []>} : vector<32x256xbf16>, vector<256x32xbf16>, vector<32x32xf32> -> vector<32x32xf32>
    %252 = arith.addf %246, %251 : vector<32x32xf32>
    %253 = vector.extract_strided_slice %241 {offsets = [0, 2, 0], sizes = [2, 16, 256], strides = [1, 1, 1]} : vector<2x20x256xbf16> to vector<2x16x256xbf16>
    %254 = vector.shape_cast %253 : vector<2x16x256xbf16> to vector<32x256xbf16>
    %c2_134 = arith.constant 2 : index
    %c0_135 = arith.constant 0 : index
    %c0_136 = arith.constant 0 : index
    %255 = vector.load %arg13[%c2_134, %c0_135, %c0_136] : memref<5x256x32xbf16, #tpu.memory_space<vmem>>, vector<1x256x32xbf16>
    %256 = vector.shape_cast %255 : vector<1x256x32xbf16> to vector<256x32xbf16>
    %cst_137 = arith.constant dense<0.000000e+00> : vector<32x32xf32>
    %257 = tpu.matmul %254, %256, %cst_137 {dimension_numbers = #tpu.dot_dimension_numbers<[1], [0], [0], [1], [0, 0, 1, 1], [], []>} : vector<32x256xbf16>, vector<256x32xbf16>, vector<32x32xf32> -> vector<32x32xf32>
    %258 = arith.addf %252, %257 : vector<32x32xf32>
    %259 = vector.extract_strided_slice %241 {offsets = [0, 3, 0], sizes = [2, 16, 256], strides = [1, 1, 1]} : vector<2x20x256xbf16> to vector<2x16x256xbf16>
    %260 = vector.shape_cast %259 : vector<2x16x256xbf16> to vector<32x256xbf16>
    %c3_138 = arith.constant 3 : index
    %c0_139 = arith.constant 0 : index
    %c0_140 = arith.constant 0 : index
    %261 = vector.load %arg13[%c3_138, %c0_139, %c0_140] : memref<5x256x32xbf16, #tpu.memory_space<vmem>>, vector<1x256x32xbf16>
    %262 = vector.shape_cast %261 : vector<1x256x32xbf16> to vector<256x32xbf16>
    %cst_141 = arith.constant dense<0.000000e+00> : vector<32x32xf32>
    %263 = tpu.matmul %260, %262, %cst_141 {dimension_numbers = #tpu.dot_dimension_numbers<[1], [0], [0], [1], [0, 0, 1, 1], [], []>} : vector<32x256xbf16>, vector<256x32xbf16>, vector<32x32xf32> -> vector<32x32xf32>
    %264 = arith.addf %258, %263 : vector<32x32xf32>
    %265 = vector.extract_strided_slice %241 {offsets = [0, 4, 0], sizes = [2, 16, 256], strides = [1, 1, 1]} : vector<2x20x256xbf16> to vector<2x16x256xbf16>
    %266 = vector.shape_cast %265 : vector<2x16x256xbf16> to vector<32x256xbf16>
    %c4_142 = arith.constant 4 : index
    %c0_143 = arith.constant 0 : index
    %c0_144 = arith.constant 0 : index
    %267 = vector.load %arg13[%c4_142, %c0_143, %c0_144] : memref<5x256x32xbf16, #tpu.memory_space<vmem>>, vector<1x256x32xbf16>
    %268 = vector.shape_cast %267 : vector<1x256x32xbf16> to vector<256x32xbf16>
    %cst_145 = arith.constant dense<0.000000e+00> : vector<32x32xf32>
    %269 = tpu.matmul %266, %268, %cst_145 {dimension_numbers = #tpu.dot_dimension_numbers<[1], [0], [0], [1], [0, 0, 1, 1], [], []>} : vector<32x256xbf16>, vector<256x32xbf16>, vector<32x32xf32> -> vector<32x32xf32>
    %270 = arith.addf %264, %269 : vector<32x32xf32>
    %cst_146 = arith.constant dense<0.000000e+00> : vector<32xf32>
    %271 = vector.multi_reduction <add>, %270, %cst_146 [0] : vector<32x32xf32> to vector<32xf32>
    %272 = vector.shape_cast %271 : vector<32xf32> to vector<1x32xf32>
    %cst_147 = arith.constant 3.200000e+01 : f32
    %273 = vector.broadcast %cst_147 : f32 to vector<1x32xf32>
    %274 = arith.divf %272, %273 : vector<1x32xf32>
    %275 = arith.mulf %270, %270 : vector<32x32xf32>
    %cst_148 = arith.constant dense<0.000000e+00> : vector<32xf32>
    %276 = vector.multi_reduction <add>, %275, %cst_148 [0] : vector<32x32xf32> to vector<32xf32>
    %277 = vector.shape_cast %276 : vector<32xf32> to vector<1x32xf32>
    %cst_149 = arith.constant 3.200000e+01 : f32
    %278 = vector.broadcast %cst_149 : f32 to vector<1x32xf32>
    %279 = arith.divf %277, %278 : vector<1x32xf32>
    %280 = arith.mulf %274, %274 : vector<1x32xf32>
    %281 = arith.subf %279, %280 : vector<1x32xf32>
    %cst_150 = arith.constant 9.99999974E-6 : f32
    %282 = vector.broadcast %cst_150 : f32 to vector<1x32xf32>
    %283 = arith.addf %281, %282 : vector<1x32xf32>
    %284 = math.rsqrt %283 : vector<1x32xf32>
    %285 = arith.mulf %237, %284 : vector<1x32xf32>
    %286 = arith.mulf %274, %285 : vector<1x32xf32>
    %287 = arith.subf %238, %286 : vector<1x32xf32>
    %288 = vector.broadcast %285 : vector<1x32xf32> to vector<32x32xf32>
    %289 = arith.mulf %270, %288 : vector<32x32xf32>
    %290 = vector.broadcast %287 : vector<1x32xf32> to vector<32x32xf32>
    %291 = arith.addf %289, %290 : vector<32x32xf32>
    %cst_151 = arith.constant 0.00999999977 : f32
    %292 = vector.broadcast %cst_151 : f32 to vector<32x32xf32>
    %293 = arith.mulf %292, %291 : vector<32x32xf32>
    %294 = arith.maximumf %291, %293 : vector<32x32xf32>
    %295 = vector.shape_cast %294 : vector<32x32xf32> to vector<2x16x32xf32>
    %c0_152 = arith.constant 0 : index
    %c0_153 = arith.constant 0 : index
    %296 = vector.load %arg16[%c0_152, %c0_153] : memref<32x128xbf16, #tpu.memory_space<vmem>>, vector<32x128xbf16>
    %c0_154 = arith.constant 0 : index
    %c0_155 = arith.constant 0 : index
    %297 = vector.load %arg17[%c0_154, %c0_155] : memref<32x128xbf16, #tpu.memory_space<vmem>>, vector<32x128xbf16>
    %c0_156 = arith.constant 0 : index
    %c0_157 = arith.constant 0 : index
    %298 = vector.load %arg18[%c0_156, %c0_157] : memref<1x128xf32, #tpu.memory_space<vmem>>, vector<1x128xf32>
    %299 = vector.shape_cast %295 : vector<2x16x32xf32> to vector<32x32xf32>
    %300 = arith.truncf %299 : vector<32x32xf32> to vector<32x32xbf16>
    %cst_158 = arith.constant dense<0.000000e+00> : vector<32x128xf32>
    %301 = tpu.matmul %300, %296, %cst_158 {dimension_numbers = #tpu.dot_dimension_numbers<[1], [0], [0], [1], [0, 0, 1, 1], [], []>} : vector<32x32xbf16>, vector<32x128xbf16>, vector<32x128xf32> -> vector<32x128xf32>
    %302 = vector.broadcast %298 : vector<1x128xf32> to vector<32x128xf32>
    %303 = arith.addf %301, %302 : vector<32x128xf32>
    %304 = vector.shape_cast %303 : vector<32x128xf32> to vector<2x16x128xf32>
    %cst_159 = arith.constant 0.000000e+00 : f32
    %305 = vector.broadcast %cst_159 : f32 to vector<2x32xf32>
    %cst_160 = arith.constant 0.000000e+00 : f32
    %306 = vector.broadcast %cst_160 : f32 to vector<2x32xf32>
    %307 = vector.extract_strided_slice %304 {offsets = [0, 0, 0], sizes = [2, 1, 128], strides = [1, 1, 1]} : vector<2x16x128xf32> to vector<2x1x128xf32>
    %308 = vector.shape_cast %307 : vector<2x1x128xf32> to vector<2x128xf32>
    %309 = arith.truncf %305 : vector<2x32xf32> to vector<2x32xbf16>
    %cst_161 = arith.constant dense<0.000000e+00> : vector<2x128xf32>
    %310 = tpu.matmul %309, %297, %cst_161 {dimension_numbers = #tpu.dot_dimension_numbers<[1], [0], [0], [1], [0, 0, 1, 1], [], []>} : vector<2x32xbf16>, vector<32x128xbf16>, vector<2x128xf32> -> vector<2x128xf32>
    %311 = arith.addf %308, %310 : vector<2x128xf32>
    %312 = vector.extract_strided_slice %311 {offsets = [0, 0], sizes = [2, 96], strides = [1, 1]} : vector<2x128xf32> to vector<2x96xf32>
    %313 = arith.negf %312 : vector<2x96xf32>
    %314 = math.exp %313 : vector<2x96xf32>
    %cst_162 = arith.constant 1.000000e+00 : f32
    %315 = vector.broadcast %cst_162 : f32 to vector<2x96xf32>
    %316 = arith.addf %315, %314 : vector<2x96xf32>
    %317 = arith.divf %315, %316 : vector<2x96xf32>
    %318 = vector.extract_strided_slice %317 {offsets = [0, 0], sizes = [2, 32], strides = [1, 1]} : vector<2x96xf32> to vector<2x32xf32>
    %319 = vector.extract_strided_slice %317 {offsets = [0, 32], sizes = [2, 32], strides = [1, 1]} : vector<2x96xf32> to vector<2x32xf32>
    %320 = vector.extract_strided_slice %317 {offsets = [0, 64], sizes = [2, 32], strides = [1, 1]} : vector<2x96xf32> to vector<2x32xf32>
    %321 = vector.extract_strided_slice %311 {offsets = [0, 96], sizes = [2, 32], strides = [1, 1]} : vector<2x128xf32> to vector<2x32xf32>
    %322 = math.tanh %321 : vector<2x32xf32>
    %323 = arith.mulf %319, %306 : vector<2x32xf32>
    %324 = arith.mulf %318, %322 : vector<2x32xf32>
    %325 = arith.addf %323, %324 : vector<2x32xf32>
    %326 = math.tanh %325 : vector<2x32xf32>
    %327 = arith.mulf %320, %326 : vector<2x32xf32>
    %c0_163 = arith.constant 0 : index
    %c0_164 = arith.constant 0 : index
    %c0_165 = arith.constant 0 : index
    %328 = vector.load %arg19[%c0_163, %c0_164, %c0_165] : memref<2x16x32xf32, #tpu.memory_space<vmem>>, vector<2x1x32xf32>
    %329 = vector.shape_cast %328 : vector<2x1x32xf32> to vector<2x32xf32>
    %330 = vector.shape_cast %327 : vector<2x32xf32> to vector<2x1x32xf32>
    tpu.vector_store %arg19[%c0_163, %c0_164, %c0_165], %330 {strides = array<i32>} : memref<2x16x32xf32, #tpu.memory_space<vmem>>, vector<2x1x32xf32>,
    %331 = vector.extract_strided_slice %304 {offsets = [0, 1, 0], sizes = [2, 1, 128], strides = [1, 1, 1]} : vector<2x16x128xf32> to vector<2x1x128xf32>
    %332 = vector.shape_cast %331 : vector<2x1x128xf32> to vector<2x128xf32>
    %333 = arith.truncf %327 : vector<2x32xf32> to vector<2x32xbf16>
    %cst_166 = arith.constant dense<0.000000e+00> : vector<2x128xf32>
    %334 = tpu.matmul %333, %297, %cst_166 {dimension_numbers = #tpu.dot_dimension_numbers<[1], [0], [0], [1], [0, 0, 1, 1], [], []>} : vector<2x32xbf16>, vector<32x128xbf16>, vector<2x128xf32> -> vector<2x128xf32>
    %335 = arith.addf %332, %334 : vector<2x128xf32>
    %336 = vector.extract_strided_slice %335 {offsets = [0, 0], sizes = [2, 96], strides = [1, 1]} : vector<2x128xf32> to vector<2x96xf32>
    %337 = arith.negf %336 : vector<2x96xf32>
    %338 = math.exp %337 : vector<2x96xf32>
    %cst_167 = arith.constant 1.000000e+00 : f32
    %339 = vector.broadcast %cst_167 : f32 to vector<2x96xf32>
    %340 = arith.addf %339, %338 : vector<2x96xf32>
    %341 = arith.divf %339, %340 : vector<2x96xf32>
    %342 = vector.extract_strided_slice %341 {offsets = [0, 0], sizes = [2, 32], strides = [1, 1]} : vector<2x96xf32> to vector<2x32xf32>
    %343 = vector.extract_strided_slice %341 {offsets = [0, 32], sizes = [2, 32], strides = [1, 1]} : vector<2x96xf32> to vector<2x32xf32>
    %344 = vector.extract_strided_slice %341 {offsets = [0, 64], sizes = [2, 32], strides = [1, 1]} : vector<2x96xf32> to vector<2x32xf32>
    %345 = vector.extract_strided_slice %335 {offsets = [0, 96], sizes = [2, 32], strides = [1, 1]} : vector<2x128xf32> to vector<2x32xf32>
    %346 = math.tanh %345 : vector<2x32xf32>
    %347 = arith.mulf %343, %325 : vector<2x32xf32>
    %348 = arith.mulf %342, %346 : vector<2x32xf32>
    %349 = arith.addf %347, %348 : vector<2x32xf32>
    %350 = math.tanh %349 : vector<2x32xf32>
    %351 = arith.mulf %344, %350 : vector<2x32xf32>
    %c0_168 = arith.constant 0 : index
    %c1_169 = arith.constant 1 : index
    %c0_170 = arith.constant 0 : index
    %352 = vector.load %arg19[%c0_168, %c1_169, %c0_170] : memref<2x16x32xf32, #tpu.memory_space<vmem>>, vector<2x1x32xf32>
    %353 = vector.shape_cast %352 : vector<2x1x32xf32> to vector<2x32xf32>
    %354 = vector.shape_cast %351 : vector<2x32xf32> to vector<2x1x32xf32>
    tpu.vector_store %arg19[%c0_168, %c1_169, %c0_170], %354 {strides = array<i32>} : memref<2x16x32xf32, #tpu.memory_space<vmem>>, vector<2x1x32xf32>,
    %355 = vector.extract_strided_slice %304 {offsets = [0, 2, 0], sizes = [2, 1, 128], strides = [1, 1, 1]} : vector<2x16x128xf32> to vector<2x1x128xf32>
    %356 = vector.shape_cast %355 : vector<2x1x128xf32> to vector<2x128xf32>
    %357 = arith.truncf %351 : vector<2x32xf32> to vector<2x32xbf16>
    %cst_171 = arith.constant dense<0.000000e+00> : vector<2x128xf32>
    %358 = tpu.matmul %357, %297, %cst_171 {dimension_numbers = #tpu.dot_dimension_numbers<[1], [0], [0], [1], [0, 0, 1, 1], [], []>} : vector<2x32xbf16>, vector<32x128xbf16>, vector<2x128xf32> -> vector<2x128xf32>
    %359 = arith.addf %356, %358 : vector<2x128xf32>
    %360 = vector.extract_strided_slice %359 {offsets = [0, 0], sizes = [2, 96], strides = [1, 1]} : vector<2x128xf32> to vector<2x96xf32>
    %361 = arith.negf %360 : vector<2x96xf32>
    %362 = math.exp %361 : vector<2x96xf32>
    %cst_172 = arith.constant 1.000000e+00 : f32
    %363 = vector.broadcast %cst_172 : f32 to vector<2x96xf32>
    %364 = arith.addf %363, %362 : vector<2x96xf32>
    %365 = arith.divf %363, %364 : vector<2x96xf32>
    %366 = vector.extract_strided_slice %365 {offsets = [0, 0], sizes = [2, 32], strides = [1, 1]} : vector<2x96xf32> to vector<2x32xf32>
    %367 = vector.extract_strided_slice %365 {offsets = [0, 32], sizes = [2, 32], strides = [1, 1]} : vector<2x96xf32> to vector<2x32xf32>
    %368 = vector.extract_strided_slice %365 {offsets = [0, 64], sizes = [2, 32], strides = [1, 1]} : vector<2x96xf32> to vector<2x32xf32>
    %369 = vector.extract_strided_slice %359 {offsets = [0, 96], sizes = [2, 32], strides = [1, 1]} : vector<2x128xf32> to vector<2x32xf32>
    %370 = math.tanh %369 : vector<2x32xf32>
    %371 = arith.mulf %367, %349 : vector<2x32xf32>
    %372 = arith.mulf %366, %370 : vector<2x32xf32>
    %373 = arith.addf %371, %372 : vector<2x32xf32>
    %374 = math.tanh %373 : vector<2x32xf32>
    %375 = arith.mulf %368, %374 : vector<2x32xf32>
    %c0_173 = arith.constant 0 : index
    %c2_174 = arith.constant 2 : index
    %c0_175 = arith.constant 0 : index
    %376 = vector.load %arg19[%c0_173, %c2_174, %c0_175] : memref<2x16x32xf32, #tpu.memory_space<vmem>>, vector<2x1x32xf32>
    %377 = vector.shape_cast %376 : vector<2x1x32xf32> to vector<2x32xf32>
    %378 = vector.shape_cast %375 : vector<2x32xf32> to vector<2x1x32xf32>
    tpu.vector_store %arg19[%c0_173, %c2_174, %c0_175], %378 {strides = array<i32>} : memref<2x16x32xf32, #tpu.memory_space<vmem>>, vector<2x1x32xf32>,
    %379 = vector.extract_strided_slice %304 {offsets = [0, 3, 0], sizes = [2, 1, 128], strides = [1, 1, 1]} : vector<2x16x128xf32> to vector<2x1x128xf32>
    %380 = vector.shape_cast %379 : vector<2x1x128xf32> to vector<2x128xf32>
    %381 = arith.truncf %375 : vector<2x32xf32> to vector<2x32xbf16>
    %cst_176 = arith.constant dense<0.000000e+00> : vector<2x128xf32>
    %382 = tpu.matmul %381, %297, %cst_176 {dimension_numbers = #tpu.dot_dimension_numbers<[1], [0], [0], [1], [0, 0, 1, 1], [], []>} : vector<2x32xbf16>, vector<32x128xbf16>, vector<2x128xf32> -> vector<2x128xf32>
    %383 = arith.addf %380, %382 : vector<2x128xf32>
    %384 = vector.extract_strided_slice %383 {offsets = [0, 0], sizes = [2, 96], strides = [1, 1]} : vector<2x128xf32> to vector<2x96xf32>
    %385 = arith.negf %384 : vector<2x96xf32>
    %386 = math.exp %385 : vector<2x96xf32>
    %cst_177 = arith.constant 1.000000e+00 : f32
    %387 = vector.broadcast %cst_177 : f32 to vector<2x96xf32>
    %388 = arith.addf %387, %386 : vector<2x96xf32>
    %389 = arith.divf %387, %388 : vector<2x96xf32>
    %390 = vector.extract_strided_slice %389 {offsets = [0, 0], sizes = [2, 32], strides = [1, 1]} : vector<2x96xf32> to vector<2x32xf32>
    %391 = vector.extract_strided_slice %389 {offsets = [0, 32], sizes = [2, 32], strides = [1, 1]} : vector<2x96xf32> to vector<2x32xf32>
    %392 = vector.extract_strided_slice %389 {offsets = [0, 64], sizes = [2, 32], strides = [1, 1]} : vector<2x96xf32> to vector<2x32xf32>
    %393 = vector.extract_strided_slice %383 {offsets = [0, 96], sizes = [2, 32], strides = [1, 1]} : vector<2x128xf32> to vector<2x32xf32>
    %394 = math.tanh %393 : vector<2x32xf32>
    %395 = arith.mulf %391, %373 : vector<2x32xf32>
    %396 = arith.mulf %390, %394 : vector<2x32xf32>
    %397 = arith.addf %395, %396 : vector<2x32xf32>
    %398 = math.tanh %397 : vector<2x32xf32>
    %399 = arith.mulf %392, %398 : vector<2x32xf32>
    %c0_178 = arith.constant 0 : index
    %c3_179 = arith.constant 3 : index
    %c0_180 = arith.constant 0 : index
    %400 = vector.load %arg19[%c0_178, %c3_179, %c0_180] : memref<2x16x32xf32, #tpu.memory_space<vmem>>, vector<2x1x32xf32>
    %401 = vector.shape_cast %400 : vector<2x1x32xf32> to vector<2x32xf32>
    %402 = vector.shape_cast %399 : vector<2x32xf32> to vector<2x1x32xf32>
    tpu.vector_store %arg19[%c0_178, %c3_179, %c0_180], %402 {strides = array<i32>} : memref<2x16x32xf32, #tpu.memory_space<vmem>>, vector<2x1x32xf32>,
    %403 = vector.extract_strided_slice %304 {offsets = [0, 4, 0], sizes = [2, 1, 128], strides = [1, 1, 1]} : vector<2x16x128xf32> to vector<2x1x128xf32>
    %404 = vector.shape_cast %403 : vector<2x1x128xf32> to vector<2x128xf32>
    %405 = arith.truncf %399 : vector<2x32xf32> to vector<2x32xbf16>
    %cst_181 = arith.constant dense<0.000000e+00> : vector<2x128xf32>
    %406 = tpu.matmul %405, %297, %cst_181 {dimension_numbers = #tpu.dot_dimension_numbers<[1], [0], [0], [1], [0, 0, 1, 1], [], []>} : vector<2x32xbf16>, vector<32x128xbf16>, vector<2x128xf32> -> vector<2x128xf32>
    %407 = arith.addf %404, %406 : vector<2x128xf32>
    %408 = vector.extract_strided_slice %407 {offsets = [0, 0], sizes = [2, 96], strides = [1, 1]} : vector<2x128xf32> to vector<2x96xf32>
    %409 = arith.negf %408 : vector<2x96xf32>
    %410 = math.exp %409 : vector<2x96xf32>
    %cst_182 = arith.constant 1.000000e+00 : f32
    %411 = vector.broadcast %cst_182 : f32 to vector<2x96xf32>
    %412 = arith.addf %411, %410 : vector<2x96xf32>
    %413 = arith.divf %411, %412 : vector<2x96xf32>
    %414 = vector.extract_strided_slice %413 {offsets = [0, 0], sizes = [2, 32], strides = [1, 1]} : vector<2x96xf32> to vector<2x32xf32>
    %415 = vector.extract_strided_slice %413 {offsets = [0, 32], sizes = [2, 32], strides = [1, 1]} : vector<2x96xf32> to vector<2x32xf32>
    %416 = vector.extract_strided_slice %413 {offsets = [0, 64], sizes = [2, 32], strides = [1, 1]} : vector<2x96xf32> to vector<2x32xf32>
    %417 = vector.extract_strided_slice %407 {offsets = [0, 96], sizes = [2, 32], strides = [1, 1]} : vector<2x128xf32> to vector<2x32xf32>
    %418 = math.tanh %417 : vector<2x32xf32>
    %419 = arith.mulf %415, %397 : vector<2x32xf32>
    %420 = arith.mulf %414, %418 : vector<2x32xf32>
    %421 = arith.addf %419, %420 : vector<2x32xf32>
    %422 = math.tanh %421 : vector<2x32xf32>
    %423 = arith.mulf %416, %422 : vector<2x32xf32>
    %c0_183 = arith.constant 0 : index
    %c4_184 = arith.constant 4 : index
    %c0_185 = arith.constant 0 : index
    %424 = vector.load %arg19[%c0_183, %c4_184, %c0_185] : memref<2x16x32xf32, #tpu.memory_space<vmem>>, vector<2x1x32xf32>
    %425 = vector.shape_cast %424 : vector<2x1x32xf32> to vector<2x32xf32>
    %426 = vector.shape_cast %423 : vector<2x32xf32> to vector<2x1x32xf32>
    tpu.vector_store %arg19[%c0_183, %c4_184, %c0_185], %426 {strides = array<i32>} : memref<2x16x32xf32, #tpu.memory_space<vmem>>, vector<2x1x32xf32>,
    %427 = vector.extract_strided_slice %304 {offsets = [0, 5, 0], sizes = [2, 1, 128], strides = [1, 1, 1]} : vector<2x16x128xf32> to vector<2x1x128xf32>
    %428 = vector.shape_cast %427 : vector<2x1x128xf32> to vector<2x128xf32>
    %429 = arith.truncf %423 : vector<2x32xf32> to vector<2x32xbf16>
    %cst_186 = arith.constant dense<0.000000e+00> : vector<2x128xf32>
    %430 = tpu.matmul %429, %297, %cst_186 {dimension_numbers = #tpu.dot_dimension_numbers<[1], [0], [0], [1], [0, 0, 1, 1], [], []>} : vector<2x32xbf16>, vector<32x128xbf16>, vector<2x128xf32> -> vector<2x128xf32>
    %431 = arith.addf %428, %430 : vector<2x128xf32>
    %432 = vector.extract_strided_slice %431 {offsets = [0, 0], sizes = [2, 96], strides = [1, 1]} : vector<2x128xf32> to vector<2x96xf32>
    %433 = arith.negf %432 : vector<2x96xf32>
    %434 = math.exp %433 : vector<2x96xf32>
    %cst_187 = arith.constant 1.000000e+00 : f32
    %435 = vector.broadcast %cst_187 : f32 to vector<2x96xf32>
    %436 = arith.addf %435, %434 : vector<2x96xf32>
    %437 = arith.divf %435, %436 : vector<2x96xf32>
    %438 = vector.extract_strided_slice %437 {offsets = [0, 0], sizes = [2, 32], strides = [1, 1]} : vector<2x96xf32> to vector<2x32xf32>
    %439 = vector.extract_strided_slice %437 {offsets = [0, 32], sizes = [2, 32], strides = [1, 1]} : vector<2x96xf32> to vector<2x32xf32>
    %440 = vector.extract_strided_slice %437 {offsets = [0, 64], sizes = [2, 32], strides = [1, 1]} : vector<2x96xf32> to vector<2x32xf32>
    %441 = vector.extract_strided_slice %431 {offsets = [0, 96], sizes = [2, 32], strides = [1, 1]} : vector<2x128xf32> to vector<2x32xf32>
    %442 = math.tanh %441 : vector<2x32xf32>
    %443 = arith.mulf %439, %421 : vector<2x32xf32>
    %444 = arith.mulf %438, %442 : vector<2x32xf32>
    %445 = arith.addf %443, %444 : vector<2x32xf32>
    %446 = math.tanh %445 : vector<2x32xf32>
    %447 = arith.mulf %440, %446 : vector<2x32xf32>
    %c0_188 = arith.constant 0 : index
    %c5 = arith.constant 5 : index
    %c0_189 = arith.constant 0 : index
    %448 = vector.load %arg19[%c0_188, %c5, %c0_189] : memref<2x16x32xf32, #tpu.memory_space<vmem>>, vector<2x1x32xf32>
    %449 = vector.shape_cast %448 : vector<2x1x32xf32> to vector<2x32xf32>
    %450 = vector.shape_cast %447 : vector<2x32xf32> to vector<2x1x32xf32>
    tpu.vector_store %arg19[%c0_188, %c5, %c0_189], %450 {strides = array<i32>} : memref<2x16x32xf32, #tpu.memory_space<vmem>>, vector<2x1x32xf32>,
    %451 = vector.extract_strided_slice %304 {offsets = [0, 6, 0], sizes = [2, 1, 128], strides = [1, 1, 1]} : vector<2x16x128xf32> to vector<2x1x128xf32>
    %452 = vector.shape_cast %451 : vector<2x1x128xf32> to vector<2x128xf32>
    %453 = arith.truncf %447 : vector<2x32xf32> to vector<2x32xbf16>
    %cst_190 = arith.constant dense<0.000000e+00> : vector<2x128xf32>
    %454 = tpu.matmul %453, %297, %cst_190 {dimension_numbers = #tpu.dot_dimension_numbers<[1], [0], [0], [1], [0, 0, 1, 1], [], []>} : vector<2x32xbf16>, vector<32x128xbf16>, vector<2x128xf32> -> vector<2x128xf32>
    %455 = arith.addf %452, %454 : vector<2x128xf32>
    %456 = vector.extract_strided_slice %455 {offsets = [0, 0], sizes = [2, 96], strides = [1, 1]} : vector<2x128xf32> to vector<2x96xf32>
    %457 = arith.negf %456 : vector<2x96xf32>
    %458 = math.exp %457 : vector<2x96xf32>
    %cst_191 = arith.constant 1.000000e+00 : f32
    %459 = vector.broadcast %cst_191 : f32 to vector<2x96xf32>
    %460 = arith.addf %459, %458 : vector<2x96xf32>
    %461 = arith.divf %459, %460 : vector<2x96xf32>
    %462 = vector.extract_strided_slice %461 {offsets = [0, 0], sizes = [2, 32], strides = [1, 1]} : vector<2x96xf32> to vector<2x32xf32>
    %463 = vector.extract_strided_slice %461 {offsets = [0, 32], sizes = [2, 32], strides = [1, 1]} : vector<2x96xf32> to vector<2x32xf32>
    %464 = vector.extract_strided_slice %461 {offsets = [0, 64], sizes = [2, 32], strides = [1, 1]} : vector<2x96xf32> to vector<2x32xf32>
    %465 = vector.extract_strided_slice %455 {offsets = [0, 96], sizes = [2, 32], strides = [1, 1]} : vector<2x128xf32> to vector<2x32xf32>
    %466 = math.tanh %465 : vector<2x32xf32>
    %467 = arith.mulf %463, %445 : vector<2x32xf32>
    %468 = arith.mulf %462, %466 : vector<2x32xf32>
    %469 = arith.addf %467, %468 : vector<2x32xf32>
    %470 = math.tanh %469 : vector<2x32xf32>
    %471 = arith.mulf %464, %470 : vector<2x32xf32>
    %c0_192 = arith.constant 0 : index
    %c6 = arith.constant 6 : index
    %c0_193 = arith.constant 0 : index
    %472 = vector.load %arg19[%c0_192, %c6, %c0_193] : memref<2x16x32xf32, #tpu.memory_space<vmem>>, vector<2x1x32xf32>
    %473 = vector.shape_cast %472 : vector<2x1x32xf32> to vector<2x32xf32>
    %474 = vector.shape_cast %471 : vector<2x32xf32> to vector<2x1x32xf32>
    tpu.vector_store %arg19[%c0_192, %c6, %c0_193], %474 {strides = array<i32>} : memref<2x16x32xf32, #tpu.memory_space<vmem>>, vector<2x1x32xf32>,
    %475 = vector.extract_strided_slice %304 {offsets = [0, 7, 0], sizes = [2, 1, 128], strides = [1, 1, 1]} : vector<2x16x128xf32> to vector<2x1x128xf32>
    %476 = vector.shape_cast %475 : vector<2x1x128xf32> to vector<2x128xf32>
    %477 = arith.truncf %471 : vector<2x32xf32> to vector<2x32xbf16>
    %cst_194 = arith.constant dense<0.000000e+00> : vector<2x128xf32>
    %478 = tpu.matmul %477, %297, %cst_194 {dimension_numbers = #tpu.dot_dimension_numbers<[1], [0], [0], [1], [0, 0, 1, 1], [], []>} : vector<2x32xbf16>, vector<32x128xbf16>, vector<2x128xf32> -> vector<2x128xf32>
    %479 = arith.addf %476, %478 : vector<2x128xf32>
    %480 = vector.extract_strided_slice %479 {offsets = [0, 0], sizes = [2, 96], strides = [1, 1]} : vector<2x128xf32> to vector<2x96xf32>
    %481 = arith.negf %480 : vector<2x96xf32>
    %482 = math.exp %481 : vector<2x96xf32>
    %cst_195 = arith.constant 1.000000e+00 : f32
    %483 = vector.broadcast %cst_195 : f32 to vector<2x96xf32>
    %484 = arith.addf %483, %482 : vector<2x96xf32>
    %485 = arith.divf %483, %484 : vector<2x96xf32>
    %486 = vector.extract_strided_slice %485 {offsets = [0, 0], sizes = [2, 32], strides = [1, 1]} : vector<2x96xf32> to vector<2x32xf32>
    %487 = vector.extract_strided_slice %485 {offsets = [0, 32], sizes = [2, 32], strides = [1, 1]} : vector<2x96xf32> to vector<2x32xf32>
    %488 = vector.extract_strided_slice %485 {offsets = [0, 64], sizes = [2, 32], strides = [1, 1]} : vector<2x96xf32> to vector<2x32xf32>
    %489 = vector.extract_strided_slice %479 {offsets = [0, 96], sizes = [2, 32], strides = [1, 1]} : vector<2x128xf32> to vector<2x32xf32>
    %490 = math.tanh %489 : vector<2x32xf32>
    %491 = arith.mulf %487, %469 : vector<2x32xf32>
    %492 = arith.mulf %486, %490 : vector<2x32xf32>
    %493 = arith.addf %491, %492 : vector<2x32xf32>
    %494 = math.tanh %493 : vector<2x32xf32>
    %495 = arith.mulf %488, %494 : vector<2x32xf32>
    %c0_196 = arith.constant 0 : index
    %c7 = arith.constant 7 : index
    %c0_197 = arith.constant 0 : index
    %496 = vector.load %arg19[%c0_196, %c7, %c0_197] : memref<2x16x32xf32, #tpu.memory_space<vmem>>, vector<2x1x32xf32>
    %497 = vector.shape_cast %496 : vector<2x1x32xf32> to vector<2x32xf32>
    %498 = vector.shape_cast %495 : vector<2x32xf32> to vector<2x1x32xf32>
    tpu.vector_store %arg19[%c0_196, %c7, %c0_197], %498 {strides = array<i32>} : memref<2x16x32xf32, #tpu.memory_space<vmem>>, vector<2x1x32xf32>,
    %499 = vector.extract_strided_slice %304 {offsets = [0, 8, 0], sizes = [2, 1, 128], strides = [1, 1, 1]} : vector<2x16x128xf32> to vector<2x1x128xf32>
    %500 = vector.shape_cast %499 : vector<2x1x128xf32> to vector<2x128xf32>
    %501 = arith.truncf %495 : vector<2x32xf32> to vector<2x32xbf16>
    %cst_198 = arith.constant dense<0.000000e+00> : vector<2x128xf32>
    %502 = tpu.matmul %501, %297, %cst_198 {dimension_numbers = #tpu.dot_dimension_numbers<[1], [0], [0], [1], [0, 0, 1, 1], [], []>} : vector<2x32xbf16>, vector<32x128xbf16>, vector<2x128xf32> -> vector<2x128xf32>
    %503 = arith.addf %500, %502 : vector<2x128xf32>
    %504 = vector.extract_strided_slice %503 {offsets = [0, 0], sizes = [2, 96], strides = [1, 1]} : vector<2x128xf32> to vector<2x96xf32>
    %505 = arith.negf %504 : vector<2x96xf32>
    %506 = math.exp %505 : vector<2x96xf32>
    %cst_199 = arith.constant 1.000000e+00 : f32
    %507 = vector.broadcast %cst_199 : f32 to vector<2x96xf32>
    %508 = arith.addf %507, %506 : vector<2x96xf32>
    %509 = arith.divf %507, %508 : vector<2x96xf32>
    %510 = vector.extract_strided_slice %509 {offsets = [0, 0], sizes = [2, 32], strides = [1, 1]} : vector<2x96xf32> to vector<2x32xf32>
    %511 = vector.extract_strided_slice %509 {offsets = [0, 32], sizes = [2, 32], strides = [1, 1]} : vector<2x96xf32> to vector<2x32xf32>
    %512 = vector.extract_strided_slice %509 {offsets = [0, 64], sizes = [2, 32], strides = [1, 1]} : vector<2x96xf32> to vector<2x32xf32>
    %513 = vector.extract_strided_slice %503 {offsets = [0, 96], sizes = [2, 32], strides = [1, 1]} : vector<2x128xf32> to vector<2x32xf32>
    %514 = math.tanh %513 : vector<2x32xf32>
    %515 = arith.mulf %511, %493 : vector<2x32xf32>
    %516 = arith.mulf %510, %514 : vector<2x32xf32>
    %517 = arith.addf %515, %516 : vector<2x32xf32>
    %518 = math.tanh %517 : vector<2x32xf32>
    %519 = arith.mulf %512, %518 : vector<2x32xf32>
    %c0_200 = arith.constant 0 : index
    %c8 = arith.constant 8 : index
    %c0_201 = arith.constant 0 : index
    %520 = vector.load %arg19[%c0_200, %c8, %c0_201] : memref<2x16x32xf32, #tpu.memory_space<vmem>>, vector<2x1x32xf32>
    %521 = vector.shape_cast %520 : vector<2x1x32xf32> to vector<2x32xf32>
    %522 = vector.shape_cast %519 : vector<2x32xf32> to vector<2x1x32xf32>
    tpu.vector_store %arg19[%c0_200, %c8, %c0_201], %522 {strides = array<i32>} : memref<2x16x32xf32, #tpu.memory_space<vmem>>, vector<2x1x32xf32>,
    %523 = vector.extract_strided_slice %304 {offsets = [0, 9, 0], sizes = [2, 1, 128], strides = [1, 1, 1]} : vector<2x16x128xf32> to vector<2x1x128xf32>
    %524 = vector.shape_cast %523 : vector<2x1x128xf32> to vector<2x128xf32>
    %525 = arith.truncf %519 : vector<2x32xf32> to vector<2x32xbf16>
    %cst_202 = arith.constant dense<0.000000e+00> : vector<2x128xf32>
    %526 = tpu.matmul %525, %297, %cst_202 {dimension_numbers = #tpu.dot_dimension_numbers<[1], [0], [0], [1], [0, 0, 1, 1], [], []>} : vector<2x32xbf16>, vector<32x128xbf16>, vector<2x128xf32> -> vector<2x128xf32>
    %527 = arith.addf %524, %526 : vector<2x128xf32>
    %528 = vector.extract_strided_slice %527 {offsets = [0, 0], sizes = [2, 96], strides = [1, 1]} : vector<2x128xf32> to vector<2x96xf32>
    %529 = arith.negf %528 : vector<2x96xf32>
    %530 = math.exp %529 : vector<2x96xf32>
    %cst_203 = arith.constant 1.000000e+00 : f32
    %531 = vector.broadcast %cst_203 : f32 to vector<2x96xf32>
    %532 = arith.addf %531, %530 : vector<2x96xf32>
    %533 = arith.divf %531, %532 : vector<2x96xf32>
    %534 = vector.extract_strided_slice %533 {offsets = [0, 0], sizes = [2, 32], strides = [1, 1]} : vector<2x96xf32> to vector<2x32xf32>
    %535 = vector.extract_strided_slice %533 {offsets = [0, 32], sizes = [2, 32], strides = [1, 1]} : vector<2x96xf32> to vector<2x32xf32>
    %536 = vector.extract_strided_slice %533 {offsets = [0, 64], sizes = [2, 32], strides = [1, 1]} : vector<2x96xf32> to vector<2x32xf32>
    %537 = vector.extract_strided_slice %527 {offsets = [0, 96], sizes = [2, 32], strides = [1, 1]} : vector<2x128xf32> to vector<2x32xf32>
    %538 = math.tanh %537 : vector<2x32xf32>
    %539 = arith.mulf %535, %517 : vector<2x32xf32>
    %540 = arith.mulf %534, %538 : vector<2x32xf32>
    %541 = arith.addf %539, %540 : vector<2x32xf32>
    %542 = math.tanh %541 : vector<2x32xf32>
    %543 = arith.mulf %536, %542 : vector<2x32xf32>
    %c0_204 = arith.constant 0 : index
    %c9 = arith.constant 9 : index
    %c0_205 = arith.constant 0 : index
    %544 = vector.load %arg19[%c0_204, %c9, %c0_205] : memref<2x16x32xf32, #tpu.memory_space<vmem>>, vector<2x1x32xf32>
    %545 = vector.shape_cast %544 : vector<2x1x32xf32> to vector<2x32xf32>
    %546 = vector.shape_cast %543 : vector<2x32xf32> to vector<2x1x32xf32>
    tpu.vector_store %arg19[%c0_204, %c9, %c0_205], %546 {strides = array<i32>} : memref<2x16x32xf32, #tpu.memory_space<vmem>>, vector<2x1x32xf32>,
    %547 = vector.extract_strided_slice %304 {offsets = [0, 10, 0], sizes = [2, 1, 128], strides = [1, 1, 1]} : vector<2x16x128xf32> to vector<2x1x128xf32>
    %548 = vector.shape_cast %547 : vector<2x1x128xf32> to vector<2x128xf32>
    %549 = arith.truncf %543 : vector<2x32xf32> to vector<2x32xbf16>
    %cst_206 = arith.constant dense<0.000000e+00> : vector<2x128xf32>
    %550 = tpu.matmul %549, %297, %cst_206 {dimension_numbers = #tpu.dot_dimension_numbers<[1], [0], [0], [1], [0, 0, 1, 1], [], []>} : vector<2x32xbf16>, vector<32x128xbf16>, vector<2x128xf32> -> vector<2x128xf32>
    %551 = arith.addf %548, %550 : vector<2x128xf32>
    %552 = vector.extract_strided_slice %551 {offsets = [0, 0], sizes = [2, 96], strides = [1, 1]} : vector<2x128xf32> to vector<2x96xf32>
    %553 = arith.negf %552 : vector<2x96xf32>
    %554 = math.exp %553 : vector<2x96xf32>
    %cst_207 = arith.constant 1.000000e+00 : f32
    %555 = vector.broadcast %cst_207 : f32 to vector<2x96xf32>
    %556 = arith.addf %555, %554 : vector<2x96xf32>
    %557 = arith.divf %555, %556 : vector<2x96xf32>
    %558 = vector.extract_strided_slice %557 {offsets = [0, 0], sizes = [2, 32], strides = [1, 1]} : vector<2x96xf32> to vector<2x32xf32>
    %559 = vector.extract_strided_slice %557 {offsets = [0, 32], sizes = [2, 32], strides = [1, 1]} : vector<2x96xf32> to vector<2x32xf32>
    %560 = vector.extract_strided_slice %557 {offsets = [0, 64], sizes = [2, 32], strides = [1, 1]} : vector<2x96xf32> to vector<2x32xf32>
    %561 = vector.extract_strided_slice %551 {offsets = [0, 96], sizes = [2, 32], strides = [1, 1]} : vector<2x128xf32> to vector<2x32xf32>
    %562 = math.tanh %561 : vector<2x32xf32>
    %563 = arith.mulf %559, %541 : vector<2x32xf32>
    %564 = arith.mulf %558, %562 : vector<2x32xf32>
    %565 = arith.addf %563, %564 : vector<2x32xf32>
    %566 = math.tanh %565 : vector<2x32xf32>
    %567 = arith.mulf %560, %566 : vector<2x32xf32>
    %c0_208 = arith.constant 0 : index
    %c10 = arith.constant 10 : index
    %c0_209 = arith.constant 0 : index
    %568 = vector.load %arg19[%c0_208, %c10, %c0_209] : memref<2x16x32xf32, #tpu.memory_space<vmem>>, vector<2x1x32xf32>
    %569 = vector.shape_cast %568 : vector<2x1x32xf32> to vector<2x32xf32>
    %570 = vector.shape_cast %567 : vector<2x32xf32> to vector<2x1x32xf32>
    tpu.vector_store %arg19[%c0_208, %c10, %c0_209], %570 {strides = array<i32>} : memref<2x16x32xf32, #tpu.memory_space<vmem>>, vector<2x1x32xf32>,
    %571 = vector.extract_strided_slice %304 {offsets = [0, 11, 0], sizes = [2, 1, 128], strides = [1, 1, 1]} : vector<2x16x128xf32> to vector<2x1x128xf32>
    %572 = vector.shape_cast %571 : vector<2x1x128xf32> to vector<2x128xf32>
    %573 = arith.truncf %567 : vector<2x32xf32> to vector<2x32xbf16>
    %cst_210 = arith.constant dense<0.000000e+00> : vector<2x128xf32>
    %574 = tpu.matmul %573, %297, %cst_210 {dimension_numbers = #tpu.dot_dimension_numbers<[1], [0], [0], [1], [0, 0, 1, 1], [], []>} : vector<2x32xbf16>, vector<32x128xbf16>, vector<2x128xf32> -> vector<2x128xf32>
    %575 = arith.addf %572, %574 : vector<2x128xf32>
    %576 = vector.extract_strided_slice %575 {offsets = [0, 0], sizes = [2, 96], strides = [1, 1]} : vector<2x128xf32> to vector<2x96xf32>
    %577 = arith.negf %576 : vector<2x96xf32>
    %578 = math.exp %577 : vector<2x96xf32>
    %cst_211 = arith.constant 1.000000e+00 : f32
    %579 = vector.broadcast %cst_211 : f32 to vector<2x96xf32>
    %580 = arith.addf %579, %578 : vector<2x96xf32>
    %581 = arith.divf %579, %580 : vector<2x96xf32>
    %582 = vector.extract_strided_slice %581 {offsets = [0, 0], sizes = [2, 32], strides = [1, 1]} : vector<2x96xf32> to vector<2x32xf32>
    %583 = vector.extract_strided_slice %581 {offsets = [0, 32], sizes = [2, 32], strides = [1, 1]} : vector<2x96xf32> to vector<2x32xf32>
    %584 = vector.extract_strided_slice %581 {offsets = [0, 64], sizes = [2, 32], strides = [1, 1]} : vector<2x96xf32> to vector<2x32xf32>
    %585 = vector.extract_strided_slice %575 {offsets = [0, 96], sizes = [2, 32], strides = [1, 1]} : vector<2x128xf32> to vector<2x32xf32>
    %586 = math.tanh %585 : vector<2x32xf32>
    %587 = arith.mulf %583, %565 : vector<2x32xf32>
    %588 = arith.mulf %582, %586 : vector<2x32xf32>
    %589 = arith.addf %587, %588 : vector<2x32xf32>
    %590 = math.tanh %589 : vector<2x32xf32>
    %591 = arith.mulf %584, %590 : vector<2x32xf32>
    %c0_212 = arith.constant 0 : index
    %c11 = arith.constant 11 : index
    %c0_213 = arith.constant 0 : index
    %592 = vector.load %arg19[%c0_212, %c11, %c0_213] : memref<2x16x32xf32, #tpu.memory_space<vmem>>, vector<2x1x32xf32>
    %593 = vector.shape_cast %592 : vector<2x1x32xf32> to vector<2x32xf32>
    %594 = vector.shape_cast %591 : vector<2x32xf32> to vector<2x1x32xf32>
    tpu.vector_store %arg19[%c0_212, %c11, %c0_213], %594 {strides = array<i32>} : memref<2x16x32xf32, #tpu.memory_space<vmem>>, vector<2x1x32xf32>,
    %595 = vector.extract_strided_slice %304 {offsets = [0, 12, 0], sizes = [2, 1, 128], strides = [1, 1, 1]} : vector<2x16x128xf32> to vector<2x1x128xf32>
    %596 = vector.shape_cast %595 : vector<2x1x128xf32> to vector<2x128xf32>
    %597 = arith.truncf %591 : vector<2x32xf32> to vector<2x32xbf16>
    %cst_214 = arith.constant dense<0.000000e+00> : vector<2x128xf32>
    %598 = tpu.matmul %597, %297, %cst_214 {dimension_numbers = #tpu.dot_dimension_numbers<[1], [0], [0], [1], [0, 0, 1, 1], [], []>} : vector<2x32xbf16>, vector<32x128xbf16>, vector<2x128xf32> -> vector<2x128xf32>
    %599 = arith.addf %596, %598 : vector<2x128xf32>
    %600 = vector.extract_strided_slice %599 {offsets = [0, 0], sizes = [2, 96], strides = [1, 1]} : vector<2x128xf32> to vector<2x96xf32>
    %601 = arith.negf %600 : vector<2x96xf32>
    %602 = math.exp %601 : vector<2x96xf32>
    %cst_215 = arith.constant 1.000000e+00 : f32
    %603 = vector.broadcast %cst_215 : f32 to vector<2x96xf32>
    %604 = arith.addf %603, %602 : vector<2x96xf32>
    %605 = arith.divf %603, %604 : vector<2x96xf32>
    %606 = vector.extract_strided_slice %605 {offsets = [0, 0], sizes = [2, 32], strides = [1, 1]} : vector<2x96xf32> to vector<2x32xf32>
    %607 = vector.extract_strided_slice %605 {offsets = [0, 32], sizes = [2, 32], strides = [1, 1]} : vector<2x96xf32> to vector<2x32xf32>
    %608 = vector.extract_strided_slice %605 {offsets = [0, 64], sizes = [2, 32], strides = [1, 1]} : vector<2x96xf32> to vector<2x32xf32>
    %609 = vector.extract_strided_slice %599 {offsets = [0, 96], sizes = [2, 32], strides = [1, 1]} : vector<2x128xf32> to vector<2x32xf32>
    %610 = math.tanh %609 : vector<2x32xf32>
    %611 = arith.mulf %607, %589 : vector<2x32xf32>
    %612 = arith.mulf %606, %610 : vector<2x32xf32>
    %613 = arith.addf %611, %612 : vector<2x32xf32>
    %614 = math.tanh %613 : vector<2x32xf32>
    %615 = arith.mulf %608, %614 : vector<2x32xf32>
    %c0_216 = arith.constant 0 : index
    %c12 = arith.constant 12 : index
    %c0_217 = arith.constant 0 : index
    %616 = vector.load %arg19[%c0_216, %c12, %c0_217] : memref<2x16x32xf32, #tpu.memory_space<vmem>>, vector<2x1x32xf32>
    %617 = vector.shape_cast %616 : vector<2x1x32xf32> to vector<2x32xf32>
    %618 = vector.shape_cast %615 : vector<2x32xf32> to vector<2x1x32xf32>
    tpu.vector_store %arg19[%c0_216, %c12, %c0_217], %618 {strides = array<i32>} : memref<2x16x32xf32, #tpu.memory_space<vmem>>, vector<2x1x32xf32>,
    %619 = vector.extract_strided_slice %304 {offsets = [0, 13, 0], sizes = [2, 1, 128], strides = [1, 1, 1]} : vector<2x16x128xf32> to vector<2x1x128xf32>
    %620 = vector.shape_cast %619 : vector<2x1x128xf32> to vector<2x128xf32>
    %621 = arith.truncf %615 : vector<2x32xf32> to vector<2x32xbf16>
    %cst_218 = arith.constant dense<0.000000e+00> : vector<2x128xf32>
    %622 = tpu.matmul %621, %297, %cst_218 {dimension_numbers = #tpu.dot_dimension_numbers<[1], [0], [0], [1], [0, 0, 1, 1], [], []>} : vector<2x32xbf16>, vector<32x128xbf16>, vector<2x128xf32> -> vector<2x128xf32>
    %623 = arith.addf %620, %622 : vector<2x128xf32>
    %624 = vector.extract_strided_slice %623 {offsets = [0, 0], sizes = [2, 96], strides = [1, 1]} : vector<2x128xf32> to vector<2x96xf32>
    %625 = arith.negf %624 : vector<2x96xf32>
    %626 = math.exp %625 : vector<2x96xf32>
    %cst_219 = arith.constant 1.000000e+00 : f32
    %627 = vector.broadcast %cst_219 : f32 to vector<2x96xf32>
    %628 = arith.addf %627, %626 : vector<2x96xf32>
    %629 = arith.divf %627, %628 : vector<2x96xf32>
    %630 = vector.extract_strided_slice %629 {offsets = [0, 0], sizes = [2, 32], strides = [1, 1]} : vector<2x96xf32> to vector<2x32xf32>
    %631 = vector.extract_strided_slice %629 {offsets = [0, 32], sizes = [2, 32], strides = [1, 1]} : vector<2x96xf32> to vector<2x32xf32>
    %632 = vector.extract_strided_slice %629 {offsets = [0, 64], sizes = [2, 32], strides = [1, 1]} : vector<2x96xf32> to vector<2x32xf32>
    %633 = vector.extract_strided_slice %623 {offsets = [0, 96], sizes = [2, 32], strides = [1, 1]} : vector<2x128xf32> to vector<2x32xf32>
    %634 = math.tanh %633 : vector<2x32xf32>
    %635 = arith.mulf %631, %613 : vector<2x32xf32>
    %636 = arith.mulf %630, %634 : vector<2x32xf32>
    %637 = arith.addf %635, %636 : vector<2x32xf32>
    %638 = math.tanh %637 : vector<2x32xf32>
    %639 = arith.mulf %632, %638 : vector<2x32xf32>
    %c0_220 = arith.constant 0 : index
    %c13 = arith.constant 13 : index
    %c0_221 = arith.constant 0 : index
    %640 = vector.load %arg19[%c0_220, %c13, %c0_221] : memref<2x16x32xf32, #tpu.memory_space<vmem>>, vector<2x1x32xf32>
    %641 = vector.shape_cast %640 : vector<2x1x32xf32> to vector<2x32xf32>
    %642 = vector.shape_cast %639 : vector<2x32xf32> to vector<2x1x32xf32>
    tpu.vector_store %arg19[%c0_220, %c13, %c0_221], %642 {strides = array<i32>} : memref<2x16x32xf32, #tpu.memory_space<vmem>>, vector<2x1x32xf32>,
    %643 = vector.extract_strided_slice %304 {offsets = [0, 14, 0], sizes = [2, 1, 128], strides = [1, 1, 1]} : vector<2x16x128xf32> to vector<2x1x128xf32>
    %644 = vector.shape_cast %643 : vector<2x1x128xf32> to vector<2x128xf32>
    %645 = arith.truncf %639 : vector<2x32xf32> to vector<2x32xbf16>
    %cst_222 = arith.constant dense<0.000000e+00> : vector<2x128xf32>
    %646 = tpu.matmul %645, %297, %cst_222 {dimension_numbers = #tpu.dot_dimension_numbers<[1], [0], [0], [1], [0, 0, 1, 1], [], []>} : vector<2x32xbf16>, vector<32x128xbf16>, vector<2x128xf32> -> vector<2x128xf32>
    %647 = arith.addf %644, %646 : vector<2x128xf32>
    %648 = vector.extract_strided_slice %647 {offsets = [0, 0], sizes = [2, 96], strides = [1, 1]} : vector<2x128xf32> to vector<2x96xf32>
    %649 = arith.negf %648 : vector<2x96xf32>
    %650 = math.exp %649 : vector<2x96xf32>
    %cst_223 = arith.constant 1.000000e+00 : f32
    %651 = vector.broadcast %cst_223 : f32 to vector<2x96xf32>
    %652 = arith.addf %651, %650 : vector<2x96xf32>
    %653 = arith.divf %651, %652 : vector<2x96xf32>
    %654 = vector.extract_strided_slice %653 {offsets = [0, 0], sizes = [2, 32], strides = [1, 1]} : vector<2x96xf32> to vector<2x32xf32>
    %655 = vector.extract_strided_slice %653 {offsets = [0, 32], sizes = [2, 32], strides = [1, 1]} : vector<2x96xf32> to vector<2x32xf32>
    %656 = vector.extract_strided_slice %653 {offsets = [0, 64], sizes = [2, 32], strides = [1, 1]} : vector<2x96xf32> to vector<2x32xf32>
    %657 = vector.extract_strided_slice %647 {offsets = [0, 96], sizes = [2, 32], strides = [1, 1]} : vector<2x128xf32> to vector<2x32xf32>
    %658 = math.tanh %657 : vector<2x32xf32>
    %659 = arith.mulf %655, %637 : vector<2x32xf32>
    %660 = arith.mulf %654, %658 : vector<2x32xf32>
    %661 = arith.addf %659, %660 : vector<2x32xf32>
    %662 = math.tanh %661 : vector<2x32xf32>
    %663 = arith.mulf %656, %662 : vector<2x32xf32>
    %c0_224 = arith.constant 0 : index
    %c14 = arith.constant 14 : index
    %c0_225 = arith.constant 0 : index
    %664 = vector.load %arg19[%c0_224, %c14, %c0_225] : memref<2x16x32xf32, #tpu.memory_space<vmem>>, vector<2x1x32xf32>
    %665 = vector.shape_cast %664 : vector<2x1x32xf32> to vector<2x32xf32>
    %666 = vector.shape_cast %663 : vector<2x32xf32> to vector<2x1x32xf32>
    tpu.vector_store %arg19[%c0_224, %c14, %c0_225], %666 {strides = array<i32>} : memref<2x16x32xf32, #tpu.memory_space<vmem>>, vector<2x1x32xf32>,
    %667 = vector.extract_strided_slice %304 {offsets = [0, 15, 0], sizes = [2, 1, 128], strides = [1, 1, 1]} : vector<2x16x128xf32> to vector<2x1x128xf32>
    %668 = vector.shape_cast %667 : vector<2x1x128xf32> to vector<2x128xf32>
    %669 = arith.truncf %663 : vector<2x32xf32> to vector<2x32xbf16>
    %cst_226 = arith.constant dense<0.000000e+00> : vector<2x128xf32>
    %670 = tpu.matmul %669, %297, %cst_226 {dimension_numbers = #tpu.dot_dimension_numbers<[1], [0], [0], [1], [0, 0, 1, 1], [], []>} : vector<2x32xbf16>, vector<32x128xbf16>, vector<2x128xf32> -> vector<2x128xf32>
    %671 = arith.addf %668, %670 : vector<2x128xf32>
    %672 = vector.extract_strided_slice %671 {offsets = [0, 0], sizes = [2, 96], strides = [1, 1]} : vector<2x128xf32> to vector<2x96xf32>
    %673 = arith.negf %672 : vector<2x96xf32>
    %674 = math.exp %673 : vector<2x96xf32>
    %cst_227 = arith.constant 1.000000e+00 : f32
    %675 = vector.broadcast %cst_227 : f32 to vector<2x96xf32>
    %676 = arith.addf %675, %674 : vector<2x96xf32>
    %677 = arith.divf %675, %676 : vector<2x96xf32>
    %678 = vector.extract_strided_slice %677 {offsets = [0, 0], sizes = [2, 32], strides = [1, 1]} : vector<2x96xf32> to vector<2x32xf32>
    %679 = vector.extract_strided_slice %677 {offsets = [0, 32], sizes = [2, 32], strides = [1, 1]} : vector<2x96xf32> to vector<2x32xf32>
    %680 = vector.extract_strided_slice %677 {offsets = [0, 64], sizes = [2, 32], strides = [1, 1]} : vector<2x96xf32> to vector<2x32xf32>
    %681 = vector.extract_strided_slice %671 {offsets = [0, 96], sizes = [2, 32], strides = [1, 1]} : vector<2x128xf32> to vector<2x32xf32>
    %682 = math.tanh %681 : vector<2x32xf32>
    %683 = arith.mulf %679, %661 : vector<2x32xf32>
    %684 = arith.mulf %678, %682 : vector<2x32xf32>
    %685 = arith.addf %683, %684 : vector<2x32xf32>
    %686 = math.tanh %685 : vector<2x32xf32>
    %687 = arith.mulf %680, %686 : vector<2x32xf32>
    %c0_228 = arith.constant 0 : index
    %c15 = arith.constant 15 : index
    %c0_229 = arith.constant 0 : index
    %688 = vector.load %arg19[%c0_228, %c15, %c0_229] : memref<2x16x32xf32, #tpu.memory_space<vmem>>, vector<2x1x32xf32>
    %689 = vector.shape_cast %688 : vector<2x1x32xf32> to vector<2x32xf32>
    %690 = vector.shape_cast %687 : vector<2x32xf32> to vector<2x1x32xf32>
    tpu.vector_store %arg19[%c0_228, %c15, %c0_229], %690 {strides = array<i32>} : memref<2x16x32xf32, #tpu.memory_space<vmem>>, vector<2x1x32xf32>,
    return
  }
}

</mosaic_0001>

<llo_original>
// kernel: encoder_forward.1
$region0: #{encoder_forward.1}
  #allocation0 [shape = 'u32[]', space=smem, size = 0x4, offset = 0x4, fixed_abs, tag = 'smem constant byte address 0x4 - core index']
  #allocation1 [shape = 'u32[144,128]{1,0:T(1,128)}', space=vmem, size = 0x12000, scoped, tag = 'internal scratch']
  %s0 = inlined_call_operand.vmem [shape: f32[2,16,4], index: 0, kind: input, shape index: {}]
  %s1 = inlined_call_operand.vmem [shape: bf16[5,4,32], index: 1, kind: input, shape index: {}]
  %s2 = inlined_call_operand.vmem [shape: f32[1,32], index: 2, kind: input, shape index: {}]
  %s3 = inlined_call_operand.vmem [shape: f32[1,32], index: 3, kind: input, shape index: {}]
  %s4 = inlined_call_operand.hbm [shape: bf16[5,32,64], index: 4, kind: input, shape index: {}]
  %s5 = inlined_call_operand.vmem [shape: f32[1,64], index: 5, kind: input, shape index: {}]
  %s6 = inlined_call_operand.vmem [shape: f32[1,64], index: 6, kind: input, shape index: {}]
  %s7 = inlined_call_operand.vmem [shape: bf16[5,64,128], index: 7, kind: input, shape index: {}]
  %s8 = inlined_call_operand.vmem [shape: f32[1,128], index: 8, kind: input, shape index: {}]
  %s9 = inlined_call_operand.vmem [shape: f32[1,128], index: 9, kind: input, shape index: {}]
  %s10 = inlined_call_operand.vmem [shape: bf16[5,128,256], index: 10, kind: input, shape index: {}]
  %s11 = inlined_call_operand.vmem [shape: f32[1,256], index: 11, kind: input, shape index: {}]
  %s12 = inlined_call_operand.vmem [shape: f32[1,256], index: 12, kind: input, shape index: {}]
  %s13 = inlined_call_operand.vmem [shape: bf16[5,256,32], index: 13, kind: input, shape index: {}]
  %s14 = inlined_call_operand.vmem [shape: f32[1,32], index: 14, kind: input, shape index: {}]
  %s15 = inlined_call_operand.vmem [shape: f32[1,32], index: 15, kind: input, shape index: {}]
  %s16 = inlined_call_operand.vmem [shape: bf16[32,128], index: 16, kind: input, shape index: {}]
  %s17 = inlined_call_operand.vmem [shape: bf16[32,128], index: 17, kind: input, shape index: {}]
  %s18 = inlined_call_operand.vmem [shape: f32[1,128], index: 18, kind: input, shape index: {}]
  %s19 = inlined_call_operand.hbm [shape: f32[2,16,32], index: 19, kind: output, shape index: {}]
  %s20 = sld [smem:[#allocation0]]
  $region90: #{encoder_forward.1} parent=0
    _
  %s22 = ssub.s32 1, %s20
  %s23 = scalar_select 0, %s22, %s20
  $region1: #{encoder_forward.1} parent=0
    #allocation2 [shape = 'u8[40960]{0}', space=vmem, size = 0xa000, scoped, tag = 'input window, operand 4, single buffered']
    #allocation3 [shape = 's32[1]{0}', space=sflag, size = 0x4, scoped, tag = 'scoped memory for encoder_forward.1']
    #allocation4 [shape = 's32[1]{0}', space=sflag, size = 0x4, scoped, tag = 'scoped memory for encoder_forward.1']
    #allocation5 [shape = 'u8[16384]{0}', space=vmem, size = 0x4000, scoped, tag = 'output window, operand 0, single buffered']
    %24 = vsyncpa [#allocation3], 0
    %25 = vsyncpa [#allocation4], 0
    // Predicated region
    $region2: #{encoder_forward.1} parent=1 // pred_check
      _
    $region3: #{encoder_forward.1} parent=1 // pred_check_branch
      %27 = sbr.rel (0) target = $region5
    $region4: #{encoder_forward.1} parent=1 // pred_region
      _
    $region5: #{encoder_forward.1} parent=1 // pred_fallthru
      _
    // Predicated region
    $region6: #{encoder_forward.1} parent=1 // pred_check
      _
    $region7: #{encoder_forward.1} parent=1 // pred_check_branch
      %29 = sbr.rel (0) target = $region9
    $region8: #{encoder_forward.1} parent=1 // pred_region
      _
    $region9: #{encoder_forward.1} parent=1 // pred_fallthru
      _
    // Predicated region
    $region10: #{encoder_forward.1} parent=1 // pred_check
      _
    $region11: #{encoder_forward.1} parent=1 // pred_check_branch
      %31 = sbr.rel (0) target = $region13
    $region12: #{encoder_forward.1} parent=1 // pred_region
      _
    $region13: #{encoder_forward.1} parent=1 // pred_fallthru
      _
    // Predicated region
    $region14: #{encoder_forward.1} parent=1 // pred_check
      _
    $region15: #{encoder_forward.1} parent=1 // pred_check_branch
      %33 = sbr.rel (0) target = $region17
    $region16: #{encoder_forward.1} parent=1 // pred_region
      _
    $region17: #{encoder_forward.1} parent=1 // pred_fallthru
      _
    // Predicated region
    $region18: #{encoder_forward.1} parent=1 // pred_check
      _
    $region19: #{encoder_forward.1} parent=1 // pred_check_branch
      %35 = sbr.rel (0) target = $region21
    $region20: #{encoder_forward.1} parent=1 // pred_region
      %s37 = ssub.s32 1280, 1280
      %38 = vsyncadd [#allocation3], %s37
      %s39 = sshll.u32 [#allocation2], 4
      %s40 = int_to_ptr.vmem [resolvable:$true] %s39
      %45 = dma.hbm_to_vmem [thread:$0]  %s4, 1280, %s40, [#allocation3], 64, 64, 4
    $region21: #{encoder_forward.1} parent=1 // pred_fallthru
      _
    // Predicated region
    $region22: #{encoder_forward.1} parent=1 // pred_check
      _
    $region23: #{encoder_forward.1} parent=1 // pred_check_branch
      %47 = sbr.rel (0) target = $region25
    $region24: #{encoder_forward.1} parent=1 // pred_region
      _
    $region25: #{encoder_forward.1} parent=1 // pred_fallthru
      _
    // Predicated region
    $region26: #{encoder_forward.1} parent=1 // pred_check
      _
    $region27: #{encoder_forward.1} parent=1 // pred_check_branch
      %49 = sbr.rel (0) target = $region29
    $region28: #{encoder_forward.1} parent=1 // pred_region
      _
    $region29: #{encoder_forward.1} parent=1 // pred_fallthru
      _
    // Predicated region
    $region30: #{encoder_forward.1} parent=1 // pred_check
      _
    $region31: #{encoder_forward.1} parent=1 // pred_check_branch
      %51 = sbr.rel (0) target = $region33
    $region32: #{encoder_forward.1} parent=1 // pred_region
      _
    $region33: #{encoder_forward.1} parent=1 // pred_fallthru
      _
    // Predicated region
    $region34: #{encoder_forward.1} parent=1 // pred_check
      _
    $region35: #{encoder_forward.1} parent=1 // pred_check_branch
      %53 = sbr.rel (0) target = $region37
    $region36: #{encoder_forward.1} parent=1 // pred_region
      _
    $region37: #{encoder_forward.1} parent=1 // pred_fallthru
      _
    // Predicated region
    $region38: #{encoder_forward.1} parent=1 // pred_check
      _
    $region39: #{encoder_forward.1} parent=1 // pred_check_branch
      %55 = sbr.rel (0) target = $region41
    $region40: #{encoder_forward.1} parent=1 // pred_region
      _
    $region41: #{encoder_forward.1} parent=1 // pred_fallthru
      _
    // Predicated region
    $region42: #{encoder_forward.1} parent=1 // pred_check
      _
    $region43: #{encoder_forward.1} parent=1 // pred_check_branch
      %57 = sbr.rel (0) target = $region45
    $region44: #{encoder_forward.1} parent=1 // pred_region
      _
    $region45: #{encoder_forward.1} parent=1 // pred_fallthru
      _
    // Predicated region
    $region46: #{encoder_forward.1} parent=1 // pred_check
      _
    $region47: #{encoder_forward.1} parent=1 // pred_check_branch
      %59 = sbr.rel (0) target = $region49
    $region48: #{encoder_forward.1} parent=1 // pred_region
      _
    $region49: #{encoder_forward.1} parent=1 // pred_fallthru
      _
    // Predicated region
    $region50: #{encoder_forward.1} parent=1 // pred_check
      _
    $region51: #{encoder_forward.1} parent=1 // pred_check_branch
      %61 = sbr.rel (0) target = $region53
    $region52: #{encoder_forward.1} parent=1 // pred_region
      _
    $region53: #{encoder_forward.1} parent=1 // pred_fallthru
      _
    // Predicated region
    $region54: #{encoder_forward.1} parent=1 // pred_check
      _
    $region55: #{encoder_forward.1} parent=1 // pred_check_branch
      %63 = sbr.rel (0) target = $region57
    $region56: #{encoder_forward.1} parent=1 // pred_region
      _
    $region57: #{encoder_forward.1} parent=1 // pred_fallthru
      _
    // Predicated region
    $region58: #{encoder_forward.1} parent=1 // pred_check
      _
    $region59: #{encoder_forward.1} parent=1 // pred_check_branch
      %65 = sbr.rel (0) target = $region61
    $region60: #{encoder_forward.1} parent=1 // pred_region
      _
    $region61: #{encoder_forward.1} parent=1 // pred_fallthru
      _
    // Predicated region
    $region62: #{encoder_forward.1} parent=1 // pred_check
      _
    $region63: #{encoder_forward.1} parent=1 // pred_check_branch
      %67 = sbr.rel (0) target = $region65
    $region64: #{encoder_forward.1} parent=1 // pred_region
      _
    $region65: #{encoder_forward.1} parent=1 // pred_fallthru
      _
    // Predicated region
    $region66: #{encoder_forward.1} parent=1 // pred_check
      _
    $region67: #{encoder_forward.1} parent=1 // pred_check_branch
      %69 = sbr.rel (0) target = $region69
    $region68: #{encoder_forward.1} parent=1 // pred_region
      _
    $region69: #{encoder_forward.1} parent=1 // pred_fallthru
      _
    // Predicated region
    $region70: #{encoder_forward.1} parent=1 // pred_check
      _
    $region71: #{encoder_forward.1} parent=1 // pred_check_branch
      %71 = sbr.rel (0) target = $region73
    $region72: #{encoder_forward.1} parent=1 // pred_region
      _
    $region73: #{encoder_forward.1} parent=1 // pred_fallthru
      _
    // Predicated region
    $region74: #{encoder_forward.1} parent=1 // pred_check
      _
    $region75: #{encoder_forward.1} parent=1 // pred_check_branch
      %73 = sbr.rel (0) target = $region77
    $region76: #{encoder_forward.1} parent=1 // pred_region
      _
    $region77: #{encoder_forward.1} parent=1 // pred_fallthru
      _
    // Predicated region
    $region78: #{encoder_forward.1} parent=1 // pred_check
      _
    $region79: #{encoder_forward.1} parent=1 // pred_check_branch
      %75 = sbr.rel (0) target = $region81
    $region80: #{encoder_forward.1} parent=1 // pred_region
      %76 = dma.done [#allocation3], 1280
    $region81: #{encoder_forward.1} parent=1 // pred_fallthru
      _
    %v78 = vld [vmem:[%s0] sm:$0xff]
    %v79 = vld [vmem:[%s0 + $0x8] sm:$0xff]
    %v80 = vld [vmem:[%s0 + $0x10] sm:$0xff]
    %v81 = vld [vmem:[%s0 + $0x18] sm:$0xff]
    %v82 = vld [vmem:[%s2] sm:$0x1]
    %v83 = vld [vmem:[%s3] sm:$0x1]
    %vm88 = vcmask 1041408
    %v89 = vrot.slane %v78, 6
    %v90 = vrot.slane %v79, 6
    %v91 = vsel %vm88, %v89, %v90
    %v92 = vrot.slane %v80, 6
    %v93 = vrot.slane %v81, 6
    %v94 = vsel %vm88, %v92, %v93
    %v101 = vsel %vm88, 0.0, %v89
    %v102 = vsel %vm88, 0.0, %v92
    %v103 = vsel %vm88, %v90, 0.0
    %v104 = vsel %vm88, %v93, 0.0
    %v105 = vpack.c.bf16 %v91, %v101
    %v106 = vpack.c.bf16 %v103, %v103
    %v107 = vpack.c.bf16 %v94, %v102
    %v108 = vpack.c.bf16 %v104, %v104
    %v109 = vld [vmem:[%s1] sm:$0x3]
    %vm110 = vsmask.f32 7424
    %v112 = vshrl.u32 %v105, 16
    %v114 = vshll.u32 %v105, 16
    %v116 = vrot.slane %v114, 1
    %v117 = vor.u32 %v112, %v116
    %v119 = vshll.u32 %v106, 16
    %v121 = vrot.slane %v119, 1
    %v122 = vsel %vm110, %v117, %v121
    %v124 = vshrl.u32 %v107, 16
    %v126 = vshll.u32 %v107, 16
    %v128 = vrot.slane %v126, 1
    %v129 = vor.u32 %v124, %v128
    %v131 = vshll.u32 %v108, 16
    %v133 = vrot.slane %v131, 1
    %v134 = vsel %vm110, %v129, %v133
    %s135 = scalar_lea.vmem %s1, 2
    %v136 = vld [vmem:[%s135] sm:$0x3]
    %vm137 = vcmask 31744
    %v139 = vsel %vm137, %v122, 0
    %v142 = vsel %vm137, %v134, 0
    %v145 = vsel %vm88, %v136, 0
    %147 = vmatprep.subr.bf16.mxu0 0
    %148 = vmatpush1.bf16.msra.mxu0 0
    %149 = vmatprep.subr.bf16.mxu0 0
    %150 = vmatpush1.bf16.msra.mxu0 0
    %151 = vmatprep.subr.bf16.mxu0 0
    %152 = vmatpush1.bf16.msra.mxu0 0
    %153 = vmatprep.subr.bf16.mxu0 0
    %154 = vmatpush1.bf16.msra.mxu0 0
    %155 = vmatprep.subr.bf16.mxu0 0
    %156 = vmatpush1.bf16.msra.mxu0 0
    %157 = vmatprep.subr.bf16.mxu0 0
    %158 = vmatpush1.bf16.msra.mxu0 0
    %159 = vmatprep.subr.bf16.mxu0 0
    %160 = vmatpush1.bf16.msra.mxu0 0
    %161 = vmatprep.subr.bf16.mxu0 0
    %162 = vmatpush1.bf16.msra.mxu0 %v145
    %163 = vmatprep.subr.bf16.mxu0 0
    %164 = vmatpush2.bf16.msra.mxu0 0
    %165 = vmatprep.subr.bf16.mxu0 0
    %166 = vmatpush2.bf16.msra.mxu0 0
    %167 = vmatprep.subr.bf16.mxu0 0
    %168 = vmatpush2.bf16.msra.mxu0 0
    %169 = vmatprep.subr.bf16.mxu0 0
    %170 = vmatpush2.bf16.msra.mxu0 0
    %171 = vmatprep.subr.bf16.mxu0 0
    %172 = vmatpush2.bf16.msra.mxu0 0
    %173 = vmatprep.subr.bf16.mxu0 0
    %174 = vmatpush2.bf16.msra.mxu0 0
    %175 = vmatprep.subr.bf16.mxu0 0
    %176 = vmatpush2.bf16.msra.mxu0 0
    %177 = vmatprep.subr.bf16.mxu0 0
    %178 = vmatpush2.bf16.msra.mxu0 0
    %179 = vmatprep.mubr.bf16.mxu0 0
    %180 = vmatmul.mubr.bf16.gmra.mxu0 %v139
    %v181 = vpop.f32.mrf.mxu0
    %v182 = vadd.f32 0.0, %v181
    %v183 = vpop.f32.mrf.mxu0
    %v184 = vpop.f32.mrf.mxu0
    %v185 = vadd.f32 0.0, %v184
    %v186 = vpop.f32.mrf.mxu0
    %187 = vmatprep.mubr.bf16.mxu0 0
    %188 = vmatmul.mubr.bf16.gmra.mxu0 %v142
    %v189 = vpop.f32.mrf.mxu0
    %v190 = vadd.f32 0.0, %v189
    %v191 = vpop.f32.mrf.mxu0
    %v192 = vpop.f32.mrf.mxu0
    %v193 = vadd.f32 0.0, %v192
    %v194 = vpop.f32.mrf.mxu0
    %195 = vdwg.mxu0
    %v196 = vsel %vm137, %v105, 0
    %v198 = vsel %vm137, %v107, 0
    %v201 = vsel %vm88, %v109, 0
    %203 = vmatprep.subr.bf16.mxu0 0
    %204 = vmatpush1.bf16.msra.mxu0 0
    %205 = vmatprep.subr.bf16.mxu0 0
    %206 = vmatpush1.bf16.msra.mxu0 0
    %207 = vmatprep.subr.bf16.mxu0 0
    %208 = vmatpush1.bf16.msra.mxu0 0
    %209 = vmatprep.subr.bf16.mxu0 0
    %210 = vmatpush1.bf16.msra.mxu0 0
    %211 = vmatprep.subr.bf16.mxu0 0
    %212 = vmatpush1.bf16.msra.mxu0 0
    %213 = vmatprep.subr.bf16.mxu0 0
    %214 = vmatpush1.bf16.msra.mxu0 0
    %215 = vmatprep.subr.bf16.mxu0 0
    %216 = vmatpush1.bf16.msra.mxu0 0
    %217 = vmatprep.subr.bf16.mxu0 0
    %218 = vmatpush1.bf16.msra.mxu0 %v201
    %219 = vmatprep.subr.bf16.mxu0 0
    %220 = vmatpush2.bf16.msra.mxu0 0
    %221 = vmatprep.subr.bf16.mxu0 0
    %222 = vmatpush2.bf16.msra.mxu0 0
    %223 = vmatprep.subr.bf16.mxu0 0
    %224 = vmatpush2.bf16.msra.mxu0 0
    %225 = vmatprep.subr.bf16.mxu0 0
    %226 = vmatpush2.bf16.msra.mxu0 0
    %227 = vmatprep.subr.bf16.mxu0 0
    %228 = vmatpush2.bf16.msra.mxu0 0
    %229 = vmatprep.subr.bf16.mxu0 0
    %230 = vmatpush2.bf16.msra.mxu0 0
    %231 = vmatprep.subr.bf16.mxu0 0
    %232 = vmatpush2.bf16.msra.mxu0 0
    %233 = vmatprep.subr.bf16.mxu0 0
    %234 = vmatpush2.bf16.msra.mxu0 0
    %235 = vmatprep.mubr.bf16.mxu0 0
    %236 = vmatmul.mubr.bf16.gmra.mxu0 %v196
    %v237 = vpop.f32.mrf.mxu0
    %v238 = vadd.f32 %v182, %v237
    %v239 = vpop.f32.mrf.mxu0
    %v240 = vpop.f32.mrf.mxu0
    %v241 = vadd.f32 %v185, %v240
    %v242 = vpop.f32.mrf.mxu0
    %243 = vmatprep.mubr.bf16.mxu0 0
    %244 = vmatmul.mubr.bf16.gmra.mxu0 %v198
    %v245 = vpop.f32.mrf.mxu0
    %v246 = vadd.f32 %v190, %v245
    %v247 = vpop.f32.mrf.mxu0
    %v248 = vpop.f32.mrf.mxu0
    %v249 = vadd.f32 %v193, %v248
    %v250 = vpop.f32.mrf.mxu0
    %251 = vdwg.mxu0
    %vm256 = vcmask 1046528
    %v257 = vrot.slane %v105, 1
    %v258 = vrot.slane %v106, 1
    %v259 = vsel %vm256, %v257, %v258
    %v260 = vrot.slane %v107, 1
    %v261 = vrot.slane %v108, 1
    %v262 = vsel %vm256, %v260, %v261
    %s263 = scalar_lea.vmem %s1, 4
    %v264 = vld [vmem:[%s263] sm:$0x3]
    %v266 = vsel %vm137, %v259, 0
    %v269 = vsel %vm137, %v262, 0
    %v272 = vsel %vm88, %v264, 0
    %274 = vmatprep.subr.bf16.mxu0 0
    %275 = vmatpush1.bf16.msra.mxu0 0
    %276 = vmatprep.subr.bf16.mxu0 0
    %277 = vmatpush1.bf16.msra.mxu0 0
    %278 = vmatprep.subr.bf16.mxu0 0
    %279 = vmatpush1.bf16.msra.mxu0 0
    %280 = vmatprep.subr.bf16.mxu0 0
    %281 = vmatpush1.bf16.msra.mxu0 0
    %282 = vmatprep.subr.bf16.mxu0 0
    %283 = vmatpush1.bf16.msra.mxu0 0
    %284 = vmatprep.subr.bf16.mxu0 0
    %285 = vmatpush1.bf16.msra.mxu0 0
    %286 = vmatprep.subr.bf16.mxu0 0
    %287 = vmatpush1.bf16.msra.mxu0 0
    %288 = vmatprep.subr.bf16.mxu0 0
    %289 = vmatpush1.bf16.msra.mxu0 %v272
    %290 = vmatprep.subr.bf16.mxu0 0
    %291 = vmatpush2.bf16.msra.mxu0 0
    %292 = vmatprep.subr.bf16.mxu0 0
    %293 = vmatpush2.bf16.msra.mxu0 0
    %294 = vmatprep.subr.bf16.mxu0 0
    %295 = vmatpush2.bf16.msra.mxu0 0
    %296 = vmatprep.subr.bf16.mxu0 0
    %297 = vmatpush2.bf16.msra.mxu0 0
    %298 = vmatprep.subr.bf16.mxu0 0
    %299 = vmatpush2.bf16.msra.mxu0 0
    %300 = vmatprep.subr.bf16.mxu0 0
    %301 = vmatpush2.bf16.msra.mxu0 0
    %302 = vmatprep.subr.bf16.mxu0 0
    %303 = vmatpush2.bf16.msra.mxu0 0
    %304 = vmatprep.subr.bf16.mxu0 0
    %305 = vmatpush2.bf16.msra.mxu0 0
    %306 = vmatprep.mubr.bf16.mxu0 0
    %307 = vmatmul.mubr.bf16.gmra.mxu0 %v266
    %v308 = vpop.f32.mrf.mxu0
    %v309 = vadd.f32 0.0, %v308
    %v310 = vpop.f32.mrf.mxu0
    %v311 = vpop.f32.mrf.mxu0
    %v312 = vadd.f32 0.0, %v311
    %v313 = vpop.f32.mrf.mxu0
    %314 = vmatprep.mubr.bf16.mxu0 0
    %315 = vmatmul.mubr.bf16.gmra.mxu0 %v269
    %v316 = vpop.f32.mrf.mxu0
    %v317 = vadd.f32 0.0, %v316
    %v318 = vpop.f32.mrf.mxu0
    %v319 = vpop.f32.mrf.mxu0
    %v320 = vadd.f32 0.0, %v319
    %v321 = vpop.f32.mrf.mxu0
    %322 = vdwg.mxu0
    %v323 = vadd.f32 %v238, %v309
    %v324 = vadd.f32 %v241, %v312
    %v325 = vadd.f32 %v246, %v317
    %v326 = vadd.f32 %v249, %v320
    %vm327 = vsmask.f32 6400
    %v328 = vrot.slane %v112, 1
    %v329 = vrot.slane %v114, 2
    %v330 = vor.u32 %v328, %v329
    %v331 = vshrl.u32 %v106, 16
    %v333 = vrot.slane %v331, 1
    %v334 = vrot.slane %v119, 2
    %v335 = vor.u32 %v333, %v334
    %v336 = vsel %vm327, %v330, %v335
    %v337 = vrot.slane %v124, 1
    %v338 = vrot.slane %v126, 2
    %v339 = vor.u32 %v337, %v338
    %v340 = vshrl.u32 %v108, 16
    %v342 = vrot.slane %v340, 1
    %v343 = vrot.slane %v131, 2
    %v344 = vor.u32 %v342, %v343
    %v345 = vsel %vm327, %v339, %v344
    %s346 = scalar_lea.vmem %s1, 6
    %v347 = vld [vmem:[%s346] sm:$0x3]
    %v349 = vsel %vm137, %v336, 0
    %v352 = vsel %vm137, %v345, 0
    %v355 = vsel %vm88, %v347, 0
    %357 = vmatprep.subr.bf16.mxu0 0
    %358 = vmatpush1.bf16.msra.mxu0 0
    %359 = vmatprep.subr.bf16.mxu0 0
    %360 = vmatpush1.bf16.msra.mxu0 0
    %361 = vmatprep.subr.bf16.mxu0 0
    %362 = vmatpush1.bf16.msra.mxu0 0
    %363 = vmatprep.subr.bf16.mxu0 0
    %364 = vmatpush1.bf16.msra.mxu0 0
    %365 = vmatprep.subr.bf16.mxu0 0
    %366 = vmatpush1.bf16.msra.mxu0 0
    %367 = vmatprep.subr.bf16.mxu0 0
    %368 = vmatpush1.bf16.msra.mxu0 0
    %369 = vmatprep.subr.bf16.mxu0 0
    %370 = vmatpush1.bf16.msra.mxu0 0
    %371 = vmatprep.subr.bf16.mxu0 0
    %372 = vmatpush1.bf16.msra.mxu0 %v355
    %373 = vmatprep.subr.bf16.mxu0 0
    %374 = vmatpush2.bf16.msra.mxu0 0
    %375 = vmatprep.subr.bf16.mxu0 0
    %376 = vmatpush2.bf16.msra.mxu0 0
    %377 = vmatprep.subr.bf16.mxu0 0
    %378 = vmatpush2.bf16.msra.mxu0 0
    %379 = vmatprep.subr.bf16.mxu0 0
    %380 = vmatpush2.bf16.msra.mxu0 0
    %381 = vmatprep.subr.bf16.mxu0 0
    %382 = vmatpush2.bf16.msra.mxu0 0
    %383 = vmatprep.subr.bf16.mxu0 0
    %384 = vmatpush2.bf16.msra.mxu0 0
    %385 = vmatprep.subr.bf16.mxu0 0
    %386 = vmatpush2.bf16.msra.mxu0 0
    %387 = vmatprep.subr.bf16.mxu0 0
    %388 = vmatpush2.bf16.msra.mxu0 0
    %389 = vmatprep.mubr.bf16.mxu0 0
    %390 = vmatmul.mubr.bf16.gmra.mxu0 %v349
    %v391 = vpop.f32.mrf.mxu0
    %v392 = vadd.f32 0.0, %v391
    %v393 = vpop.f32.mrf.mxu0
    %v394 = vpop.f32.mrf.mxu0
    %v395 = vadd.f32 0.0, %v394
    %v396 = vpop.f32.mrf.mxu0
    %397 = vmatprep.mubr.bf16.mxu0 0
    %398 = vmatmul.mubr.bf16.gmra.mxu0 %v352
    %v399 = vpop.f32.mrf.mxu0
    %v400 = vadd.f32 0.0, %v399
    %v401 = vpop.f32.mrf.mxu0
    %v402 = vpop.f32.mrf.mxu0
    %v403 = vadd.f32 0.0, %v402
    %v404 = vpop.f32.mrf.mxu0
    %405 = vdwg.mxu0
    %v406 = vadd.f32 %v323, %v392
    %v407 = vadd.f32 %v324, %v395
    %v408 = vadd.f32 %v325, %v400
    %v409 = vadd.f32 %v326, %v403
    %vm410 = vcmask 1045504
    %v411 = vrot.slane %v105, 2
    %v412 = vrot.slane %v106, 2
    %v413 = vsel %vm410, %v411, %v412
    %v414 = vrot.slane %v107, 2
    %v415 = vrot.slane %v108, 2
    %v416 = vsel %vm410, %v414, %v415
    %s417 = scalar_lea.vmem %s1, 8
    %v418 = vld [vmem:[%s417] sm:$0x3]
    %v420 = vsel %vm137, %v413, 0
    %v423 = vsel %vm137, %v416, 0
    %v426 = vsel %vm88, %v418, 0
    %428 = vmatprep.subr.bf16.mxu0 0
    %429 = vmatpush1.bf16.msra.mxu0 0
    %430 = vmatprep.subr.bf16.mxu0 0
    %431 = vmatpush1.bf16.msra.mxu0 0
    %432 = vmatprep.subr.bf16.mxu0 0
    %433 = vmatpush1.bf16.msra.mxu0 0
    %434 = vmatprep.subr.bf16.mxu0 0
    %435 = vmatpush1.bf16.msra.mxu0 0
    %436 = vmatprep.subr.bf16.mxu0 0
    %437 = vmatpush1.bf16.msra.mxu0 0
    %438 = vmatprep.subr.bf16.mxu0 0
    %439 = vmatpush1.bf16.msra.mxu0 0
    %440 = vmatprep.subr.bf16.mxu0 0
    %441 = vmatpush1.bf16.msra.mxu0 0
    %442 = vmatprep.subr.bf16.mxu0 0
    %443 = vmatpush1.bf16.msra.mxu0 %v426
    %444 = vmatprep.subr.bf16.mxu0 0
    %445 = vmatpush2.bf16.msra.mxu0 0
    %446 = vmatprep.subr.bf16.mxu0 0
    %447 = vmatpush2.bf16.msra.mxu0 0
    %448 = vmatprep.subr.bf16.mxu0 0
    %449 = vmatpush2.bf16.msra.mxu0 0
    %450 = vmatprep.subr.bf16.mxu0 0
    %451 = vmatpush2.bf16.msra.mxu0 0
    %452 = vmatprep.subr.bf16.mxu0 0
    %453 = vmatpush2.bf16.msra.mxu0 0
    %454 = vmatprep.subr.bf16.mxu0 0
    %455 = vmatpush2.bf16.msra.mxu0 0
    %456 = vmatprep.subr.bf16.mxu0 0
    %457 = vmatpush2.bf16.msra.mxu0 0
    %458 = vmatprep.subr.bf16.mxu0 0
    %459 = vmatpush2.bf16.msra.mxu0 0
    %460 = vmatprep.mubr.bf16.mxu0 0
    %461 = vmatmul.mubr.bf16.gmra.mxu0 %v420
    %v462 = vpop.f32.mrf.mxu0
    %v463 = vadd.f32 0.0, %v462
    %v464 = vpop.f32.mrf.mxu0
    %v465 = vpop.f32.mrf.mxu0
    %v466 = vadd.f32 0.0, %v465
    %v467 = vpop.f32.mrf.mxu0
    %468 = vmatprep.mubr.bf16.mxu0 0
    %469 = vmatmul.mubr.bf16.gmra.mxu0 %v423
    %v470 = vpop.f32.mrf.mxu0
    %v471 = vadd.f32 0.0, %v470
    %v472 = vpop.f32.mrf.mxu0
    %v473 = vpop.f32.mrf.mxu0
    %v474 = vadd.f32 0.0, %v473
    %v475 = vpop.f32.mrf.mxu0
    %476 = vdwg.mxu0
    %v477 = vadd.f32 %v406, %v463
    %v478 = vadd.f32 %v407, %v466
    %v479 = vadd.f32 %v408, %v471
    %v480 = vadd.f32 %v409, %v474
    %vm481 = vcmask 261120
    %v482 = vsel %vm481, %v477, 0.0
    %v483 = vsel %vm481, %v478, 0.0
    %v484 = vadd.f32 %v482, %v483
    %v485 = vsel %vm481, %v479, 0.0
    %v486 = vadd.f32 %v484, %v485
    %v487 = vsel %vm481, %v480, 0.0
    %v488 = vadd.f32 %v486, %v487
    %v489 = vrot.slane %v488, 4
    %v490 = vadd.f32 %v488, %v489
    %v491 = vrot.slane %v490, 2
    %v492 = vadd.f32 %v490, %v491
    %v493 = vrot.slane %v492, 1
    %v494 = vadd.f32 %v492, %v493
    %v495 = vrcp.pop 32.0
    %v496 = vmul.f32 %v494, %v495
    %v497 = vmul.f32 %v477, %v477
    %v498 = vmul.f32 %v478, %v478
    %v499 = vmul.f32 %v479, %v479
    %v500 = vmul.f32 %v480, %v480
    %v501 = vsel %vm481, %v497, 0.0
    %v502 = vsel %vm481, %v498, 0.0
    %v503 = vadd.f32 %v501, %v502
    %v504 = vsel %vm481, %v499, 0.0
    %v505 = vadd.f32 %v503, %v504
    %v506 = vsel %vm481, %v500, 0.0
    %v507 = vadd.f32 %v505, %v506
    %v508 = vrot.slane %v507, 4
    %v509 = vadd.f32 %v507, %v508
    %v510 = vrot.slane %v509, 2
    %v511 = vadd.f32 %v509, %v510
    %v512 = vrot.slane %v511, 1
    %v513 = vadd.f32 %v511, %v512
    %v514 = vmul.f32 %v513, %v495
    %v515 = vmul.f32 %v496, %v496
    %v516 = vsub.f32 %v514, %v515
    %v517 = vadd.f32 %v516, 1e-05
    %v518 = vrsqrt.pop %v517
    %v519 = vmul.f32 %v82, %v518
    %v520 = vmul.f32 %v496, %v519
    %v521 = vsub.f32 %v83, %v520
    %v523 = vlaneseq
    %v524 = vshrl.u32 %v523, 7
    %v525 = vsub.s32 0, %v524
    %v526 = vrot.slane %v519, %v525
    %v528 = vmul.f32 %v477, %v526
    %v529 = vmul.f32 %v478, %v526
    %v530 = vmul.f32 %v479, %v526
    %v531 = vmul.f32 %v480, %v526
    %v533 = vlaneseq
    %v534 = vshrl.u32 %v533, 7
    %v535 = vsub.s32 0, %v534
    %v536 = vrot.slane %v521, %v535
    %v538 = vadd.f32 %v528, %v536
    %v539 = vadd.f32 %v529, %v536
    %v540 = vadd.f32 %v530, %v536
    %v541 = vadd.f32 %v531, %v536
    %v542 = vmul.f32 %v538, 0.01
    %v543 = vmul.f32 %v539, 0.01
    %v544 = vmul.f32 %v540, 0.01
    %v545 = vmul.f32 %v541, 0.01
    %v546 = vmax.f32 %v538, %v542
    %v547 = vmax.f32 %v539, %v543
    %v548 = vmax.f32 %v540, %v544
    %v549 = vmax.f32 %v541, %v545
    %v550 = vld [vmem:[%s5] sm:$0x1]
    %v551 = vld [vmem:[%s6] sm:$0x1]
    %v556 = vrot.slane %v546, 6
    %v557 = vrot.slane %v547, 6
    %v558 = vsel %vm88, %v556, %v557
    %v559 = vrot.slane %v548, 6
    %v560 = vrot.slane %v549, 6
    %v561 = vsel %vm88, %v559, %v560
    %v568 = vsel %vm88, 0.0, %v556
    %v569 = vsel %vm88, 0.0, %v559
    %v570 = vsel %vm88, %v557, 0.0
    %v571 = vsel %vm88, %v560, 0.0
    %v572 = vpack.c.bf16 %v558, %v568
    %v573 = vpack.c.bf16 %v570, %v570
    %v574 = vpack.c.bf16 %v561, %v569
    %v575 = vpack.c.bf16 %v571, %v571
    %v576 = vld [vmem:[#allocation2] sm:$0xf]
    %v577 = vld [vmem:[#allocation2 + $0x4] sm:$0xf]
    %v578 = vld [vmem:[#allocation2 + $0x8] sm:$0xf]
    %v579 = vld [vmem:[#allocation2 + $0xc] sm:$0xf]
    %v581 = vshrl.u32 %v572, 16
    %v583 = vshll.u32 %v572, 16
    %v585 = vrot.slane %v583, 1
    %v586 = vor.u32 %v581, %v585
    %v588 = vshll.u32 %v573, 16
    %v590 = vrot.slane %v588, 1
    %v591 = vsel %vm110, %v586, %v590
    %v593 = vshrl.u32 %v574, 16
    %v595 = vshll.u32 %v574, 16
    %v597 = vrot.slane %v595, 1
    %v598 = vor.u32 %v593, %v597
    %v600 = vshll.u32 %v575, 16
    %v602 = vrot.slane %v600, 1
    %v603 = vsel %vm110, %v598, %v602
    %s604 = scalar_lea.vmem [#allocation2], 16
    %v605 = vld [vmem:[%s604] sm:$0xf]
    %v606 = vld [vmem:[%s604 + $0x4] sm:$0xf]
    %v607 = vld [vmem:[%s604 + $0x8] sm:$0xf]
    %v608 = vld [vmem:[%s604 + $0xc] sm:$0xf]
    %v613 = vunpack.c.l.b16 %v605
    %v614 = vunpack.c.l.b16 %v606
    %v615 = vunpack.c.l.b16 %v607
    %v616 = vunpack.c.l.b16 %v608
    %v617 = vpack.c.b16 %v614, %v613
    %v618 = vpack.c.b16 %v616, %v615
    %v622 = vsel %vm481, %v591, 0
    %v625 = vsel %vm481, %v603, 0
    %627 = vmatprep.subr.bf16.mxu0 0
    %628 = vmatpush1.bf16.msra.mxu0 0
    %629 = vmatprep.subr.bf16.mxu0 0
    %630 = vmatpush1.bf16.msra.mxu0 0
    %631 = vmatprep.subr.bf16.mxu0 0
    %632 = vmatpush1.bf16.msra.mxu0 0
    %633 = vmatprep.subr.bf16.mxu0 0
    %634 = vmatpush1.bf16.msra.mxu0 0
    %635 = vmatprep.subr.bf16.mxu0 0
    %636 = vmatpush1.bf16.msra.mxu0 0
    %637 = vmatprep.subr.bf16.mxu0 0
    %638 = vmatpush1.bf16.msra.mxu0 0
    %639 = vmatprep.subr.bf16.mxu0 0
    %640 = vmatpush1.bf16.msra.mxu0 %v618
    %641 = vmatprep.subr.bf16.mxu0 0
    %642 = vmatpush1.bf16.msra.mxu0 %v617
    %643 = vmatprep.subr.bf16.mxu0 0
    %644 = vmatpush2.bf16.msra.mxu0 0
    %645 = vmatprep.subr.bf16.mxu0 0
    %646 = vmatpush2.bf16.msra.mxu0 0
    %647 = vmatprep.subr.bf16.mxu0 0
    %648 = vmatpush2.bf16.msra.mxu0 0
    %649 = vmatprep.subr.bf16.mxu0 0
    %650 = vmatpush2.bf16.msra.mxu0 0
    %651 = vmatprep.subr.bf16.mxu0 0
    %652 = vmatpush2.bf16.msra.mxu0 0
    %653 = vmatprep.subr.bf16.mxu0 0
    %654 = vmatpush2.bf16.msra.mxu0 0
    %655 = vmatprep.subr.bf16.mxu0 0
    %656 = vmatpush2.bf16.msra.mxu0 0
    %657 = vmatprep.subr.bf16.mxu0 0
    %658 = vmatpush2.bf16.msra.mxu0 0
    %659 = vmatprep.mubr.bf16.mxu0 0
    %660 = vmatmul.mubr.bf16.gmra.mxu0 %v622
    %v661 = vpop.f32.mrf.mxu0
    %v662 = vadd.f32 0.0, %v661
    %v663 = vpop.f32.mrf.mxu0
    %v664 = vpop.f32.mrf.mxu0
    %v665 = vadd.f32 0.0, %v664
    %v666 = vpop.f32.mrf.mxu0
    %667 = vmatprep.mubr.bf16.mxu0 0
    %668 = vmatmul.mubr.bf16.gmra.mxu0 %v625
    %v669 = vpop.f32.mrf.mxu0
    %v670 = vadd.f32 0.0, %v669
    %v671 = vpop.f32.mrf.mxu0
    %v672 = vpop.f32.mrf.mxu0
    %v673 = vadd.f32 0.0, %v672
    %v674 = vpop.f32.mrf.mxu0
    %675 = vdwg.mxu0
    %v680 = vunpack.c.l.b16 %v576
    %v681 = vunpack.c.l.b16 %v577
    %v682 = vunpack.c.l.b16 %v578
    %v683 = vunpack.c.l.b16 %v579
    %v684 = vpack.c.b16 %v681, %v680
    %v685 = vpack.c.b16 %v683, %v682
    %v688 = vsel %vm481, %v572, 0
    %v690 = vsel %vm481, %v574, 0
    %692 = vmatprep.subr.bf16.mxu0 0
    %693 = vmatpush1.bf16.msra.mxu0 0
    %694 = vmatprep.subr.bf16.mxu0 0
    %695 = vmatpush1.bf16.msra.mxu0 0
    %696 = vmatprep.subr.bf16.mxu0 0
    %697 = vmatpush1.bf16.msra.mxu0 0
    %698 = vmatprep.subr.bf16.mxu0 0
    %699 = vmatpush1.bf16.msra.mxu0 0
    %700 = vmatprep.subr.bf16.mxu0 0
    %701 = vmatpush1.bf16.msra.mxu0 0
    %702 = vmatprep.subr.bf16.mxu0 0
    %703 = vmatpush1.bf16.msra.mxu0 0
    %704 = vmatprep.subr.bf16.mxu0 0
    %705 = vmatpush1.bf16.msra.mxu0 %v685
    %706 = vmatprep.subr.bf16.mxu0 0
    %707 = vmatpush1.bf16.msra.mxu0 %v684
    %708 = vmatprep.subr.bf16.mxu0 0
    %709 = vmatpush2.bf16.msra.mxu0 0
    %710 = vmatprep.subr.bf16.mxu0 0
    %711 = vmatpush2.bf16.msra.mxu0 0
    %712 = vmatprep.subr.bf16.mxu0 0
    %713 = vmatpush2.bf16.msra.mxu0 0
    %714 = vmatprep.subr.bf16.mxu0 0
    %715 = vmatpush2.bf16.msra.mxu0 0
    %716 = vmatprep.subr.bf16.mxu0 0
    %717 = vmatpush2.bf16.msra.mxu0 0
    %718 = vmatprep.subr.bf16.mxu0 0
    %719 = vmatpush2.bf16.msra.mxu0 0
    %720 = vmatprep.subr.bf16.mxu0 0
    %721 = vmatpush2.bf16.msra.mxu0 0
    %722 = vmatprep.subr.bf16.mxu0 0
    %723 = vmatpush2.bf16.msra.mxu0 0
    %724 = vmatprep.mubr.bf16.mxu0 0
    %725 = vmatmul.mubr.bf16.gmra.mxu0 %v688
    %v726 = vpop.f32.mrf.mxu0
    %v727 = vadd.f32 %v662, %v726
    %v728 = vpop.f32.mrf.mxu0
    %v729 = vpop.f32.mrf.mxu0
    %v730 = vadd.f32 %v665, %v729
    %v731 = vpop.f32.mrf.mxu0
    %732 = vmatprep.mubr.bf16.mxu0 0
    %733 = vmatmul.mubr.bf16.gmra.mxu0 %v690
    %v734 = vpop.f32.mrf.mxu0
    %v735 = vadd.f32 %v670, %v734
    %v736 = vpop.f32.mrf.mxu0
    %v737 = vpop.f32.mrf.mxu0
    %v738 = vadd.f32 %v673, %v737
    %v739 = vpop.f32.mrf.mxu0
    %740 = vdwg.mxu0
    %v745 = vrot.slane %v572, 1
    %v746 = vrot.slane %v573, 1
    %v747 = vsel %vm256, %v745, %v746
    %v748 = vrot.slane %v574, 1
    %v749 = vrot.slane %v575, 1
    %v750 = vsel %vm256, %v748, %v749
    %s751 = scalar_lea.vmem [#allocation2], 32
    %v752 = vld [vmem:[%s751] sm:$0xf]
    %v753 = vld [vmem:[%s751 + $0x4] sm:$0xf]
    %v754 = vld [vmem:[%s751 + $0x8] sm:$0xf]
    %v755 = vld [vmem:[%s751 + $0xc] sm:$0xf]
    %v760 = vunpack.c.l.b16 %v752
    %v761 = vunpack.c.l.b16 %v753
    %v762 = vunpack.c.l.b16 %v754
    %v763 = vunpack.c.l.b16 %v755
    %v764 = vpack.c.b16 %v761, %v760
    %v765 = vpack.c.b16 %v763, %v762
    %v769 = vsel %vm481, %v747, 0
    %v772 = vsel %vm481, %v750, 0
    %774 = vmatprep.subr.bf16.mxu0 0
    %775 = vmatpush1.bf16.msra.mxu0 0
    %776 = vmatprep.subr.bf16.mxu0 0
    %777 = vmatpush1.bf16.msra.mxu0 0
    %778 = vmatprep.subr.bf16.mxu0 0
    %779 = vmatpush1.bf16.msra.mxu0 0
    %780 = vmatprep.subr.bf16.mxu0 0
    %781 = vmatpush1.bf16.msra.mxu0 0
    %782 = vmatprep.subr.bf16.mxu0 0
    %783 = vmatpush1.bf16.msra.mxu0 0
    %784 = vmatprep.subr.bf16.mxu0 0
    %785 = vmatpush1.bf16.msra.mxu0 0
    %786 = vmatprep.subr.bf16.mxu0 0
    %787 = vmatpush1.bf16.msra.mxu0 %v765
    %788 = vmatprep.subr.bf16.mxu0 0
    %789 = vmatpush1.bf16.msra.mxu0 %v764
    %790 = vmatprep.subr.bf16.mxu0 0
    %791 = vmatpush2.bf16.msra.mxu0 0
    %792 = vmatprep.subr.bf16.mxu0 0
    %793 = vmatpush2.bf16.msra.mxu0 0
    %794 = vmatprep.subr.bf16.mxu0 0
    %795 = vmatpush2.bf16.msra.mxu0 0
    %796 = vmatprep.subr.bf16.mxu0 0
    %797 = vmatpush2.bf16.msra.mxu0 0
    %798 = vmatprep.subr.bf16.mxu0 0
    %799 = vmatpush2.bf16.msra.mxu0 0
    %800 = vmatprep.subr.bf16.mxu0 0
    %801 = vmatpush2.bf16.msra.mxu0 0
    %802 = vmatprep.subr.bf16.mxu0 0
    %803 = vmatpush2.bf16.msra.mxu0 0
    %804 = vmatprep.subr.bf16.mxu0 0
    %805 = vmatpush2.bf16.msra.mxu0 0
    %806 = vmatprep.mubr.bf16.mxu0 0
    %807 = vmatmul.mubr.bf16.gmra.mxu0 %v769
    %v808 = vpop.f32.mrf.mxu0
    %v809 = vadd.f32 0.0, %v808
    %v810 = vpop.f32.mrf.mxu0
    %v811 = vpop.f32.mrf.mxu0
    %v812 = vadd.f32 0.0, %v811
    %v813 = vpop.f32.mrf.mxu0
    %814 = vmatprep.mubr.bf16.mxu0 0
    %815 = vmatmul.mubr.bf16.gmra.mxu0 %v772
    %v816 = vpop.f32.mrf.mxu0
    %v817 = vadd.f32 0.0, %v816
    %v818 = vpop.f32.mrf.mxu0
    %v819 = vpop.f32.mrf.mxu0
    %v820 = vadd.f32 0.0, %v819
    %v821 = vpop.f32.mrf.mxu0
    %822 = vdwg.mxu0
    %v823 = vadd.f32 %v727, %v809
    %v824 = vadd.f32 %v730, %v812
    %v825 = vadd.f32 %v735, %v817
    %v826 = vadd.f32 %v738, %v820
    %v827 = vrot.slane %v581, 1
    %v828 = vrot.slane %v583, 2
    %v829 = vor.u32 %v827, %v828
    %v830 = vshrl.u32 %v573, 16
    %v832 = vrot.slane %v830, 1
    %v833 = vrot.slane %v588, 2
    %v834 = vor.u32 %v832, %v833
    %v835 = vsel %vm327, %v829, %v834
    %v836 = vrot.slane %v593, 1
    %v837 = vrot.slane %v595, 2
    %v838 = vor.u32 %v836, %v837
    %v839 = vshrl.u32 %v575, 16
    %v841 = vrot.slane %v839, 1
    %v842 = vrot.slane %v600, 2
    %v843 = vor.u32 %v841, %v842
    %v844 = vsel %vm327, %v838, %v843
    %s845 = scalar_lea.vmem [#allocation2], 48
    %v846 = vld [vmem:[%s845] sm:$0xf]
    %v847 = vld [vmem:[%s845 + $0x4] sm:$0xf]
    %v848 = vld [vmem:[%s845 + $0x8] sm:$0xf]
    %v849 = vld [vmem:[%s845 + $0xc] sm:$0xf]
    %v854 = vunpack.c.l.b16 %v846
    %v855 = vunpack.c.l.b16 %v847
    %v856 = vunpack.c.l.b16 %v848
    %v857 = vunpack.c.l.b16 %v849
    %v858 = vpack.c.b16 %v855, %v854
    %v859 = vpack.c.b16 %v857, %v856
    %v863 = vsel %vm481, %v835, 0
    %v866 = vsel %vm481, %v844, 0
    %868 = vmatprep.subr.bf16.mxu0 0
    %869 = vmatpush1.bf16.msra.mxu0 0
    %870 = vmatprep.subr.bf16.mxu0 0
    %871 = vmatpush1.bf16.msra.mxu0 0
    %872 = vmatprep.subr.bf16.mxu0 0
    %873 = vmatpush1.bf16.msra.mxu0 0
    %874 = vmatprep.subr.bf16.mxu0 0
    %875 = vmatpush1.bf16.msra.mxu0 0
    %876 = vmatprep.subr.bf16.mxu0 0
    %877 = vmatpush1.bf16.msra.mxu0 0
    %878 = vmatprep.subr.bf16.mxu0 0
    %879 = vmatpush1.bf16.msra.mxu0 0
    %880 = vmatprep.subr.bf16.mxu0 0
    %881 = vmatpush1.bf16.msra.mxu0 %v859
    %882 = vmatprep.subr.bf16.mxu0 0
    %883 = vmatpush1.bf16.msra.mxu0 %v858
    %884 = vmatprep.subr.bf16.mxu0 0
    %885 = vmatpush2.bf16.msra.mxu0 0
    %886 = vmatprep.subr.bf16.mxu0 0
    %887 = vmatpush2.bf16.msra.mxu0 0
    %888 = vmatprep.subr.bf16.mxu0 0
    %889 = vmatpush2.bf16.msra.mxu0 0
    %890 = vmatprep.subr.bf16.mxu0 0
    %891 = vmatpush2.bf16.msra.mxu0 0
    %892 = vmatprep.subr.bf16.mxu0 0
    %893 = vmatpush2.bf16.msra.mxu0 0
    %894 = vmatprep.subr.bf16.mxu0 0
    %895 = vmatpush2.bf16.msra.mxu0 0
    %896 = vmatprep.subr.bf16.mxu0 0
    %897 = vmatpush2.bf16.msra.mxu0 0
    %898 = vmatprep.subr.bf16.mxu0 0
    %899 = vmatpush2.bf16.msra.mxu0 0
    %900 = vmatprep.mubr.bf16.mxu0 0
    %901 = vmatmul.mubr.bf16.gmra.mxu0 %v863
    %v902 = vpop.f32.mrf.mxu0
    %v903 = vadd.f32 0.0, %v902
    %v904 = vpop.f32.mrf.mxu0
    %v905 = vpop.f32.mrf.mxu0
    %v906 = vadd.f32 0.0, %v905
    %v907 = vpop.f32.mrf.mxu0
    %908 = vmatprep.mubr.bf16.mxu0 0
    %909 = vmatmul.mubr.bf16.gmra.mxu0 %v866
    %v910 = vpop.f32.mrf.mxu0
    %v911 = vadd.f32 0.0, %v910
    %v912 = vpop.f32.mrf.mxu0
    %v913 = vpop.f32.mrf.mxu0
    %v914 = vadd.f32 0.0, %v913
    %v915 = vpop.f32.mrf.mxu0
    %916 = vdwg.mxu0
    %v917 = vadd.f32 %v823, %v903
    %v918 = vadd.f32 %v824, %v906
    %v919 = vadd.f32 %v825, %v911
    %v920 = vadd.f32 %v826, %v914
    %v921 = vrot.slane %v572, 2
    %v922 = vrot.slane %v573, 2
    %v923 = vsel %vm410, %v921, %v922
    %v924 = vrot.slane %v574, 2
    %v925 = vrot.slane %v575, 2
    %v926 = vsel %vm410, %v924, %v925
    %s927 = scalar_lea.vmem [#allocation2], 64
    %v928 = vld [vmem:[%s927] sm:$0xf]
    %v929 = vld [vmem:[%s927 + $0x4] sm:$0xf]
    %v930 = vld [vmem:[%s927 + $0x8] sm:$0xf]
    %v931 = vld [vmem:[%s927 + $0xc] sm:$0xf]
    %v936 = vunpack.c.l.b16 %v928
    %v937 = vunpack.c.l.b16 %v929
    %v938 = vunpack.c.l.b16 %v930
    %v939 = vunpack.c.l.b16 %v931
    %v940 = vpack.c.b16 %v937, %v936
    %v941 = vpack.c.b16 %v939, %v938
    %v945 = vsel %vm481, %v923, 0
    %v948 = vsel %vm481, %v926, 0
    %950 = vmatprep.subr.bf16.mxu0 0
    %951 = vmatpush1.bf16.msra.mxu0 0
    %952 = vmatprep.subr.bf16.mxu0 0
    %953 = vmatpush1.bf16.msra.mxu0 0
    %954 = vmatprep.subr.bf16.mxu0 0
    %955 = vmatpush1.bf16.msra.mxu0 0
    %956 = vmatprep.subr.bf16.mxu0 0
    %957 = vmatpush1.bf16.msra.mxu0 0
    %958 = vmatprep.subr.bf16.mxu0 0
    %959 = vmatpush1.bf16.msra.mxu0 0
    %960 = vmatprep.subr.bf16.mxu0 0
    %961 = vmatpush1.bf16.msra.mxu0 0
    %962 = vmatprep.subr.bf16.mxu0 0
    %963 = vmatpush1.bf16.msra.mxu0 %v941
    %964 = vmatprep.subr.bf16.mxu0 0
    %965 = vmatpush1.bf16.msra.mxu0 %v940
    %966 = vmatprep.subr.bf16.mxu0 0
    %967 = vmatpush2.bf16.msra.mxu0 0
    %968 = vmatprep.subr.bf16.mxu0 0
    %969 = vmatpush2.bf16.msra.mxu0 0
    %970 = vmatprep.subr.bf16.mxu0 0
    %971 = vmatpush2.bf16.msra.mxu0 0
    %972 = vmatprep.subr.bf16.mxu0 0
    %973 = vmatpush2.bf16.msra.mxu0 0
    %974 = vmatprep.subr.bf16.mxu0 0
    %975 = vmatpush2.bf16.msra.mxu0 0
    %976 = vmatprep.subr.bf16.mxu0 0
    %977 = vmatpush2.bf16.msra.mxu0 0
    %978 = vmatprep.subr.bf16.mxu0 0
    %979 = vmatpush2.bf16.msra.mxu0 0
    %980 = vmatprep.subr.bf16.mxu0 0
    %981 = vmatpush2.bf16.msra.mxu0 0
    %982 = vmatprep.mubr.bf16.mxu0 0
    %983 = vmatmul.mubr.bf16.gmra.mxu0 %v945
    %v984 = vpop.f32.mrf.mxu0
    %v985 = vadd.f32 0.0, %v984
    %v986 = vpop.f32.mrf.mxu0
    %v987 = vpop.f32.mrf.mxu0
    %v988 = vadd.f32 0.0, %v987
    %v989 = vpop.f32.mrf.mxu0
    %990 = vmatprep.mubr.bf16.mxu0 0
    %991 = vmatmul.mubr.bf16.gmra.mxu0 %v948
    %v992 = vpop.f32.mrf.mxu0
    %v993 = vadd.f32 0.0, %v992
    %v994 = vpop.f32.mrf.mxu0
    %v995 = vpop.f32.mrf.mxu0
    %v996 = vadd.f32 0.0, %v995
    %v997 = vpop.f32.mrf.mxu0
    %998 = vdwg.mxu0
    %v999 = vadd.f32 %v917, %v985
    %v1000 = vadd.f32 %v918, %v988
    %v1001 = vadd.f32 %v919, %v993
    %v1002 = vadd.f32 %v920, %v996
    %vm1003 = vcmask 523264
    %v1004 = vsel %vm1003, %v999, 0.0
    %v1005 = vsel %vm1003, %v1000, 0.0
    %v1006 = vadd.f32 %v1004, %v1005
    %v1007 = vsel %vm1003, %v1001, 0.0
    %v1008 = vadd.f32 %v1006, %v1007
    %v1009 = vsel %vm1003, %v1002, 0.0
    %v1010 = vadd.f32 %v1008, %v1009
    %v1011 = vrot.slane %v1010, 4
    %v1012 = vadd.f32 %v1010, %v1011
    %v1013 = vrot.slane %v1012, 2
    %v1014 = vadd.f32 %v1012, %v1013
    %v1015 = vrot.slane %v1014, 1
    %v1016 = vadd.f32 %v1014, %v1015
    %v1017 = vmul.f32 %v1016, %v495
    %v1018 = vmul.f32 %v999, %v999
    %v1019 = vmul.f32 %v1000, %v1000
    %v1020 = vmul.f32 %v1001, %v1001
    %v1021 = vmul.f32 %v1002, %v1002
    %v1022 = vsel %vm1003, %v1018, 0.0
    %v1023 = vsel %vm1003, %v1019, 0.0
    %v1024 = vadd.f32 %v1022, %v1023
    %v1025 = vsel %vm1003, %v1020, 0.0
    %v1026 = vadd.f32 %v1024, %v1025
    %v1027 = vsel %vm1003, %v1021, 0.0
    %v1028 = vadd.f32 %v1026, %v1027
    %v1029 = vrot.slane %v1028, 4
    %v1030 = vadd.f32 %v1028, %v1029
    %v1031 = vrot.slane %v1030, 2
    %v1032 = vadd.f32 %v1030, %v1031
    %v1033 = vrot.slane %v1032, 1
    %v1034 = vadd.f32 %v1032, %v1033
    %v1035 = vmul.f32 %v1034, %v495
    %v1036 = vmul.f32 %v1017, %v1017
    %v1037 = vsub.f32 %v1035, %v1036
    %v1038 = vadd.f32 %v1037, 1e-05
    %v1039 = vrsqrt.pop %v1038
    %v1040 = vmul.f32 %v550, %v1039
    %v1041 = vmul.f32 %v1017, %v1040
    %v1042 = vsub.f32 %v551, %v1041
    %v1044 = vlaneseq
    %v1045 = vshrl.u32 %v1044, 7
    %v1046 = vsub.s32 0, %v1045
    %v1047 = vrot.slane %v1040, %v1046
    %v1049 = vmul.f32 %v999, %v1047
    %v1050 = vmul.f32 %v1000, %v1047
    %v1051 = vmul.f32 %v1001, %v1047
    %v1052 = vmul.f32 %v1002, %v1047
    %v1054 = vlaneseq
    %v1055 = vshrl.u32 %v1054, 7
    %v1056 = vsub.s32 0, %v1055
    %v1057 = vrot.slane %v1042, %v1056
    %v1059 = vadd.f32 %v1049, %v1057
    %v1060 = vadd.f32 %v1050, %v1057
    %v1061 = vadd.f32 %v1051, %v1057
    %v1062 = vadd.f32 %v1052, %v1057
    %v1063 = vmul.f32 %v1059, 0.01
    %v1064 = vmul.f32 %v1060, 0.01
    %v1065 = vmul.f32 %v1061, 0.01
    %v1066 = vmul.f32 %v1062, 0.01
    %v1067 = vmax.f32 %v1059, %v1063
    %v1068 = vmax.f32 %v1060, %v1064
    %v1069 = vmax.f32 %v1061, %v1065
    %v1070 = vmax.f32 %v1062, %v1066
    %v1071 = vld [vmem:[%s8] sm:$0x1]
    %v1072 = vld [vmem:[%s9] sm:$0x1]
    %v1077 = vrot.slane %v1067, 6
    %v1078 = vrot.slane %v1068, 6
    %v1079 = vsel %vm88, %v1077, %v1078
    %v1080 = vrot.slane %v1069, 6
    %v1081 = vrot.slane %v1070, 6
    %v1082 = vsel %vm88, %v1080, %v1081
    %v1089 = vsel %vm88, 0.0, %v1077
    %v1090 = vsel %vm88, 0.0, %v1080
    %v1091 = vsel %vm88, %v1078, 0.0
    %v1092 = vsel %vm88, %v1081, 0.0
    %v1093 = vpack.c.bf16 %v1079, %v1089
    %v1094 = vpack.c.bf16 %v1091, %v1091
    %v1095 = vpack.c.bf16 %v1082, %v1090
    %v1096 = vpack.c.bf16 %v1092, %v1092
    %v1097 = vld [vmem:[%s7] sm:$0xf]
    %v1098 = vld [vmem:[%s7 + $0x4] sm:$0xf]
    %v1099 = vld [vmem:[%s7 + $0x8] sm:$0xf]
    %v1100 = vld [vmem:[%s7 + $0xc] sm:$0xf]
    %v1101 = vld [vmem:[%s7 + $0x10] sm:$0xf]
    %v1102 = vld [vmem:[%s7 + $0x14] sm:$0xf]
    %v1103 = vld [vmem:[%s7 + $0x18] sm:$0xf]
    %v1104 = vld [vmem:[%s7 + $0x1c] sm:$0xf]
    %v1106 = vshrl.u32 %v1093, 16
    %v1108 = vshll.u32 %v1093, 16
    %v1110 = vrot.slane %v1108, 1
    %v1111 = vor.u32 %v1106, %v1110
    %v1113 = vshll.u32 %v1094, 16
    %v1115 = vrot.slane %v1113, 1
    %v1116 = vsel %vm110, %v1111, %v1115
    %v1118 = vshrl.u32 %v1095, 16
    %v1120 = vshll.u32 %v1095, 16
    %v1122 = vrot.slane %v1120, 1
    %v1123 = vor.u32 %v1118, %v1122
    %v1125 = vshll.u32 %v1096, 16
    %v1127 = vrot.slane %v1125, 1
    %v1128 = vsel %vm110, %v1123, %v1127
    %s1129 = scalar_lea.vmem %s7, 32
    %v1130 = vld [vmem:[%s1129] sm:$0xf]
    %v1131 = vld [vmem:[%s1129 + $0x4] sm:$0xf]
    %v1132 = vld [vmem:[%s1129 + $0x8] sm:$0xf]
    %v1133 = vld [vmem:[%s1129 + $0xc] sm:$0xf]
    %v1134 = vld [vmem:[%s1129 + $0x10] sm:$0xf]
    %v1135 = vld [vmem:[%s1129 + $0x14] sm:$0xf]
    %v1136 = vld [vmem:[%s1129 + $0x18] sm:$0xf]
    %v1137 = vld [vmem:[%s1129 + $0x1c] sm:$0xf]
    %v1146 = vunpack.c.l.b16 %v1130
    %v1147 = vunpack.c.l.b16 %v1131
    %v1148 = vunpack.c.l.b16 %v1132
    %v1149 = vunpack.c.l.b16 %v1133
    %v1150 = vunpack.c.l.b16 %v1134
    %v1151 = vunpack.c.l.b16 %v1135
    %v1152 = vunpack.c.l.b16 %v1136
    %v1153 = vunpack.c.l.b16 %v1137
    %v1154 = vpack.c.b16 %v1147, %v1146
    %v1155 = vpack.c.b16 %v1149, %v1148
    %v1156 = vpack.c.b16 %v1151, %v1150
    %v1157 = vpack.c.b16 %v1153, %v1152
    %v1163 = vsel %vm1003, %v1116, 0
    %v1166 = vsel %vm1003, %v1128, 0
    %1168 = vmatprep.subr.bf16.mxu0 0
    %1169 = vmatpush1.bf16.msra.mxu0 0
    %1170 = vmatprep.subr.bf16.mxu0 0
    %1171 = vmatpush1.bf16.msra.mxu0 0
    %1172 = vmatprep.subr.bf16.mxu0 0
    %1173 = vmatpush1.bf16.msra.mxu0 0
    %1174 = vmatprep.subr.bf16.mxu0 0
    %1175 = vmatpush1.bf16.msra.mxu0 0
    %1176 = vmatprep.subr.bf16.mxu0 0
    %1177 = vmatpush1.bf16.msra.mxu0 %v1157
    %1178 = vmatprep.subr.bf16.mxu0 0
    %1179 = vmatpush1.bf16.msra.mxu0 %v1156
    %1180 = vmatprep.subr.bf16.mxu0 0
    %1181 = vmatpush1.bf16.msra.mxu0 %v1155
    %1182 = vmatprep.subr.bf16.mxu0 0
    %1183 = vmatpush1.bf16.msra.mxu0 %v1154
    %1184 = vmatprep.subr.bf16.mxu0 0
    %1185 = vmatpush2.bf16.msra.mxu0 0
    %1186 = vmatprep.subr.bf16.mxu0 0
    %1187 = vmatpush2.bf16.msra.mxu0 0
    %1188 = vmatprep.subr.bf16.mxu0 0
    %1189 = vmatpush2.bf16.msra.mxu0 0
    %1190 = vmatprep.subr.bf16.mxu0 0
    %1191 = vmatpush2.bf16.msra.mxu0 0
    %1192 = vmatprep.subr.bf16.mxu0 0
    %1193 = vmatpush2.bf16.msra.mxu0 0
    %1194 = vmatprep.subr.bf16.mxu0 0
    %1195 = vmatpush2.bf16.msra.mxu0 0
    %1196 = vmatprep.subr.bf16.mxu0 0
    %1197 = vmatpush2.bf16.msra.mxu0 0
    %1198 = vmatprep.subr.bf16.mxu0 0
    %1199 = vmatpush2.bf16.msra.mxu0 0
    %1200 = vmatprep.mubr.bf16.mxu0 0
    %1201 = vmatmul.mubr.bf16.gmra.mxu0 %v1163
    %v1202 = vpop.f32.mrf.mxu0
    %v1203 = vadd.f32 0.0, %v1202
    %v1204 = vpop.f32.mrf.mxu0
    %v1205 = vpop.f32.mrf.mxu0
    %v1206 = vadd.f32 0.0, %v1205
    %v1207 = vpop.f32.mrf.mxu0
    %1208 = vmatprep.mubr.bf16.mxu0 0
    %1209 = vmatmul.mubr.bf16.gmra.mxu0 %v1166
    %v1210 = vpop.f32.mrf.mxu0
    %v1211 = vadd.f32 0.0, %v1210
    %v1212 = vpop.f32.mrf.mxu0
    %v1213 = vpop.f32.mrf.mxu0
    %v1214 = vadd.f32 0.0, %v1213
    %v1215 = vpop.f32.mrf.mxu0
    %1216 = vdwg.mxu0
    %v1225 = vunpack.c.l.b16 %v1097
    %v1226 = vunpack.c.l.b16 %v1098
    %v1227 = vunpack.c.l.b16 %v1099
    %v1228 = vunpack.c.l.b16 %v1100
    %v1229 = vunpack.c.l.b16 %v1101
    %v1230 = vunpack.c.l.b16 %v1102
    %v1231 = vunpack.c.l.b16 %v1103
    %v1232 = vunpack.c.l.b16 %v1104
    %v1233 = vpack.c.b16 %v1226, %v1225
    %v1234 = vpack.c.b16 %v1228, %v1227
    %v1235 = vpack.c.b16 %v1230, %v1229
    %v1236 = vpack.c.b16 %v1232, %v1231
    %v1241 = vsel %vm1003, %v1093, 0
    %v1243 = vsel %vm1003, %v1095, 0
    %1245 = vmatprep.subr.bf16.mxu0 0
    %1246 = vmatpush1.bf16.msra.mxu0 0
    %1247 = vmatprep.subr.bf16.mxu0 0
    %1248 = vmatpush1.bf16.msra.mxu0 0
    %1249 = vmatprep.subr.bf16.mxu0 0
    %1250 = vmatpush1.bf16.msra.mxu0 0
    %1251 = vmatprep.subr.bf16.mxu0 0
    %1252 = vmatpush1.bf16.msra.mxu0 0
    %1253 = vmatprep.subr.bf16.mxu0 0
    %1254 = vmatpush1.bf16.msra.mxu0 %v1236
    %1255 = vmatprep.subr.bf16.mxu0 0
    %1256 = vmatpush1.bf16.msra.mxu0 %v1235
    %1257 = vmatprep.subr.bf16.mxu0 0
    %1258 = vmatpush1.bf16.msra.mxu0 %v1234
    %1259 = vmatprep.subr.bf16.mxu0 0
    %1260 = vmatpush1.bf16.msra.mxu0 %v1233
    %1261 = vmatprep.subr.bf16.mxu0 0
    %1262 = vmatpush2.bf16.msra.mxu0 0
    %1263 = vmatprep.subr.bf16.mxu0 0
    %1264 = vmatpush2.bf16.msra.mxu0 0
    %1265 = vmatprep.subr.bf16.mxu0 0
    %1266 = vmatpush2.bf16.msra.mxu0 0
    %1267 = vmatprep.subr.bf16.mxu0 0
    %1268 = vmatpush2.bf16.msra.mxu0 0
    %1269 = vmatprep.subr.bf16.mxu0 0
    %1270 = vmatpush2.bf16.msra.mxu0 0
    %1271 = vmatprep.subr.bf16.mxu0 0
    %1272 = vmatpush2.bf16.msra.mxu0 0
    %1273 = vmatprep.subr.bf16.mxu0 0
    %1274 = vmatpush2.bf16.msra.mxu0 0
    %1275 = vmatprep.subr.bf16.mxu0 0
    %1276 = vmatpush2.bf16.msra.mxu0 0
    %1277 = vmatprep.mubr.bf16.mxu0 0
    %1278 = vmatmul.mubr.bf16.gmra.mxu0 %v1241
    %v1279 = vpop.f32.mrf.mxu0
    %v1280 = vadd.f32 %v1203, %v1279
    %v1281 = vpop.f32.mrf.mxu0
    %v1282 = vpop.f32.mrf.mxu0
    %v1283 = vadd.f32 %v1206, %v1282
    %v1284 = vpop.f32.mrf.mxu0
    %1285 = vmatprep.mubr.bf16.mxu0 0
    %1286 = vmatmul.mubr.bf16.gmra.mxu0 %v1243
    %v1287 = vpop.f32.mrf.mxu0
    %v1288 = vadd.f32 %v1211, %v1287
    %v1289 = vpop.f32.mrf.mxu0
    %v1290 = vpop.f32.mrf.mxu0
    %v1291 = vadd.f32 %v1214, %v1290
    %v1292 = vpop.f32.mrf.mxu0
    %1293 = vdwg.mxu0
    %v1298 = vrot.slane %v1093, 1
    %v1299 = vrot.slane %v1094, 1
    %v1300 = vsel %vm256, %v1298, %v1299
    %v1301 = vrot.slane %v1095, 1
    %v1302 = vrot.slane %v1096, 1
    %v1303 = vsel %vm256, %v1301, %v1302
    %s1304 = scalar_lea.vmem %s7, 64
    %v1305 = vld [vmem:[%s1304] sm:$0xf]
    %v1306 = vld [vmem:[%s1304 + $0x4] sm:$0xf]
    %v1307 = vld [vmem:[%s1304 + $0x8] sm:$0xf]
    %v1308 = vld [vmem:[%s1304 + $0xc] sm:$0xf]
    %v1309 = vld [vmem:[%s1304 + $0x10] sm:$0xf]
    %v1310 = vld [vmem:[%s1304 + $0x14] sm:$0xf]
    %v1311 = vld [vmem:[%s1304 + $0x18] sm:$0xf]
    %v1312 = vld [vmem:[%s1304 + $0x1c] sm:$0xf]
    %v1321 = vunpack.c.l.b16 %v1305
    %v1322 = vunpack.c.l.b16 %v1306
    %v1323 = vunpack.c.l.b16 %v1307
    %v1324 = vunpack.c.l.b16 %v1308
    %v1325 = vunpack.c.l.b16 %v1309
    %v1326 = vunpack.c.l.b16 %v1310
    %v1327 = vunpack.c.l.b16 %v1311
    %v1328 = vunpack.c.l.b16 %v1312
    %v1329 = vpack.c.b16 %v1322, %v1321
    %v1330 = vpack.c.b16 %v1324, %v1323
    %v1331 = vpack.c.b16 %v1326, %v1325
    %v1332 = vpack.c.b16 %v1328, %v1327
    %v1338 = vsel %vm1003, %v1300, 0
    %v1341 = vsel %vm1003, %v1303, 0
    %1343 = vmatprep.subr.bf16.mxu0 0
    %1344 = vmatpush1.bf16.msra.mxu0 0
    %1345 = vmatprep.subr.bf16.mxu0 0
    %1346 = vmatpush1.bf16.msra.mxu0 0
    %1347 = vmatprep.subr.bf16.mxu0 0
    %1348 = vmatpush1.bf16.msra.mxu0 0
    %1349 = vmatprep.subr.bf16.mxu0 0
    %1350 = vmatpush1.bf16.msra.mxu0 0
    %1351 = vmatprep.subr.bf16.mxu0 0
    %1352 = vmatpush1.bf16.msra.mxu0 %v1332
    %1353 = vmatprep.subr.bf16.mxu0 0
    %1354 = vmatpush1.bf16.msra.mxu0 %v1331
    %1355 = vmatprep.subr.bf16.mxu0 0
    %1356 = vmatpush1.bf16.msra.mxu0 %v1330
    %1357 = vmatprep.subr.bf16.mxu0 0
    %1358 = vmatpush1.bf16.msra.mxu0 %v1329
    %1359 = vmatprep.subr.bf16.mxu0 0
    %1360 = vmatpush2.bf16.msra.mxu0 0
    %1361 = vmatprep.subr.bf16.mxu0 0
    %1362 = vmatpush2.bf16.msra.mxu0 0
    %1363 = vmatprep.subr.bf16.mxu0 0
    %1364 = vmatpush2.bf16.msra.mxu0 0
    %1365 = vmatprep.subr.bf16.mxu0 0
    %1366 = vmatpush2.bf16.msra.mxu0 0
    %1367 = vmatprep.subr.bf16.mxu0 0
    %1368 = vmatpush2.bf16.msra.mxu0 0
    %1369 = vmatprep.subr.bf16.mxu0 0
    %1370 = vmatpush2.bf16.msra.mxu0 0
    %1371 = vmatprep.subr.bf16.mxu0 0
    %1372 = vmatpush2.bf16.msra.mxu0 0
    %1373 = vmatprep.subr.bf16.mxu0 0
    %1374 = vmatpush2.bf16.msra.mxu0 0
    %1375 = vmatprep.mubr.bf16.mxu0 0
    %1376 = vmatmul.mubr.bf16.gmra.mxu0 %v1338
    %v1377 = vpop.f32.mrf.mxu0
    %v1378 = vadd.f32 0.0, %v1377
    %v1379 = vpop.f32.mrf.mxu0
    %v1380 = vpop.f32.mrf.mxu0
    %v1381 = vadd.f32 0.0, %v1380
    %v1382 = vpop.f32.mrf.mxu0
    %1383 = vmatprep.mubr.bf16.mxu0 0
    %1384 = vmatmul.mubr.bf16.gmra.mxu0 %v1341
    %v1385 = vpop.f32.mrf.mxu0
    %v1386 = vadd.f32 0.0, %v1385
    %v1387 = vpop.f32.mrf.mxu0
    %v1388 = vpop.f32.mrf.mxu0
    %v1389 = vadd.f32 0.0, %v1388
    %v1390 = vpop.f32.mrf.mxu0
    %1391 = vdwg.mxu0
    %v1392 = vadd.f32 %v1280, %v1378
    %v1393 = vadd.f32 %v1283, %v1381
    %v1394 = vadd.f32 %v1288, %v1386
    %v1395 = vadd.f32 %v1291, %v1389
    %v1396 = vrot.slane %v1106, 1
    %v1397 = vrot.slane %v1108, 2
    %v1398 = vor.u32 %v1396, %v1397
    %v1399 = vshrl.u32 %v1094, 16
    %v1401 = vrot.slane %v1399, 1
    %v1402 = vrot.slane %v1113, 2
    %v1403 = vor.u32 %v1401, %v1402
    %v1404 = vsel %vm327, %v1398, %v1403
    %v1405 = vrot.slane %v1118, 1
    %v1406 = vrot.slane %v1120, 2
    %v1407 = vor.u32 %v1405, %v1406
    %v1408 = vshrl.u32 %v1096, 16
    %v1410 = vrot.slane %v1408, 1
    %v1411 = vrot.slane %v1125, 2
    %v1412 = vor.u32 %v1410, %v1411
    %v1413 = vsel %vm327, %v1407, %v1412
    %s1414 = scalar_lea.vmem %s7, 96
    %v1415 = vld [vmem:[%s1414] sm:$0xf]
    %v1416 = vld [vmem:[%s1414 + $0x4] sm:$0xf]
    %v1417 = vld [vmem:[%s1414 + $0x8] sm:$0xf]
    %v1418 = vld [vmem:[%s1414 + $0xc] sm:$0xf]
    %v1419 = vld [vmem:[%s1414 + $0x10] sm:$0xf]
    %v1420 = vld [vmem:[%s1414 + $0x14] sm:$0xf]
    %v1421 = vld [vmem:[%s1414 + $0x18] sm:$0xf]
    %v1422 = vld [vmem:[%s1414 + $0x1c] sm:$0xf]
    %v1431 = vunpack.c.l.b16 %v1415
    %v1432 = vunpack.c.l.b16 %v1416
    %v1433 = vunpack.c.l.b16 %v1417
    %v1434 = vunpack.c.l.b16 %v1418
    %v1435 = vunpack.c.l.b16 %v1419
    %v1436 = vunpack.c.l.b16 %v1420
    %v1437 = vunpack.c.l.b16 %v1421
    %v1438 = vunpack.c.l.b16 %v1422
    %v1439 = vpack.c.b16 %v1432, %v1431
    %v1440 = vpack.c.b16 %v1434, %v1433
    %v1441 = vpack.c.b16 %v1436, %v1435
    %v1442 = vpack.c.b16 %v1438, %v1437
    %v1448 = vsel %vm1003, %v1404, 0
    %v1451 = vsel %vm1003, %v1413, 0
    %1453 = vmatprep.subr.bf16.mxu0 0
    %1454 = vmatpush1.bf16.msra.mxu0 0
    %1455 = vmatprep.subr.bf16.mxu0 0
    %1456 = vmatpush1.bf16.msra.mxu0 0
    %1457 = vmatprep.subr.bf16.mxu0 0
    %1458 = vmatpush1.bf16.msra.mxu0 0
    %1459 = vmatprep.subr.bf16.mxu0 0
    %1460 = vmatpush1.bf16.msra.mxu0 0
    %1461 = vmatprep.subr.bf16.mxu0 0
    %1462 = vmatpush1.bf16.msra.mxu0 %v1442
    %1463 = vmatprep.subr.bf16.mxu0 0
    %1464 = vmatpush1.bf16.msra.mxu0 %v1441
    %1465 = vmatprep.subr.bf16.mxu0 0
    %1466 = vmatpush1.bf16.msra.mxu0 %v1440
    %1467 = vmatprep.subr.bf16.mxu0 0
    %1468 = vmatpush1.bf16.msra.mxu0 %v1439
    %1469 = vmatprep.subr.bf16.mxu0 0
    %1470 = vmatpush2.bf16.msra.mxu0 0
    %1471 = vmatprep.subr.bf16.mxu0 0
    %1472 = vmatpush2.bf16.msra.mxu0 0
    %1473 = vmatprep.subr.bf16.mxu0 0
    %1474 = vmatpush2.bf16.msra.mxu0 0
    %1475 = vmatprep.subr.bf16.mxu0 0
    %1476 = vmatpush2.bf16.msra.mxu0 0
    %1477 = vmatprep.subr.bf16.mxu0 0
    %1478 = vmatpush2.bf16.msra.mxu0 0
    %1479 = vmatprep.subr.bf16.mxu0 0
    %1480 = vmatpush2.bf16.msra.mxu0 0
    %1481 = vmatprep.subr.bf16.mxu0 0
    %1482 = vmatpush2.bf16.msra.mxu0 0
    %1483 = vmatprep.subr.bf16.mxu0 0
    %1484 = vmatpush2.bf16.msra.mxu0 0
    %1485 = vmatprep.mubr.bf16.mxu0 0
    %1486 = vmatmul.mubr.bf16.gmra.mxu0 %v1448
    %v1487 = vpop.f32.mrf.mxu0
    %v1488 = vadd.f32 0.0, %v1487
    %v1489 = vpop.f32.mrf.mxu0
    %v1490 = vpop.f32.mrf.mxu0
    %v1491 = vadd.f32 0.0, %v1490
    %v1492 = vpop.f32.mrf.mxu0
    %1493 = vmatprep.mubr.bf16.mxu0 0
    %1494 = vmatmul.mubr.bf16.gmra.mxu0 %v1451
    %v1495 = vpop.f32.mrf.mxu0
    %v1496 = vadd.f32 0.0, %v1495
    %v1497 = vpop.f32.mrf.mxu0
    %v1498 = vpop.f32.mrf.mxu0
    %v1499 = vadd.f32 0.0, %v1498
    %v1500 = vpop.f32.mrf.mxu0
    %1501 = vdwg.mxu0
    %v1502 = vadd.f32 %v1392, %v1488
    %v1503 = vadd.f32 %v1393, %v1491
    %v1504 = vadd.f32 %v1394, %v1496
    %v1505 = vadd.f32 %v1395, %v1499
    %v1506 = vrot.slane %v1093, 2
    %v1507 = vrot.slane %v1094, 2
    %v1508 = vsel %vm410, %v1506, %v1507
    %v1509 = vrot.slane %v1095, 2
    %v1510 = vrot.slane %v1096, 2
    %v1511 = vsel %vm410, %v1509, %v1510
    %s1512 = scalar_lea.vmem %s7, 128
    %v1513 = vld [vmem:[%s1512] sm:$0xf]
    %v1514 = vld [vmem:[%s1512 + $0x4] sm:$0xf]
    %v1515 = vld [vmem:[%s1512 + $0x8] sm:$0xf]
    %v1516 = vld [vmem:[%s1512 + $0xc] sm:$0xf]
    %v1517 = vld [vmem:[%s1512 + $0x10] sm:$0xf]
    %v1518 = vld [vmem:[%s1512 + $0x14] sm:$0xf]
    %v1519 = vld [vmem:[%s1512 + $0x18] sm:$0xf]
    %v1520 = vld [vmem:[%s1512 + $0x1c] sm:$0xf]
    %v1529 = vunpack.c.l.b16 %v1513
    %v1530 = vunpack.c.l.b16 %v1514
    %v1531 = vunpack.c.l.b16 %v1515
    %v1532 = vunpack.c.l.b16 %v1516
    %v1533 = vunpack.c.l.b16 %v1517
    %v1534 = vunpack.c.l.b16 %v1518
    %v1535 = vunpack.c.l.b16 %v1519
    %v1536 = vunpack.c.l.b16 %v1520
    %v1537 = vpack.c.b16 %v1530, %v1529
    %v1538 = vpack.c.b16 %v1532, %v1531
    %v1539 = vpack.c.b16 %v1534, %v1533
    %v1540 = vpack.c.b16 %v1536, %v1535
    %v1546 = vsel %vm1003, %v1508, 0
    %v1549 = vsel %vm1003, %v1511, 0
    %1551 = vmatprep.subr.bf16.mxu0 0
    %1552 = vmatpush1.bf16.msra.mxu0 0
    %1553 = vmatprep.subr.bf16.mxu0 0
    %1554 = vmatpush1.bf16.msra.mxu0 0
    %1555 = vmatprep.subr.bf16.mxu0 0
    %1556 = vmatpush1.bf16.msra.mxu0 0
    %1557 = vmatprep.subr.bf16.mxu0 0
    %1558 = vmatpush1.bf16.msra.mxu0 0
    %1559 = vmatprep.subr.bf16.mxu0 0
    %1560 = vmatpush1.bf16.msra.mxu0 %v1540
    %1561 = vmatprep.subr.bf16.mxu0 0
    %1562 = vmatpush1.bf16.msra.mxu0 %v1539
    %1563 = vmatprep.subr.bf16.mxu0 0
    %1564 = vmatpush1.bf16.msra.mxu0 %v1538
    %1565 = vmatprep.subr.bf16.mxu0 0
    %1566 = vmatpush1.bf16.msra.mxu0 %v1537
    %1567 = vmatprep.subr.bf16.mxu0 0
    %1568 = vmatpush2.bf16.msra.mxu0 0
    %1569 = vmatprep.subr.bf16.mxu0 0
    %1570 = vmatpush2.bf16.msra.mxu0 0
    %1571 = vmatprep.subr.bf16.mxu0 0
    %1572 = vmatpush2.bf16.msra.mxu0 0
    %1573 = vmatprep.subr.bf16.mxu0 0
    %1574 = vmatpush2.bf16.msra.mxu0 0
    %1575 = vmatprep.subr.bf16.mxu0 0
    %1576 = vmatpush2.bf16.msra.mxu0 0
    %1577 = vmatprep.subr.bf16.mxu0 0
    %1578 = vmatpush2.bf16.msra.mxu0 0
    %1579 = vmatprep.subr.bf16.mxu0 0
    %1580 = vmatpush2.bf16.msra.mxu0 0
    %1581 = vmatprep.subr.bf16.mxu0 0
    %1582 = vmatpush2.bf16.msra.mxu0 0
    %1583 = vmatprep.mubr.bf16.mxu0 0
    %1584 = vmatmul.mubr.bf16.gmra.mxu0 %v1546
    %v1585 = vpop.f32.mrf.mxu0
    %v1586 = vadd.f32 0.0, %v1585
    %v1587 = vpop.f32.mrf.mxu0
    %v1588 = vpop.f32.mrf.mxu0
    %v1589 = vadd.f32 0.0, %v1588
    %v1590 = vpop.f32.mrf.mxu0
    %1591 = vmatprep.mubr.bf16.mxu0 0
    %1592 = vmatmul.mubr.bf16.gmra.mxu0 %v1549
    %v1593 = vpop.f32.mrf.mxu0
    %v1594 = vadd.f32 0.0, %v1593
    %v1595 = vpop.f32.mrf.mxu0
    %v1596 = vpop.f32.mrf.mxu0
    %v1597 = vadd.f32 0.0, %v1596
    %v1598 = vpop.f32.mrf.mxu0
    %1599 = vdwg.mxu0
    %v1600 = vadd.f32 %v1502, %v1586
    %v1601 = vadd.f32 %v1503, %v1589
    %v1602 = vadd.f32 %v1504, %v1594
    %v1603 = vadd.f32 %v1505, %v1597
    %v1604 = vadd.f32 %v1600, %v1601
    %v1605 = vadd.f32 %v1604, %v1602
    %v1606 = vadd.f32 %v1605, %v1603
    %v1607 = vrot.slane %v1606, 4
    %v1608 = vadd.f32 %v1606, %v1607
    %v1609 = vrot.slane %v1608, 2
    %v1610 = vadd.f32 %v1608, %v1609
    %v1611 = vrot.slane %v1610, 1
    %v1612 = vadd.f32 %v1610, %v1611
    %v1613 = vmul.f32 %v1612, %v495
    %v1614 = vmul.f32 %v1600, %v1600
    %v1615 = vmul.f32 %v1601, %v1601
    %v1616 = vmul.f32 %v1602, %v1602
    %v1617 = vmul.f32 %v1603, %v1603
    %v1618 = vadd.f32 %v1614, %v1615
    %v1619 = vadd.f32 %v1618, %v1616
    %v1620 = vadd.f32 %v1619, %v1617
    %v1621 = vrot.slane %v1620, 4
    %v1622 = vadd.f32 %v1620, %v1621
    %v1623 = vrot.slane %v1622, 2
    %v1624 = vadd.f32 %v1622, %v1623
    %v1625 = vrot.slane %v1624, 1
    %v1626 = vadd.f32 %v1624, %v1625
    %v1627 = vmul.f32 %v1626, %v495
    %v1628 = vmul.f32 %v1613, %v1613
    %v1629 = vsub.f32 %v1627, %v1628
    %v1630 = vadd.f32 %v1629, 1e-05
    %v1631 = vrsqrt.pop %v1630
    %v1632 = vmul.f32 %v1071, %v1631
    %v1633 = vmul.f32 %v1613, %v1632
    %v1634 = vsub.f32 %v1072, %v1633
    %v1636 = vlaneseq
    %v1637 = vshrl.u32 %v1636, 7
    %v1638 = vsub.s32 0, %v1637
    %v1639 = vrot.slane %v1632, %v1638
    %v1641 = vmul.f32 %v1600, %v1639
    %v1642 = vmul.f32 %v1601, %v1639
    %v1643 = vmul.f32 %v1602, %v1639
    %v1644 = vmul.f32 %v1603, %v1639
    %v1646 = vlaneseq
    %v1647 = vshrl.u32 %v1646, 7
    %v1648 = vsub.s32 0, %v1647
    %v1649 = vrot.slane %v1634, %v1648
    %v1651 = vadd.f32 %v1641, %v1649
    %v1652 = vadd.f32 %v1642, %v1649
    %v1653 = vadd.f32 %v1643, %v1649
    %v1654 = vadd.f32 %v1644, %v1649
    %v1655 = vmul.f32 %v1651, 0.01
    %v1656 = vmul.f32 %v1652, 0.01
    %v1657 = vmul.f32 %v1653, 0.01
    %v1658 = vmul.f32 %v1654, 0.01
    %v1659 = vmax.f32 %v1651, %v1655
    %v1660 = vmax.f32 %v1652, %v1656
    %v1661 = vmax.f32 %v1653, %v1657
    %v1662 = vmax.f32 %v1654, %v1658
    %v1663 = vld [vmem:[%s11] sm:$0x3]
    %v1664 = vld [vmem:[%s12] sm:$0x3]
    %v1669 = vrot.slane %v1659, 6
    %v1670 = vrot.slane %v1660, 6
    %v1671 = vsel %vm88, %v1669, %v1670
    %v1672 = vrot.slane %v1661, 6
    %v1673 = vrot.slane %v1662, 6
    %v1674 = vsel %vm88, %v1672, %v1673
    %v1681 = vsel %vm88, 0.0, %v1669
    %v1682 = vsel %vm88, 0.0, %v1672
    %v1683 = vsel %vm88, %v1670, 0.0
    %v1684 = vsel %vm88, %v1673, 0.0
    %v1685 = vpack.c.bf16 %v1671, %v1681
    %v1686 = vpack.c.bf16 %v1683, %v1683
    %v1687 = vpack.c.bf16 %v1674, %v1682
    %v1688 = vpack.c.bf16 %v1684, %v1684
    %v1689 = vld [vmem:[%s10] sm:$0xff]
    %v1690 = vld [vmem:[%s10 + $0x8] sm:$0xff]
    %v1691 = vld [vmem:[%s10 + $0x10] sm:$0xff]
    %v1692 = vld [vmem:[%s10 + $0x18] sm:$0xff]
    %v1693 = vld [vmem:[%s10 + $0x20] sm:$0xff]
    %v1694 = vld [vmem:[%s10 + $0x28] sm:$0xff]
    %v1695 = vld [vmem:[%s10 + $0x30] sm:$0xff]
    %v1696 = vld [vmem:[%s10 + $0x38] sm:$0xff]
    %v1697 = vld [vmem:[%s10 + $0x40] sm:$0xff]
    %v1698 = vld [vmem:[%s10 + $0x48] sm:$0xff]
    %v1699 = vld [vmem:[%s10 + $0x50] sm:$0xff]
    %v1700 = vld [vmem:[%s10 + $0x58] sm:$0xff]
    %v1701 = vld [vmem:[%s10 + $0x60] sm:$0xff]
    %v1702 = vld [vmem:[%s10 + $0x68] sm:$0xff]
    %v1703 = vld [vmem:[%s10 + $0x70] sm:$0xff]
    %v1704 = vld [vmem:[%s10 + $0x78] sm:$0xff]
    %v1706 = vshrl.u32 %v1685, 16
    %v1708 = vshll.u32 %v1685, 16
    %v1710 = vrot.slane %v1708, 1
    %v1711 = vor.u32 %v1706, %v1710
    %v1713 = vshll.u32 %v1686, 16
    %v1715 = vrot.slane %v1713, 1
    %v1716 = vsel %vm110, %v1711, %v1715
    %v1718 = vshrl.u32 %v1687, 16
    %v1720 = vshll.u32 %v1687, 16
    %v1722 = vrot.slane %v1720, 1
    %v1723 = vor.u32 %v1718, %v1722
    %v1725 = vshll.u32 %v1688, 16
    %v1727 = vrot.slane %v1725, 1
    %v1728 = vsel %vm110, %v1723, %v1727
    %s1731 = scalar_lea.vmem %s10, 128
    %v1732 = vld [vmem:[%s1731] sm:$0xff]
    %v1733 = vld [vmem:[%s1731 + $0x8] sm:$0xff]
    %v1734 = vld [vmem:[%s1731 + $0x10] sm:$0xff]
    %v1735 = vld [vmem:[%s1731 + $0x18] sm:$0xff]
    %v1736 = vld [vmem:[%s1731 + $0x20] sm:$0xff]
    %v1737 = vld [vmem:[%s1731 + $0x28] sm:$0xff]
    %v1738 = vld [vmem:[%s1731 + $0x30] sm:$0xff]
    %v1739 = vld [vmem:[%s1731 + $0x38] sm:$0xff]
    %v1740 = vld [vmem:[%s1731 + $0x40] sm:$0xff]
    %v1741 = vld [vmem:[%s1731 + $0x48] sm:$0xff]
    %v1742 = vld [vmem:[%s1731 + $0x50] sm:$0xff]
    %v1743 = vld [vmem:[%s1731 + $0x58] sm:$0xff]
    %v1744 = vld [vmem:[%s1731 + $0x60] sm:$0xff]
    %v1745 = vld [vmem:[%s1731 + $0x68] sm:$0xff]
    %v1746 = vld [vmem:[%s1731 + $0x70] sm:$0xff]
    %v1747 = vld [vmem:[%s1731 + $0x78] sm:$0xff]
    %v1764 = vunpack.c.l.b16 %v1732
    %v1765 = vunpack.c.h.b16 %v1732
    %v1766 = vunpack.c.l.b16 %v1733
    %v1767 = vunpack.c.h.b16 %v1733
    %v1768 = vunpack.c.l.b16 %v1734
    %v1769 = vunpack.c.h.b16 %v1734
    %v1770 = vunpack.c.l.b16 %v1735
    %v1771 = vunpack.c.h.b16 %v1735
    %v1772 = vunpack.c.l.b16 %v1736
    %v1773 = vunpack.c.h.b16 %v1736
    %v1774 = vunpack.c.l.b16 %v1737
    %v1775 = vunpack.c.h.b16 %v1737
    %v1776 = vunpack.c.l.b16 %v1738
    %v1777 = vunpack.c.h.b16 %v1738
    %v1778 = vunpack.c.l.b16 %v1739
    %v1779 = vunpack.c.h.b16 %v1739
    %v1780 = vunpack.c.l.b16 %v1740
    %v1781 = vunpack.c.h.b16 %v1740
    %v1782 = vunpack.c.l.b16 %v1741
    %v1783 = vunpack.c.h.b16 %v1741
    %v1784 = vunpack.c.l.b16 %v1742
    %v1785 = vunpack.c.h.b16 %v1742
    %v1786 = vunpack.c.l.b16 %v1743
    %v1787 = vunpack.c.h.b16 %v1743
    %v1788 = vunpack.c.l.b16 %v1744
    %v1789 = vunpack.c.h.b16 %v1744
    %v1790 = vunpack.c.l.b16 %v1745
    %v1791 = vunpack.c.h.b16 %v1745
    %v1792 = vunpack.c.l.b16 %v1746
    %v1793 = vunpack.c.h.b16 %v1746
    %v1794 = vunpack.c.l.b16 %v1747
    %v1795 = vunpack.c.h.b16 %v1747
    %v1796 = vpack.c.b16 %v1766, %v1764
    %v1797 = vpack.c.b16 %v1767, %v1765
    %v1798 = vpack.c.b16 %v1770, %v1768
    %v1799 = vpack.c.b16 %v1771, %v1769
    %v1800 = vpack.c.b16 %v1774, %v1772
    %v1801 = vpack.c.b16 %v1775, %v1773
    %v1802 = vpack.c.b16 %v1778, %v1776
    %v1803 = vpack.c.b16 %v1779, %v1777
    %v1804 = vpack.c.b16 %v1782, %v1780
    %v1805 = vpack.c.b16 %v1783, %v1781
    %v1806 = vpack.c.b16 %v1786, %v1784
    %v1807 = vpack.c.b16 %v1787, %v1785
    %v1808 = vpack.c.b16 %v1790, %v1788
    %v1809 = vpack.c.b16 %v1791, %v1789
    %v1810 = vpack.c.b16 %v1794, %v1792
    %v1811 = vpack.c.b16 %v1795, %v1793
    %1828 = vmatprep.subr.bf16.mxu0 %v1811
    %1829 = vmatpush1.bf16.msra.mxu0 %v1810
    %1830 = vmatprep.subr.bf16.mxu0 %v1809
    %1831 = vmatpush1.bf16.msra.mxu0 %v1808
    %1832 = vmatprep.subr.bf16.mxu0 %v1807
    %1833 = vmatpush1.bf16.msra.mxu0 %v1806
    %1834 = vmatprep.subr.bf16.mxu0 %v1805
    %1835 = vmatpush1.bf16.msra.mxu0 %v1804
    %1836 = vmatprep.subr.bf16.mxu0 %v1803
    %1837 = vmatpush1.bf16.msra.mxu0 %v1802
    %1838 = vmatprep.subr.bf16.mxu0 %v1801
    %1839 = vmatpush1.bf16.msra.mxu0 %v1800
    %1840 = vmatprep.subr.bf16.mxu0 %v1799
    %1841 = vmatpush1.bf16.msra.mxu0 %v1798
    %1842 = vmatprep.subr.bf16.mxu0 %v1797
    %1843 = vmatpush1.bf16.msra.mxu0 %v1796
    %1844 = vmatprep.subr.bf16.mxu0 0
    %1845 = vmatpush2.bf16.msra.mxu0 0
    %1846 = vmatprep.subr.bf16.mxu0 0
    %1847 = vmatpush2.bf16.msra.mxu0 0
    %1848 = vmatprep.subr.bf16.mxu0 0
    %1849 = vmatpush2.bf16.msra.mxu0 0
    %1850 = vmatprep.subr.bf16.mxu0 0
    %1851 = vmatpush2.bf16.msra.mxu0 0
    %1852 = vmatprep.subr.bf16.mxu0 0
    %1853 = vmatpush2.bf16.msra.mxu0 0
    %1854 = vmatprep.subr.bf16.mxu0 0
    %1855 = vmatpush2.bf16.msra.mxu0 0
    %1856 = vmatprep.subr.bf16.mxu0 0
    %1857 = vmatpush2.bf16.msra.mxu0 0
    %1858 = vmatprep.subr.bf16.mxu0 0
    %1859 = vmatpush2.bf16.msra.mxu0 0
    %1860 = vmatprep.mubr.bf16.mxu0 0
    %1861 = vmatmul.mubr.bf16.gmra.mxu0 %v1716
    %v1862 = vpop.f32.mrf.mxu0
    %v1863 = vadd.f32 0.0, %v1862
    %v1864 = vpop.f32.mrf.mxu0
    %v1865 = vadd.f32 0.0, %v1864
    %v1866 = vpop.f32.mrf.mxu0
    %v1867 = vadd.f32 0.0, %v1866
    %v1868 = vpop.f32.mrf.mxu0
    %v1869 = vadd.f32 0.0, %v1868
    %1870 = vmatprep.mubr.bf16.mxu0 0
    %1871 = vmatmul.mubr.bf16.gmra.mxu0 %v1728
    %v1872 = vpop.f32.mrf.mxu0
    %v1873 = vadd.f32 0.0, %v1872
    %v1874 = vpop.f32.mrf.mxu0
    %v1875 = vadd.f32 0.0, %v1874
    %v1876 = vpop.f32.mrf.mxu0
    %v1877 = vadd.f32 0.0, %v1876
    %v1878 = vpop.f32.mrf.mxu0
    %v1879 = vadd.f32 0.0, %v1878
    %1880 = vdwg.mxu0
    %v1897 = vunpack.c.l.b16 %v1689
    %v1898 = vunpack.c.h.b16 %v1689
    %v1899 = vunpack.c.l.b16 %v1690
    %v1900 = vunpack.c.h.b16 %v1690
    %v1901 = vunpack.c.l.b16 %v1691
    %v1902 = vunpack.c.h.b16 %v1691
    %v1903 = vunpack.c.l.b16 %v1692
    %v1904 = vunpack.c.h.b16 %v1692
    %v1905 = vunpack.c.l.b16 %v1693
    %v1906 = vunpack.c.h.b16 %v1693
    %v1907 = vunpack.c.l.b16 %v1694
    %v1908 = vunpack.c.h.b16 %v1694
    %v1909 = vunpack.c.l.b16 %v1695
    %v1910 = vunpack.c.h.b16 %v1695
    %v1911 = vunpack.c.l.b16 %v1696
    %v1912 = vunpack.c.h.b16 %v1696
    %v1913 = vunpack.c.l.b16 %v1697
    %v1914 = vunpack.c.h.b16 %v1697
    %v1915 = vunpack.c.l.b16 %v1698
    %v1916 = vunpack.c.h.b16 %v1698
    %v1917 = vunpack.c.l.b16 %v1699
    %v1918 = vunpack.c.h.b16 %v1699
    %v1919 = vunpack.c.l.b16 %v1700
    %v1920 = vunpack.c.h.b16 %v1700
    %v1921 = vunpack.c.l.b16 %v1701
    %v1922 = vunpack.c.h.b16 %v1701
    %v1923 = vunpack.c.l.b16 %v1702
    %v1924 = vunpack.c.h.b16 %v1702
    %v1925 = vunpack.c.l.b16 %v1703
    %v1926 = vunpack.c.h.b16 %v1703
    %v1927 = vunpack.c.l.b16 %v1704
    %v1928 = vunpack.c.h.b16 %v1704
    %v1929 = vpack.c.b16 %v1899, %v1897
    %v1930 = vpack.c.b16 %v1900, %v1898
    %v1931 = vpack.c.b16 %v1903, %v1901
    %v1932 = vpack.c.b16 %v1904, %v1902
    %v1933 = vpack.c.b16 %v1907, %v1905
    %v1934 = vpack.c.b16 %v1908, %v1906
    %v1935 = vpack.c.b16 %v1911, %v1909
    %v1936 = vpack.c.b16 %v1912, %v1910
    %v1937 = vpack.c.b16 %v1915, %v1913
    %v1938 = vpack.c.b16 %v1916, %v1914
    %v1939 = vpack.c.b16 %v1919, %v1917
    %v1940 = vpack.c.b16 %v1920, %v1918
    %v1941 = vpack.c.b16 %v1923, %v1921
    %v1942 = vpack.c.b16 %v1924, %v1922
    %v1943 = vpack.c.b16 %v1927, %v1925
    %v1944 = vpack.c.b16 %v1928, %v1926
    %1961 = vmatprep.subr.bf16.mxu0 %v1944
    %1962 = vmatpush1.bf16.msra.mxu0 %v1943
    %1963 = vmatprep.subr.bf16.mxu0 %v1942
    %1964 = vmatpush1.bf16.msra.mxu0 %v1941
    %1965 = vmatprep.subr.bf16.mxu0 %v1940
    %1966 = vmatpush1.bf16.msra.mxu0 %v1939
    %1967 = vmatprep.subr.bf16.mxu0 %v1938
    %1968 = vmatpush1.bf16.msra.mxu0 %v1937
    %1969 = vmatprep.subr.bf16.mxu0 %v1936
    %1970 = vmatpush1.bf16.msra.mxu0 %v1935
    %1971 = vmatprep.subr.bf16.mxu0 %v1934
    %1972 = vmatpush1.bf16.msra.mxu0 %v1933
    %1973 = vmatprep.subr.bf16.mxu0 %v1932
    %1974 = vmatpush1.bf16.msra.mxu0 %v1931
    %1975 = vmatprep.subr.bf16.mxu0 %v1930
    %1976 = vmatpush1.bf16.msra.mxu0 %v1929
    %1977 = vmatprep.subr.bf16.mxu0 0
    %1978 = vmatpush2.bf16.msra.mxu0 0
    %1979 = vmatprep.subr.bf16.mxu0 0
    %1980 = vmatpush2.bf16.msra.mxu0 0
    %1981 = vmatprep.subr.bf16.mxu0 0
    %1982 = vmatpush2.bf16.msra.mxu0 0
    %1983 = vmatprep.subr.bf16.mxu0 0
    %1984 = vmatpush2.bf16.msra.mxu0 0
    %1985 = vmatprep.subr.bf16.mxu0 0
    %1986 = vmatpush2.bf16.msra.mxu0 0
    %1987 = vmatprep.subr.bf16.mxu0 0
    %1988 = vmatpush2.bf16.msra.mxu0 0
    %1989 = vmatprep.subr.bf16.mxu0 0
    %1990 = vmatpush2.bf16.msra.mxu0 0
    %1991 = vmatprep.subr.bf16.mxu0 0
    %1992 = vmatpush2.bf16.msra.mxu0 0
    %1993 = vmatprep.mubr.bf16.mxu0 0
    %1994 = vmatmul.mubr.bf16.gmra.mxu0 %v1685
    %v1995 = vpop.f32.mrf.mxu0
    %v1996 = vadd.f32 %v1863, %v1995
    %v1997 = vpop.f32.mrf.mxu0
    %v1998 = vadd.f32 %v1865, %v1997
    %v1999 = vpop.f32.mrf.mxu0
    %v2000 = vadd.f32 %v1867, %v1999
    %v2001 = vpop.f32.mrf.mxu0
    %v2002 = vadd.f32 %v1869, %v2001
    %2003 = vmatprep.mubr.bf16.mxu0 0
    %2004 = vmatmul.mubr.bf16.gmra.mxu0 %v1687
    %v2005 = vpop.f32.mrf.mxu0
    %v2006 = vadd.f32 %v1873, %v2005
    %v2007 = vpop.f32.mrf.mxu0
    %v2008 = vadd.f32 %v1875, %v2007
    %v2009 = vpop.f32.mrf.mxu0
    %v2010 = vadd.f32 %v1877, %v2009
    %v2011 = vpop.f32.mrf.mxu0
    %v2012 = vadd.f32 %v1879, %v2011
    %2013 = vdwg.mxu0
    %v2018 = vrot.slane %v1685, 1
    %v2019 = vrot.slane %v1686, 1
    %v2020 = vsel %vm256, %v2018, %v2019
    %v2021 = vrot.slane %v1687, 1
    %v2022 = vrot.slane %v1688, 1
    %v2023 = vsel %vm256, %v2021, %v2022
    %s2026 = scalar_lea.vmem %s10, 256
    %v2027 = vld [vmem:[%s2026] sm:$0xff]
    %v2028 = vld [vmem:[%s2026 + $0x8] sm:$0xff]
    %v2029 = vld [vmem:[%s2026 + $0x10] sm:$0xff]
    %v2030 = vld [vmem:[%s2026 + $0x18] sm:$0xff]
    %v2031 = vld [vmem:[%s2026 + $0x20] sm:$0xff]
    %v2032 = vld [vmem:[%s2026 + $0x28] sm:$0xff]
    %v2033 = vld [vmem:[%s2026 + $0x30] sm:$0xff]
    %v2034 = vld [vmem:[%s2026 + $0x38] sm:$0xff]
    %v2035 = vld [vmem:[%s2026 + $0x40] sm:$0xff]
    %v2036 = vld [vmem:[%s2026 + $0x48] sm:$0xff]
    %v2037 = vld [vmem:[%s2026 + $0x50] sm:$0xff]
    %v2038 = vld [vmem:[%s2026 + $0x58] sm:$0xff]
    %v2039 = vld [vmem:[%s2026 + $0x60] sm:$0xff]
    %v2040 = vld [vmem:[%s2026 + $0x68] sm:$0xff]
    %v2041 = vld [vmem:[%s2026 + $0x70] sm:$0xff]
    %v2042 = vld [vmem:[%s2026 + $0x78] sm:$0xff]
    %v2059 = vunpack.c.l.b16 %v2027
    %v2060 = vunpack.c.h.b16 %v2027
    %v2061 = vunpack.c.l.b16 %v2028
    %v2062 = vunpack.c.h.b16 %v2028
    %v2063 = vunpack.c.l.b16 %v2029
    %v2064 = vunpack.c.h.b16 %v2029
    %v2065 = vunpack.c.l.b16 %v2030
    %v2066 = vunpack.c.h.b16 %v2030
    %v2067 = vunpack.c.l.b16 %v2031
    %v2068 = vunpack.c.h.b16 %v2031
    %v2069 = vunpack.c.l.b16 %v2032
    %v2070 = vunpack.c.h.b16 %v2032
    %v2071 = vunpack.c.l.b16 %v2033
    %v2072 = vunpack.c.h.b16 %v2033
    %v2073 = vunpack.c.l.b16 %v2034
    %v2074 = vunpack.c.h.b16 %v2034
    %v2075 = vunpack.c.l.b16 %v2035
    %v2076 = vunpack.c.h.b16 %v2035
    %v2077 = vunpack.c.l.b16 %v2036
    %v2078 = vunpack.c.h.b16 %v2036
    %v2079 = vunpack.c.l.b16 %v2037
    %v2080 = vunpack.c.h.b16 %v2037
    %v2081 = vunpack.c.l.b16 %v2038
    %v2082 = vunpack.c.h.b16 %v2038
    %v2083 = vunpack.c.l.b16 %v2039
    %v2084 = vunpack.c.h.b16 %v2039
    %v2085 = vunpack.c.l.b16 %v2040
    %v2086 = vunpack.c.h.b16 %v2040
    %v2087 = vunpack.c.l.b16 %v2041
    %v2088 = vunpack.c.h.b16 %v2041
    %v2089 = vunpack.c.l.b16 %v2042
    %v2090 = vunpack.c.h.b16 %v2042
    %v2091 = vpack.c.b16 %v2061, %v2059
    %v2092 = vpack.c.b16 %v2062, %v2060
    %v2093 = vpack.c.b16 %v2065, %v2063
    %v2094 = vpack.c.b16 %v2066, %v2064
    %v2095 = vpack.c.b16 %v2069, %v2067
    %v2096 = vpack.c.b16 %v2070, %v2068
    %v2097 = vpack.c.b16 %v2073, %v2071
    %v2098 = vpack.c.b16 %v2074, %v2072
    %v2099 = vpack.c.b16 %v2077, %v2075
    %v2100 = vpack.c.b16 %v2078, %v2076
    %v2101 = vpack.c.b16 %v2081, %v2079
    %v2102 = vpack.c.b16 %v2082, %v2080
    %v2103 = vpack.c.b16 %v2085, %v2083
    %v2104 = vpack.c.b16 %v2086, %v2084
    %v2105 = vpack.c.b16 %v2089, %v2087
    %v2106 = vpack.c.b16 %v2090, %v2088
    %2123 = vmatprep.subr.bf16.mxu0 %v2106
    %2124 = vmatpush1.bf16.msra.mxu0 %v2105
    %2125 = vmatprep.subr.bf16.mxu0 %v2104
    %2126 = vmatpush1.bf16.msra.mxu0 %v2103
    %2127 = vmatprep.subr.bf16.mxu0 %v2102
    %2128 = vmatpush1.bf16.msra.mxu0 %v2101
    %2129 = vmatprep.subr.bf16.mxu0 %v2100
    %2130 = vmatpush1.bf16.msra.mxu0 %v2099
    %2131 = vmatprep.subr.bf16.mxu0 %v2098
    %2132 = vmatpush1.bf16.msra.mxu0 %v2097
    %2133 = vmatprep.subr.bf16.mxu0 %v2096
    %2134 = vmatpush1.bf16.msra.mxu0 %v2095
    %2135 = vmatprep.subr.bf16.mxu0 %v2094
    %2136 = vmatpush1.bf16.msra.mxu0 %v2093
    %2137 = vmatprep.subr.bf16.mxu0 %v2092
    %2138 = vmatpush1.bf16.msra.mxu0 %v2091
    %2139 = vmatprep.subr.bf16.mxu0 0
    %2140 = vmatpush2.bf16.msra.mxu0 0
    %2141 = vmatprep.subr.bf16.mxu0 0
    %2142 = vmatpush2.bf16.msra.mxu0 0
    %2143 = vmatprep.subr.bf16.mxu0 0
    %2144 = vmatpush2.bf16.msra.mxu0 0
    %2145 = vmatprep.subr.bf16.mxu0 0
    %2146 = vmatpush2.bf16.msra.mxu0 0
    %2147 = vmatprep.subr.bf16.mxu0 0
    %2148 = vmatpush2.bf16.msra.mxu0 0
    %2149 = vmatprep.subr.bf16.mxu0 0
    %2150 = vmatpush2.bf16.msra.mxu0 0
    %2151 = vmatprep.subr.bf16.mxu0 0
    %2152 = vmatpush2.bf16.msra.mxu0 0
    %2153 = vmatprep.subr.bf16.mxu0 0
    %2154 = vmatpush2.bf16.msra.mxu0 0
    %2155 = vmatprep.mubr.bf16.mxu0 0
    %2156 = vmatmul.mubr.bf16.gmra.mxu0 %v2020
    %v2157 = vpop.f32.mrf.mxu0
    %v2158 = vadd.f32 0.0, %v2157
    %v2159 = vpop.f32.mrf.mxu0
    %v2160 = vadd.f32 0.0, %v2159
    %v2161 = vpop.f32.mrf.mxu0
    %v2162 = vadd.f32 0.0, %v2161
    %v2163 = vpop.f32.mrf.mxu0
    %v2164 = vadd.f32 0.0, %v2163
    %2165 = vmatprep.mubr.bf16.mxu0 0
    %2166 = vmatmul.mubr.bf16.gmra.mxu0 %v2023
    %v2167 = vpop.f32.mrf.mxu0
    %v2168 = vadd.f32 0.0, %v2167
    %v2169 = vpop.f32.mrf.mxu0
    %v2170 = vadd.f32 0.0, %v2169
    %v2171 = vpop.f32.mrf.mxu0
    %v2172 = vadd.f32 0.0, %v2171
    %v2173 = vpop.f32.mrf.mxu0
    %v2174 = vadd.f32 0.0, %v2173
    %2175 = vdwg.mxu0
    %v2176 = vadd.f32 %v1996, %v2158
    %v2177 = vadd.f32 %v1998, %v2160
    %v2178 = vadd.f32 %v2000, %v2162
    %v2179 = vadd.f32 %v2002, %v2164
    %v2180 = vadd.f32 %v2006, %v2168
    %v2181 = vadd.f32 %v2008, %v2170
    %v2182 = vadd.f32 %v2010, %v2172
    %v2183 = vadd.f32 %v2012, %v2174
    %v2184 = vrot.slane %v1706, 1
    %v2185 = vrot.slane %v1708, 2
    %v2186 = vor.u32 %v2184, %v2185
    %v2187 = vshrl.u32 %v1686, 16
    %v2189 = vrot.slane %v2187, 1
    %v2190 = vrot.slane %v1713, 2
    %v2191 = vor.u32 %v2189, %v2190
    %v2192 = vsel %vm327, %v2186, %v2191
    %v2193 = vrot.slane %v1718, 1
    %v2194 = vrot.slane %v1720, 2
    %v2195 = vor.u32 %v2193, %v2194
    %v2196 = vshrl.u32 %v1688, 16
    %v2198 = vrot.slane %v2196, 1
    %v2199 = vrot.slane %v1725, 2
    %v2200 = vor.u32 %v2198, %v2199
    %v2201 = vsel %vm327, %v2195, %v2200
    %s2204 = scalar_lea.vmem %s10, 384
    %v2205 = vld [vmem:[%s2204] sm:$0xff]
    %v2206 = vld [vmem:[%s2204 + $0x8] sm:$0xff]
    %v2207 = vld [vmem:[%s2204 + $0x10] sm:$0xff]
    %v2208 = vld [vmem:[%s2204 + $0x18] sm:$0xff]
    %v2209 = vld [vmem:[%s2204 + $0x20] sm:$0xff]
    %v2210 = vld [vmem:[%s2204 + $0x28] sm:$0xff]
    %v2211 = vld [vmem:[%s2204 + $0x30] sm:$0xff]
    %v2212 = vld [vmem:[%s2204 + $0x38] sm:$0xff]
    %v2213 = vld [vmem:[%s2204 + $0x40] sm:$0xff]
    %v2214 = vld [vmem:[%s2204 + $0x48] sm:$0xff]
    %v2215 = vld [vmem:[%s2204 + $0x50] sm:$0xff]
    %v2216 = vld [vmem:[%s2204 + $0x58] sm:$0xff]
    %v2217 = vld [vmem:[%s2204 + $0x60] sm:$0xff]
    %v2218 = vld [vmem:[%s2204 + $0x68] sm:$0xff]
    %v2219 = vld [vmem:[%s2204 + $0x70] sm:$0xff]
    %v2220 = vld [vmem:[%s2204 + $0x78] sm:$0xff]
    %v2237 = vunpack.c.l.b16 %v2205
    %v2238 = vunpack.c.h.b16 %v2205
    %v2239 = vunpack.c.l.b16 %v2206
    %v2240 = vunpack.c.h.b16 %v2206
    %v2241 = vunpack.c.l.b16 %v2207
    %v2242 = vunpack.c.h.b16 %v2207
    %v2243 = vunpack.c.l.b16 %v2208
    %v2244 = vunpack.c.h.b16 %v2208
    %v2245 = vunpack.c.l.b16 %v2209
    %v2246 = vunpack.c.h.b16 %v2209
    %v2247 = vunpack.c.l.b16 %v2210
    %v2248 = vunpack.c.h.b16 %v2210
    %v2249 = vunpack.c.l.b16 %v2211
    %v2250 = vunpack.c.h.b16 %v2211
    %v2251 = vunpack.c.l.b16 %v2212
    %v2252 = vunpack.c.h.b16 %v2212
    %v2253 = vunpack.c.l.b16 %v2213
    %v2254 = vunpack.c.h.b16 %v2213
    %v2255 = vunpack.c.l.b16 %v2214
    %v2256 = vunpack.c.h.b16 %v2214
    %v2257 = vunpack.c.l.b16 %v2215
    %v2258 = vunpack.c.h.b16 %v2215
    %v2259 = vunpack.c.l.b16 %v2216
    %v2260 = vunpack.c.h.b16 %v2216
    %v2261 = vunpack.c.l.b16 %v2217
    %v2262 = vunpack.c.h.b16 %v2217
    %v2263 = vunpack.c.l.b16 %v2218
    %v2264 = vunpack.c.h.b16 %v2218
    %v2265 = vunpack.c.l.b16 %v2219
    %v2266 = vunpack.c.h.b16 %v2219
    %v2267 = vunpack.c.l.b16 %v2220
    %v2268 = vunpack.c.h.b16 %v2220
    %v2269 = vpack.c.b16 %v2239, %v2237
    %v2270 = vpack.c.b16 %v2240, %v2238
    %v2271 = vpack.c.b16 %v2243, %v2241
    %v2272 = vpack.c.b16 %v2244, %v2242
    %v2273 = vpack.c.b16 %v2247, %v2245
    %v2274 = vpack.c.b16 %v2248, %v2246
    %v2275 = vpack.c.b16 %v2251, %v2249
    %v2276 = vpack.c.b16 %v2252, %v2250
    %v2277 = vpack.c.b16 %v2255, %v2253
    %v2278 = vpack.c.b16 %v2256, %v2254
    %v2279 = vpack.c.b16 %v2259, %v2257
    %v2280 = vpack.c.b16 %v2260, %v2258
    %v2281 = vpack.c.b16 %v2263, %v2261
    %v2282 = vpack.c.b16 %v2264, %v2262
    %v2283 = vpack.c.b16 %v2267, %v2265
    %v2284 = vpack.c.b16 %v2268, %v2266
    %2301 = vmatprep.subr.bf16.mxu0 %v2284
    %2302 = vmatpush1.bf16.msra.mxu0 %v2283
    %2303 = vmatprep.subr.bf16.mxu0 %v2282
    %2304 = vmatpush1.bf16.msra.mxu0 %v2281
    %2305 = vmatprep.subr.bf16.mxu0 %v2280
    %2306 = vmatpush1.bf16.msra.mxu0 %v2279
    %2307 = vmatprep.subr.bf16.mxu0 %v2278
    %2308 = vmatpush1.bf16.msra.mxu0 %v2277
    %2309 = vmatprep.subr.bf16.mxu0 %v2276
    %2310 = vmatpush1.bf16.msra.mxu0 %v2275
    %2311 = vmatprep.subr.bf16.mxu0 %v2274
    %2312 = vmatpush1.bf16.msra.mxu0 %v2273
    %2313 = vmatprep.subr.bf16.mxu0 %v2272
    %2314 = vmatpush1.bf16.msra.mxu0 %v2271
    %2315 = vmatprep.subr.bf16.mxu0 %v2270
    %2316 = vmatpush1.bf16.msra.mxu0 %v2269
    %2317 = vmatprep.subr.bf16.mxu0 0
    %2318 = vmatpush2.bf16.msra.mxu0 0
    %2319 = vmatprep.subr.bf16.mxu0 0
    %2320 = vmatpush2.bf16.msra.mxu0 0
    %2321 = vmatprep.subr.bf16.mxu0 0
    %2322 = vmatpush2.bf16.msra.mxu0 0
    %2323 = vmatprep.subr.bf16.mxu0 0
    %2324 = vmatpush2.bf16.msra.mxu0 0
    %2325 = vmatprep.subr.bf16.mxu0 0
    %2326 = vmatpush2.bf16.msra.mxu0 0
    %2327 = vmatprep.subr.bf16.mxu0 0
    %2328 = vmatpush2.bf16.msra.mxu0 0
    %2329 = vmatprep.subr.bf16.mxu0 0
    %2330 = vmatpush2.bf16.msra.mxu0 0
    %2331 = vmatprep.subr.bf16.mxu0 0
    %2332 = vmatpush2.bf16.msra.mxu0 0
    %2333 = vmatprep.mubr.bf16.mxu0 0
    %2334 = vmatmul.mubr.bf16.gmra.mxu0 %v2192
    %v2335 = vpop.f32.mrf.mxu0
    %v2336 = vadd.f32 0.0, %v2335
    %v2337 = vpop.f32.mrf.mxu0
    %v2338 = vadd.f32 0.0, %v2337
    %v2339 = vpop.f32.mrf.mxu0
    %v2340 = vadd.f32 0.0, %v2339
    %v2341 = vpop.f32.mrf.mxu0
    %v2342 = vadd.f32 0.0, %v2341
    %2343 = vmatprep.mubr.bf16.mxu0 0
    %2344 = vmatmul.mubr.bf16.gmra.mxu0 %v2201
    %v2345 = vpop.f32.mrf.mxu0
    %v2346 = vadd.f32 0.0, %v2345
    %v2347 = vpop.f32.mrf.mxu0
    %v2348 = vadd.f32 0.0, %v2347
    %v2349 = vpop.f32.mrf.mxu0
    %v2350 = vadd.f32 0.0, %v2349
    %v2351 = vpop.f32.mrf.mxu0
    %v2352 = vadd.f32 0.0, %v2351
    %2353 = vdwg.mxu0
    %v2354 = vadd.f32 %v2176, %v2336
    %v2355 = vadd.f32 %v2177, %v2338
    %v2356 = vadd.f32 %v2178, %v2340
    %v2357 = vadd.f32 %v2179, %v2342
    %v2358 = vadd.f32 %v2180, %v2346
    %v2359 = vadd.f32 %v2181, %v2348
    %v2360 = vadd.f32 %v2182, %v2350
    %v2361 = vadd.f32 %v2183, %v2352
    %v2362 = vrot.slane %v1685, 2
    %v2363 = vrot.slane %v1686, 2
    %v2364 = vsel %vm410, %v2362, %v2363
    %v2365 = vrot.slane %v1687, 2
    %v2366 = vrot.slane %v1688, 2
    %v2367 = vsel %vm410, %v2365, %v2366
    %s2370 = scalar_lea.vmem %s10, 512
    %v2371 = vld [vmem:[%s2370] sm:$0xff]
    %v2372 = vld [vmem:[%s2370 + $0x8] sm:$0xff]
    %v2373 = vld [vmem:[%s2370 + $0x10] sm:$0xff]
    %v2374 = vld [vmem:[%s2370 + $0x18] sm:$0xff]
    %v2375 = vld [vmem:[%s2370 + $0x20] sm:$0xff]
    %v2376 = vld [vmem:[%s2370 + $0x28] sm:$0xff]
    %v2377 = vld [vmem:[%s2370 + $0x30] sm:$0xff]
    %v2378 = vld [vmem:[%s2370 + $0x38] sm:$0xff]
    %v2379 = vld [vmem:[%s2370 + $0x40] sm:$0xff]
    %v2380 = vld [vmem:[%s2370 + $0x48] sm:$0xff]
    %v2381 = vld [vmem:[%s2370 + $0x50] sm:$0xff]
    %v2382 = vld [vmem:[%s2370 + $0x58] sm:$0xff]
    %v2383 = vld [vmem:[%s2370 + $0x60] sm:$0xff]
    %v2384 = vld [vmem:[%s2370 + $0x68] sm:$0xff]
    %v2385 = vld [vmem:[%s2370 + $0x70] sm:$0xff]
    %v2386 = vld [vmem:[%s2370 + $0x78] sm:$0xff]
    %v2403 = vunpack.c.l.b16 %v2371
    %v2404 = vunpack.c.h.b16 %v2371
    %v2405 = vunpack.c.l.b16 %v2372
    %v2406 = vunpack.c.h.b16 %v2372
    %v2407 = vunpack.c.l.b16 %v2373
    %v2408 = vunpack.c.h.b16 %v2373
    %v2409 = vunpack.c.l.b16 %v2374
    %v2410 = vunpack.c.h.b16 %v2374
    %v2411 = vunpack.c.l.b16 %v2375
    %v2412 = vunpack.c.h.b16 %v2375
    %v2413 = vunpack.c.l.b16 %v2376
    %v2414 = vunpack.c.h.b16 %v2376
    %v2415 = vunpack.c.l.b16 %v2377
    %v2416 = vunpack.c.h.b16 %v2377
    %v2417 = vunpack.c.l.b16 %v2378
    %v2418 = vunpack.c.h.b16 %v2378
    %v2419 = vunpack.c.l.b16 %v2379
    %v2420 = vunpack.c.h.b16 %v2379
    %v2421 = vunpack.c.l.b16 %v2380
    %v2422 = vunpack.c.h.b16 %v2380
    %v2423 = vunpack.c.l.b16 %v2381
    %v2424 = vunpack.c.h.b16 %v2381
    %v2425 = vunpack.c.l.b16 %v2382
    %v2426 = vunpack.c.h.b16 %v2382
    %v2427 = vunpack.c.l.b16 %v2383
    %v2428 = vunpack.c.h.b16 %v2383
    %v2429 = vunpack.c.l.b16 %v2384
    %v2430 = vunpack.c.h.b16 %v2384
    %v2431 = vunpack.c.l.b16 %v2385
    %v2432 = vunpack.c.h.b16 %v2385
    %v2433 = vunpack.c.l.b16 %v2386
    %v2434 = vunpack.c.h.b16 %v2386
    %v2435 = vpack.c.b16 %v2405, %v2403
    %v2436 = vpack.c.b16 %v2406, %v2404
    %v2437 = vpack.c.b16 %v2409, %v2407
    %v2438 = vpack.c.b16 %v2410, %v2408
    %v2439 = vpack.c.b16 %v2413, %v2411
    %v2440 = vpack.c.b16 %v2414, %v2412
    %v2441 = vpack.c.b16 %v2417, %v2415
    %v2442 = vpack.c.b16 %v2418, %v2416
    %v2443 = vpack.c.b16 %v2421, %v2419
    %v2444 = vpack.c.b16 %v2422, %v2420
    %v2445 = vpack.c.b16 %v2425, %v2423
    %v2446 = vpack.c.b16 %v2426, %v2424
    %v2447 = vpack.c.b16 %v2429, %v2427
    %v2448 = vpack.c.b16 %v2430, %v2428
    %v2449 = vpack.c.b16 %v2433, %v2431
    %v2450 = vpack.c.b16 %v2434, %v2432
    %2467 = vmatprep.subr.bf16.mxu0 %v2450
    %2468 = vmatpush1.bf16.msra.mxu0 %v2449
    %2469 = vmatprep.subr.bf16.mxu0 %v2448
    %2470 = vmatpush1.bf16.msra.mxu0 %v2447
    %2471 = vmatprep.subr.bf16.mxu0 %v2446
    %2472 = vmatpush1.bf16.msra.mxu0 %v2445
    %2473 = vmatprep.subr.bf16.mxu0 %v2444
    %2474 = vmatpush1.bf16.msra.mxu0 %v2443
    %2475 = vmatprep.subr.bf16.mxu0 %v2442
    %2476 = vmatpush1.bf16.msra.mxu0 %v2441
    %2477 = vmatprep.subr.bf16.mxu0 %v2440
    %2478 = vmatpush1.bf16.msra.mxu0 %v2439
    %2479 = vmatprep.subr.bf16.mxu0 %v2438
    %2480 = vmatpush1.bf16.msra.mxu0 %v2437
    %2481 = vmatprep.subr.bf16.mxu0 %v2436
    %2482 = vmatpush1.bf16.msra.mxu0 %v2435
    %2483 = vmatprep.subr.bf16.mxu0 0
    %2484 = vmatpush2.bf16.msra.mxu0 0
    %2485 = vmatprep.subr.bf16.mxu0 0
    %2486 = vmatpush2.bf16.msra.mxu0 0
    %2487 = vmatprep.subr.bf16.mxu0 0
    %2488 = vmatpush2.bf16.msra.mxu0 0
    %2489 = vmatprep.subr.bf16.mxu0 0
    %2490 = vmatpush2.bf16.msra.mxu0 0
    %2491 = vmatprep.subr.bf16.mxu0 0
    %2492 = vmatpush2.bf16.msra.mxu0 0
    %2493 = vmatprep.subr.bf16.mxu0 0
    %2494 = vmatpush2.bf16.msra.mxu0 0
    %2495 = vmatprep.subr.bf16.mxu0 0
    %2496 = vmatpush2.bf16.msra.mxu0 0
    %2497 = vmatprep.subr.bf16.mxu0 0
    %2498 = vmatpush2.bf16.msra.mxu0 0
    %2499 = vmatprep.mubr.bf16.mxu0 0
    %2500 = vmatmul.mubr.bf16.gmra.mxu0 %v2364
    %v2501 = vpop.f32.mrf.mxu0
    %v2502 = vadd.f32 0.0, %v2501
    %v2503 = vpop.f32.mrf.mxu0
    %v2504 = vadd.f32 0.0, %v2503
    %v2505 = vpop.f32.mrf.mxu0
    %v2506 = vadd.f32 0.0, %v2505
    %v2507 = vpop.f32.mrf.mxu0
    %v2508 = vadd.f32 0.0, %v2507
    %2509 = vmatprep.mubr.bf16.mxu0 0
    %2510 = vmatmul.mubr.bf16.gmra.mxu0 %v2367
    %v2511 = vpop.f32.mrf.mxu0
    %v2512 = vadd.f32 0.0, %v2511
    %v2513 = vpop.f32.mrf.mxu0
    %v2514 = vadd.f32 0.0, %v2513
    %v2515 = vpop.f32.mrf.mxu0
    %v2516 = vadd.f32 0.0, %v2515
    %v2517 = vpop.f32.mrf.mxu0
    %v2518 = vadd.f32 0.0, %v2517
    %2519 = vdwg.mxu0
    %v2520 = vadd.f32 %v2354, %v2502
    %v2521 = vadd.f32 %v2355, %v2504
    %v2522 = vadd.f32 %v2356, %v2506
    %v2523 = vadd.f32 %v2357, %v2508
    %v2524 = vadd.f32 %v2358, %v2512
    %v2525 = vadd.f32 %v2359, %v2514
    %v2526 = vadd.f32 %v2360, %v2516
    %v2527 = vadd.f32 %v2361, %v2518
    %v2528 = vadd.f32 %v2520, %v2522
    %v2529 = vadd.f32 %v2528, %v2524
    %v2530 = vadd.f32 %v2529, %v2526
    %v2531 = vrot.slane %v2530, 4
    %v2532 = vadd.f32 %v2530, %v2531
    %v2533 = vrot.slane %v2532, 2
    %v2534 = vadd.f32 %v2532, %v2533
    %v2535 = vrot.slane %v2534, 1
    %v2536 = vadd.f32 %v2534, %v2535
    %v2537 = vadd.f32 %v2521, %v2523
    %v2538 = vadd.f32 %v2537, %v2525
    %v2539 = vadd.f32 %v2538, %v2527
    %v2540 = vrot.slane %v2539, 4
    %v2541 = vadd.f32 %v2539, %v2540
    %v2542 = vrot.slane %v2541, 2
    %v2543 = vadd.f32 %v2541, %v2542
    %v2544 = vrot.slane %v2543, 1
    %v2545 = vadd.f32 %v2543, %v2544
    %v2546 = vmul.f32 %v2536, %v495
    %v2547 = vmul.f32 %v2545, %v495
    %v2548 = vmul.f32 %v2520, %v2520
    %v2549 = vmul.f32 %v2521, %v2521
    %v2550 = vmul.f32 %v2522, %v2522
    %v2551 = vmul.f32 %v2523, %v2523
    %v2552 = vmul.f32 %v2524, %v2524
    %v2553 = vmul.f32 %v2525, %v2525
    %v2554 = vmul.f32 %v2526, %v2526
    %v2555 = vmul.f32 %v2527, %v2527
    %v2556 = vadd.f32 %v2548, %v2550
    %v2557 = vadd.f32 %v2556, %v2552
    %v2558 = vadd.f32 %v2557, %v2554
    %v2559 = vrot.slane %v2558, 4
    %v2560 = vadd.f32 %v2558, %v2559
    %v2561 = vrot.slane %v2560, 2
    %v2562 = vadd.f32 %v2560, %v2561
    %v2563 = vrot.slane %v2562, 1
    %v2564 = vadd.f32 %v2562, %v2563
    %v2565 = vadd.f32 %v2549, %v2551
    %v2566 = vadd.f32 %v2565, %v2553
    %v2567 = vadd.f32 %v2566, %v2555
    %v2568 = vrot.slane %v2567, 4
    %v2569 = vadd.f32 %v2567, %v2568
    %v2570 = vrot.slane %v2569, 2
    %v2571 = vadd.f32 %v2569, %v2570
    %v2572 = vrot.slane %v2571, 1
    %v2573 = vadd.f32 %v2571, %v2572
    %v2574 = vmul.f32 %v2564, %v495
    %v2575 = vmul.f32 %v2573, %v495
    %v2576 = vmul.f32 %v2546, %v2546
    %v2577 = vmul.f32 %v2547, %v2547
    %v2578 = vsub.f32 %v2574, %v2576
    %v2579 = vsub.f32 %v2575, %v2577
    %v2580 = vadd.f32 %v2578, 1e-05
    %v2581 = vadd.f32 %v2579, 1e-05
    %v2582 = vrsqrt.pop %v2580
    %v2583 = vrsqrt.pop %v2581
    %v2586 = vcombine.low %v2582, %v2583
    %v2588 = vunpack.c.l.s4 1966171168
    %v2589 = vunpack.c.0.s8 %v2588
    %v2590 = vlaneseq
    %v2591 = vshrl.u32 %v2590, 7
    %v2592 = vsub.s32 %v2589, %v2591
    %v2593 = vrot.slane %v2586, %v2592
    %v2595 = vunpack.c.l.s4 1966171168
    %v2596 = vunpack.c.0.s8 %v2595
    %v2597 = vlaneseq
    %v2598 = vshrl.u32 %v2597, 7
    %v2599 = vsub.s32 %v2596, %v2598
    %v2600 = vrot.slane %v2593, %v2599
    %v2602 = vmul.f32 %v1663, %v2600
    %v2604 = vlaneseq
    %v2605 = vshrl.u32 %v2604, 7
    %v2606 = vsub.s32 0, %v2605
    %v2607 = vrot.slane %v2602, %v2606
    %v2608 = vlaneseq
    %v2609 = vshrl.u32 %v2608, 7
    %v2610 = vsub.s32 1, %v2609
    %v2611 = vrot.slane %v2602, %v2610
    %v2614 = vmul.f32 %v2546, %v2607
    %v2615 = vmul.f32 %v2547, %v2611
    %v2618 = vcombine.low %v2614, %v2615
    %v2620 = vunpack.c.l.s4 1966171168
    %v2621 = vunpack.c.0.s8 %v2620
    %v2622 = vlaneseq
    %v2623 = vshrl.u32 %v2622, 7
    %v2624 = vsub.s32 %v2621, %v2623
    %v2625 = vrot.slane %v2618, %v2624
    %v2627 = vunpack.c.l.s4 1966171168
    %v2628 = vunpack.c.0.s8 %v2627
    %v2629 = vlaneseq
    %v2630 = vshrl.u32 %v2629, 7
    %v2631 = vsub.s32 %v2628, %v2630
    %v2632 = vrot.slane %v2625, %v2631
    %v2634 = vsub.f32 %v1664, %v2632
    %v2635 = vmul.f32 %v2520, %v2607
    %v2636 = vmul.f32 %v2521, %v2611
    %v2637 = vmul.f32 %v2522, %v2607
    %v2638 = vmul.f32 %v2523, %v2611
    %v2639 = vmul.f32 %v2524, %v2607
    %v2640 = vmul.f32 %v2525, %v2611
    %v2641 = vmul.f32 %v2526, %v2607
    %v2642 = vmul.f32 %v2527, %v2611
    %v2644 = vlaneseq
    %v2645 = vshrl.u32 %v2644, 7
    %v2646 = vsub.s32 0, %v2645
    %v2647 = vrot.slane %v2634, %v2646
    %v2648 = vlaneseq
    %v2649 = vshrl.u32 %v2648, 7
    %v2650 = vsub.s32 1, %v2649
    %v2651 = vrot.slane %v2634, %v2650
    %v2654 = vadd.f32 %v2635, %v2647
    %v2655 = vadd.f32 %v2636, %v2651
    %v2656 = vadd.f32 %v2637, %v2647
    %v2657 = vadd.f32 %v2638, %v2651
    %v2658 = vadd.f32 %v2639, %v2647
    %v2659 = vadd.f32 %v2640, %v2651
    %v2660 = vadd.f32 %v2641, %v2647
    %v2661 = vadd.f32 %v2642, %v2651
    %v2662 = vmul.f32 %v2654, 0.01
    %v2663 = vmul.f32 %v2655, 0.01
    %v2664 = vmul.f32 %v2656, 0.01
    %v2665 = vmul.f32 %v2657, 0.01
    %v2666 = vmul.f32 %v2658, 0.01
    %v2667 = vmul.f32 %v2659, 0.01
    %v2668 = vmul.f32 %v2660, 0.01
    %v2669 = vmul.f32 %v2661, 0.01
    %v2670 = vmax.f32 %v2654, %v2662
    %v2671 = vmax.f32 %v2655, %v2663
    %v2672 = vmax.f32 %v2656, %v2664
    %v2673 = vmax.f32 %v2657, %v2665
    %v2674 = vmax.f32 %v2658, %v2666
    %v2675 = vmax.f32 %v2659, %v2667
    %v2676 = vmax.f32 %v2660, %v2668
    %v2677 = vmax.f32 %v2661, %v2669
    %v2678 = vld [vmem:[%s14] sm:$0x1]
    %v2679 = vld [vmem:[%s15] sm:$0x1]
    %v2688 = vrot.slane %v2670, 6
    %v2689 = vrot.slane %v2671, 6
    %v2690 = vrot.slane %v2672, 6
    %v2691 = vsel %vm88, %v2688, %v2690
    %v2692 = vrot.slane %v2673, 6
    %v2693 = vsel %vm88, %v2689, %v2692
    %v2694 = vrot.slane %v2674, 6
    %v2695 = vrot.slane %v2675, 6
    %v2696 = vrot.slane %v2676, 6
    %v2697 = vsel %vm88, %v2694, %v2696
    %v2698 = vrot.slane %v2677, 6
    %v2699 = vsel %vm88, %v2695, %v2698
    %v2712 = vsel %vm88, 0.0, %v2688
    %v2713 = vsel %vm88, 0.0, %v2689
    %v2714 = vsel %vm88, 0.0, %v2694
    %v2715 = vsel %vm88, 0.0, %v2695
    %v2716 = vsel %vm88, %v2690, 0.0
    %v2717 = vsel %vm88, %v2692, 0.0
    %v2718 = vsel %vm88, %v2696, 0.0
    %v2719 = vsel %vm88, %v2698, 0.0
    %v2720 = vpack.c.bf16 %v2691, %v2712
    %v2721 = vpack.c.bf16 %v2693, %v2713
    %v2722 = vpack.c.bf16 %v2716, %v2716
    %v2723 = vpack.c.bf16 %v2717, %v2717
    %v2724 = vpack.c.bf16 %v2697, %v2714
    %v2725 = vpack.c.bf16 %v2699, %v2715
    %v2726 = vpack.c.bf16 %v2718, %v2718
    %v2727 = vpack.c.bf16 %v2719, %v2719
    %v2728 = vld [vmem:[%s13] sm:$0xf]
    %v2729 = vld [vmem:[%s13 + $0x4] sm:$0xf]
    %v2730 = vld [vmem:[%s13 + $0x8] sm:$0xf]
    %v2731 = vld [vmem:[%s13 + $0xc] sm:$0xf]
    %v2732 = vld [vmem:[%s13 + $0x10] sm:$0xf]
    %v2733 = vld [vmem:[%s13 + $0x14] sm:$0xf]
    %v2734 = vld [vmem:[%s13 + $0x18] sm:$0xf]
    %v2735 = vld [vmem:[%s13 + $0x1c] sm:$0xf]
    %v2736 = vld [vmem:[%s13 + $0x20] sm:$0xf]
    %v2737 = vld [vmem:[%s13 + $0x24] sm:$0xf]
    %v2738 = vld [vmem:[%s13 + $0x28] sm:$0xf]
    %v2739 = vld [vmem:[%s13 + $0x2c] sm:$0xf]
    %v2740 = vld [vmem:[%s13 + $0x30] sm:$0xf]
    %v2741 = vld [vmem:[%s13 + $0x34] sm:$0xf]
    %v2742 = vld [vmem:[%s13 + $0x38] sm:$0xf]
    %v2743 = vld [vmem:[%s13 + $0x3c] sm:$0xf]
    %v2744 = vld [vmem:[%s13 + $0x40] sm:$0xf]
    %v2745 = vld [vmem:[%s13 + $0x44] sm:$0xf]
    %v2746 = vld [vmem:[%s13 + $0x48] sm:$0xf]
    %v2747 = vld [vmem:[%s13 + $0x4c] sm:$0xf]
    %v2748 = vld [vmem:[%s13 + $0x50] sm:$0xf]
    %v2749 = vld [vmem:[%s13 + $0x54] sm:$0xf]
    %v2750 = vld [vmem:[%s13 + $0x58] sm:$0xf]
    %v2751 = vld [vmem:[%s13 + $0x5c] sm:$0xf]
    %v2752 = vld [vmem:[%s13 + $0x60] sm:$0xf]
    %v2753 = vld [vmem:[%s13 + $0x64] sm:$0xf]
    %v2754 = vld [vmem:[%s13 + $0x68] sm:$0xf]
    %v2755 = vld [vmem:[%s13 + $0x6c] sm:$0xf]
    %v2756 = vld [vmem:[%s13 + $0x70] sm:$0xf]
    %v2757 = vld [vmem:[%s13 + $0x74] sm:$0xf]
    %v2758 = vld [vmem:[%s13 + $0x78] sm:$0xf]
    %v2759 = vld [vmem:[%s13 + $0x7c] sm:$0xf]
    %v2761 = vshrl.u32 %v2720, 16
    %v2763 = vshll.u32 %v2720, 16
    %v2765 = vrot.slane %v2763, 1
    %v2766 = vor.u32 %v2761, %v2765
    %v2768 = vshll.u32 %v2722, 16
    %v2770 = vrot.slane %v2768, 1
    %v2771 = vsel %vm110, %v2766, %v2770
    %v2773 = vshrl.u32 %v2721, 16
    %v2775 = vshll.u32 %v2721, 16
    %v2777 = vrot.slane %v2775, 1
    %v2778 = vor.u32 %v2773, %v2777
    %v2780 = vshll.u32 %v2723, 16
    %v2782 = vrot.slane %v2780, 1
    %v2783 = vsel %vm110, %v2778, %v2782
    %v2785 = vshrl.u32 %v2724, 16
    %v2787 = vshll.u32 %v2724, 16
    %v2789 = vrot.slane %v2787, 1
    %v2790 = vor.u32 %v2785, %v2789
    %v2792 = vshll.u32 %v2726, 16
    %v2794 = vrot.slane %v2792, 1
    %v2795 = vsel %vm110, %v2790, %v2794
    %v2797 = vshrl.u32 %v2725, 16
    %v2799 = vshll.u32 %v2725, 16
    %v2801 = vrot.slane %v2799, 1
    %v2802 = vor.u32 %v2797, %v2801
    %v2804 = vshll.u32 %v2727, 16
    %v2806 = vrot.slane %v2804, 1
    %v2807 = vsel %vm110, %v2802, %v2806
    %s2812 = scalar_lea.vmem %s13, 128
    %v2813 = vld [vmem:[%s2812] sm:$0xf]
    %v2814 = vld [vmem:[%s2812 + $0x4] sm:$0xf]
    %v2815 = vld [vmem:[%s2812 + $0x8] sm:$0xf]
    %v2816 = vld [vmem:[%s2812 + $0xc] sm:$0xf]
    %v2817 = vld [vmem:[%s2812 + $0x10] sm:$0xf]
    %v2818 = vld [vmem:[%s2812 + $0x14] sm:$0xf]
    %v2819 = vld [vmem:[%s2812 + $0x18] sm:$0xf]
    %v2820 = vld [vmem:[%s2812 + $0x1c] sm:$0xf]
    %v2821 = vld [vmem:[%s2812 + $0x20] sm:$0xf]
    %v2822 = vld [vmem:[%s2812 + $0x24] sm:$0xf]
    %v2823 = vld [vmem:[%s2812 + $0x28] sm:$0xf]
    %v2824 = vld [vmem:[%s2812 + $0x2c] sm:$0xf]
    %v2825 = vld [vmem:[%s2812 + $0x30] sm:$0xf]
    %v2826 = vld [vmem:[%s2812 + $0x34] sm:$0xf]
    %v2827 = vld [vmem:[%s2812 + $0x38] sm:$0xf]
    %v2828 = vld [vmem:[%s2812 + $0x3c] sm:$0xf]
    %v2829 = vld [vmem:[%s2812 + $0x40] sm:$0xf]
    %v2830 = vld [vmem:[%s2812 + $0x44] sm:$0xf]
    %v2831 = vld [vmem:[%s2812 + $0x48] sm:$0xf]
    %v2832 = vld [vmem:[%s2812 + $0x4c] sm:$0xf]
    %v2833 = vld [vmem:[%s2812 + $0x50] sm:$0xf]
    %v2834 = vld [vmem:[%s2812 + $0x54] sm:$0xf]
    %v2835 = vld [vmem:[%s2812 + $0x58] sm:$0xf]
    %v2836 = vld [vmem:[%s2812 + $0x5c] sm:$0xf]
    %v2837 = vld [vmem:[%s2812 + $0x60] sm:$0xf]
    %v2838 = vld [vmem:[%s2812 + $0x64] sm:$0xf]
    %v2839 = vld [vmem:[%s2812 + $0x68] sm:$0xf]
    %v2840 = vld [vmem:[%s2812 + $0x6c] sm:$0xf]
    %v2841 = vld [vmem:[%s2812 + $0x70] sm:$0xf]
    %v2842 = vld [vmem:[%s2812 + $0x74] sm:$0xf]
    %v2843 = vld [vmem:[%s2812 + $0x78] sm:$0xf]
    %v2844 = vld [vmem:[%s2812 + $0x7c] sm:$0xf]
    %v2877 = vunpack.c.l.b16 %v2813
    %v2878 = vunpack.c.l.b16 %v2814
    %v2879 = vunpack.c.l.b16 %v2815
    %v2880 = vunpack.c.l.b16 %v2816
    %v2881 = vunpack.c.l.b16 %v2817
    %v2882 = vunpack.c.l.b16 %v2818
    %v2883 = vunpack.c.l.b16 %v2819
    %v2884 = vunpack.c.l.b16 %v2820
    %v2885 = vunpack.c.l.b16 %v2821
    %v2886 = vunpack.c.l.b16 %v2822
    %v2887 = vunpack.c.l.b16 %v2823
    %v2888 = vunpack.c.l.b16 %v2824
    %v2889 = vunpack.c.l.b16 %v2825
    %v2890 = vunpack.c.l.b16 %v2826
    %v2891 = vunpack.c.l.b16 %v2827
    %v2892 = vunpack.c.l.b16 %v2828
    %v2893 = vunpack.c.l.b16 %v2829
    %v2894 = vunpack.c.l.b16 %v2830
    %v2895 = vunpack.c.l.b16 %v2831
    %v2896 = vunpack.c.l.b16 %v2832
    %v2897 = vunpack.c.l.b16 %v2833
    %v2898 = vunpack.c.l.b16 %v2834
    %v2899 = vunpack.c.l.b16 %v2835
    %v2900 = vunpack.c.l.b16 %v2836
    %v2901 = vunpack.c.l.b16 %v2837
    %v2902 = vunpack.c.l.b16 %v2838
    %v2903 = vunpack.c.l.b16 %v2839
    %v2904 = vunpack.c.l.b16 %v2840
    %v2905 = vunpack.c.l.b16 %v2841
    %v2906 = vunpack.c.l.b16 %v2842
    %v2907 = vunpack.c.l.b16 %v2843
    %v2908 = vunpack.c.l.b16 %v2844
    %v2909 = vpack.c.b16 %v2878, %v2877
    %v2910 = vpack.c.b16 %v2880, %v2879
    %v2911 = vpack.c.b16 %v2882, %v2881
    %v2912 = vpack.c.b16 %v2884, %v2883
    %v2913 = vpack.c.b16 %v2886, %v2885
    %v2914 = vpack.c.b16 %v2888, %v2887
    %v2915 = vpack.c.b16 %v2890, %v2889
    %v2916 = vpack.c.b16 %v2892, %v2891
    %v2917 = vpack.c.b16 %v2894, %v2893
    %v2918 = vpack.c.b16 %v2896, %v2895
    %v2919 = vpack.c.b16 %v2898, %v2897
    %v2920 = vpack.c.b16 %v2900, %v2899
    %v2921 = vpack.c.b16 %v2902, %v2901
    %v2922 = vpack.c.b16 %v2904, %v2903
    %v2923 = vpack.c.b16 %v2906, %v2905
    %v2924 = vpack.c.b16 %v2908, %v2907
    %2941 = vmatprep.subr.bf16.mxu0 0
    %2942 = vmatpush1.bf16.msra.mxu0 %v2916
    %2943 = vmatprep.subr.bf16.mxu0 0
    %2944 = vmatpush1.bf16.msra.mxu0 %v2915
    %2945 = vmatprep.subr.bf16.mxu0 0
    %2946 = vmatpush1.bf16.msra.mxu0 %v2914
    %2947 = vmatprep.subr.bf16.mxu0 0
    %2948 = vmatpush1.bf16.msra.mxu0 %v2913
    %2949 = vmatprep.subr.bf16.mxu0 0
    %2950 = vmatpush1.bf16.msra.mxu0 %v2912
    %2951 = vmatprep.subr.bf16.mxu0 0
    %2952 = vmatpush1.bf16.msra.mxu0 %v2911
    %2953 = vmatprep.subr.bf16.mxu0 0
    %2954 = vmatpush1.bf16.msra.mxu0 %v2910
    %2955 = vmatprep.subr.bf16.mxu0 0
    %2956 = vmatpush1.bf16.msra.mxu0 %v2909
    %2957 = vmatprep.subr.bf16.mxu0 0
    %2958 = vmatpush2.bf16.msra.mxu0 %v2924
    %2959 = vmatprep.subr.bf16.mxu0 0
    %2960 = vmatpush2.bf16.msra.mxu0 %v2923
    %2961 = vmatprep.subr.bf16.mxu0 0
    %2962 = vmatpush2.bf16.msra.mxu0 %v2922
    %2963 = vmatprep.subr.bf16.mxu0 0
    %2964 = vmatpush2.bf16.msra.mxu0 %v2921
    %2965 = vmatprep.subr.bf16.mxu0 0
    %2966 = vmatpush2.bf16.msra.mxu0 %v2920
    %2967 = vmatprep.subr.bf16.mxu0 0
    %2968 = vmatpush2.bf16.msra.mxu0 %v2919
    %2969 = vmatprep.subr.bf16.mxu0 0
    %2970 = vmatpush2.bf16.msra.mxu0 %v2918
    %2971 = vmatprep.subr.bf16.mxu0 0
    %2972 = vmatpush2.bf16.msra.mxu0 %v2917
    %2973 = vmatprep.mubr.bf16.mxu0 %v2783
    %2974 = vmatmul.mubr.bf16.gmra.mxu0 %v2771
    %v2975 = vpop.f32.mrf.mxu0
    %v2976 = vadd.f32 0.0, %v2975
    %v2977 = vpop.f32.mrf.mxu0
    %v2978 = vpop.f32.mrf.mxu0
    %v2979 = vadd.f32 0.0, %v2978
    %v2980 = vpop.f32.mrf.mxu0
    %2981 = vmatprep.mubr.bf16.mxu0 %v2807
    %2982 = vmatmul.mubr.bf16.gmra.mxu0 %v2795
    %v2983 = vpop.f32.mrf.mxu0
    %v2984 = vadd.f32 0.0, %v2983
    %v2985 = vpop.f32.mrf.mxu0
    %v2986 = vpop.f32.mrf.mxu0
    %v2987 = vadd.f32 0.0, %v2986
    %v2988 = vpop.f32.mrf.mxu0
    %2989 = vdwg.mxu0
    %v3022 = vunpack.c.l.b16 %v2728
    %v3023 = vunpack.c.l.b16 %v2729
    %v3024 = vunpack.c.l.b16 %v2730
    %v3025 = vunpack.c.l.b16 %v2731
    %v3026 = vunpack.c.l.b16 %v2732
    %v3027 = vunpack.c.l.b16 %v2733
    %v3028 = vunpack.c.l.b16 %v2734
    %v3029 = vunpack.c.l.b16 %v2735
    %v3030 = vunpack.c.l.b16 %v2736
    %v3031 = vunpack.c.l.b16 %v2737
    %v3032 = vunpack.c.l.b16 %v2738
    %v3033 = vunpack.c.l.b16 %v2739
    %v3034 = vunpack.c.l.b16 %v2740
    %v3035 = vunpack.c.l.b16 %v2741
    %v3036 = vunpack.c.l.b16 %v2742
    %v3037 = vunpack.c.l.b16 %v2743
    %v3038 = vunpack.c.l.b16 %v2744
    %v3039 = vunpack.c.l.b16 %v2745
    %v3040 = vunpack.c.l.b16 %v2746
    %v3041 = vunpack.c.l.b16 %v2747
    %v3042 = vunpack.c.l.b16 %v2748
    %v3043 = vunpack.c.l.b16 %v2749
    %v3044 = vunpack.c.l.b16 %v2750
    %v3045 = vunpack.c.l.b16 %v2751
    %v3046 = vunpack.c.l.b16 %v2752
    %v3047 = vunpack.c.l.b16 %v2753
    %v3048 = vunpack.c.l.b16 %v2754
    %v3049 = vunpack.c.l.b16 %v2755
    %v3050 = vunpack.c.l.b16 %v2756
    %v3051 = vunpack.c.l.b16 %v2757
    %v3052 = vunpack.c.l.b16 %v2758
    %v3053 = vunpack.c.l.b16 %v2759
    %v3054 = vpack.c.b16 %v3023, %v3022
    %v3055 = vpack.c.b16 %v3025, %v3024
    %v3056 = vpack.c.b16 %v3027, %v3026
    %v3057 = vpack.c.b16 %v3029, %v3028
    %v3058 = vpack.c.b16 %v3031, %v3030
    %v3059 = vpack.c.b16 %v3033, %v3032
    %v3060 = vpack.c.b16 %v3035, %v3034
    %v3061 = vpack.c.b16 %v3037, %v3036
    %v3062 = vpack.c.b16 %v3039, %v3038
    %v3063 = vpack.c.b16 %v3041, %v3040
    %v3064 = vpack.c.b16 %v3043, %v3042
    %v3065 = vpack.c.b16 %v3045, %v3044
    %v3066 = vpack.c.b16 %v3047, %v3046
    %v3067 = vpack.c.b16 %v3049, %v3048
    %v3068 = vpack.c.b16 %v3051, %v3050
    %v3069 = vpack.c.b16 %v3053, %v3052
    %3086 = vmatprep.subr.bf16.mxu0 0
    %3087 = vmatpush1.bf16.msra.mxu0 %v3061
    %3088 = vmatprep.subr.bf16.mxu0 0
    %3089 = vmatpush1.bf16.msra.mxu0 %v3060
    %3090 = vmatprep.subr.bf16.mxu0 0
    %3091 = vmatpush1.bf16.msra.mxu0 %v3059
    %3092 = vmatprep.subr.bf16.mxu0 0
    %3093 = vmatpush1.bf16.msra.mxu0 %v3058
    %3094 = vmatprep.subr.bf16.mxu0 0
    %3095 = vmatpush1.bf16.msra.mxu0 %v3057
    %3096 = vmatprep.subr.bf16.mxu0 0
    %3097 = vmatpush1.bf16.msra.mxu0 %v3056
    %3098 = vmatprep.subr.bf16.mxu0 0
    %3099 = vmatpush1.bf16.msra.mxu0 %v3055
    %3100 = vmatprep.subr.bf16.mxu0 0
    %3101 = vmatpush1.bf16.msra.mxu0 %v3054
    %3102 = vmatprep.subr.bf16.mxu0 0
    %3103 = vmatpush2.bf16.msra.mxu0 %v3069
    %3104 = vmatprep.subr.bf16.mxu0 0
    %3105 = vmatpush2.bf16.msra.mxu0 %v3068
    %3106 = vmatprep.subr.bf16.mxu0 0
    %3107 = vmatpush2.bf16.msra.mxu0 %v3067
    %3108 = vmatprep.subr.bf16.mxu0 0
    %3109 = vmatpush2.bf16.msra.mxu0 %v3066
    %3110 = vmatprep.subr.bf16.mxu0 0
    %3111 = vmatpush2.bf16.msra.mxu0 %v3065
    %3112 = vmatprep.subr.bf16.mxu0 0
    %3113 = vmatpush2.bf16.msra.mxu0 %v3064
    %3114 = vmatprep.subr.bf16.mxu0 0
    %3115 = vmatpush2.bf16.msra.mxu0 %v3063
    %3116 = vmatprep.subr.bf16.mxu0 0
    %3117 = vmatpush2.bf16.msra.mxu0 %v3062
    %3118 = vmatprep.mubr.bf16.mxu0 %v2721
    %3119 = vmatmul.mubr.bf16.gmra.mxu0 %v2720
    %v3120 = vpop.f32.mrf.mxu0
    %v3121 = vadd.f32 %v2976, %v3120
    %v3122 = vpop.f32.mrf.mxu0
    %v3123 = vpop.f32.mrf.mxu0
    %v3124 = vadd.f32 %v2979, %v3123
    %v3125 = vpop.f32.mrf.mxu0
    %3126 = vmatprep.mubr.bf16.mxu0 %v2725
    %3127 = vmatmul.mubr.bf16.gmra.mxu0 %v2724
    %v3128 = vpop.f32.mrf.mxu0
    %v3129 = vadd.f32 %v2984, %v3128
    %v3130 = vpop.f32.mrf.mxu0
    %v3131 = vpop.f32.mrf.mxu0
    %v3132 = vadd.f32 %v2987, %v3131
    %v3133 = vpop.f32.mrf.mxu0
    %3134 = vdwg.mxu0
    %v3143 = vrot.slane %v2720, 1
    %v3144 = vrot.slane %v2722, 1
    %v3145 = vsel %vm256, %v3143, %v3144
    %v3146 = vrot.slane %v2721, 1
    %v3147 = vrot.slane %v2723, 1
    %v3148 = vsel %vm256, %v3146, %v3147
    %v3149 = vrot.slane %v2724, 1
    %v3150 = vrot.slane %v2726, 1
    %v3151 = vsel %vm256, %v3149, %v3150
    %v3152 = vrot.slane %v2725, 1
    %v3153 = vrot.slane %v2727, 1
    %v3154 = vsel %vm256, %v3152, %v3153
    %s3159 = scalar_lea.vmem %s13, 256
    %v3160 = vld [vmem:[%s3159] sm:$0xf]
    %v3161 = vld [vmem:[%s3159 + $0x4] sm:$0xf]
    %v3162 = vld [vmem:[%s3159 + $0x8] sm:$0xf]
    %v3163 = vld [vmem:[%s3159 + $0xc] sm:$0xf]
    %v3164 = vld [vmem:[%s3159 + $0x10] sm:$0xf]
    %v3165 = vld [vmem:[%s3159 + $0x14] sm:$0xf]
    %v3166 = vld [vmem:[%s3159 + $0x18] sm:$0xf]
    %v3167 = vld [vmem:[%s3159 + $0x1c] sm:$0xf]
    %v3168 = vld [vmem:[%s3159 + $0x20] sm:$0xf]
    %v3169 = vld [vmem:[%s3159 + $0x24] sm:$0xf]
    %v3170 = vld [vmem:[%s3159 + $0x28] sm:$0xf]
    %v3171 = vld [vmem:[%s3159 + $0x2c] sm:$0xf]
    %v3172 = vld [vmem:[%s3159 + $0x30] sm:$0xf]
    %v3173 = vld [vmem:[%s3159 + $0x34] sm:$0xf]
    %v3174 = vld [vmem:[%s3159 + $0x38] sm:$0xf]
    %v3175 = vld [vmem:[%s3159 + $0x3c] sm:$0xf]
    %v3176 = vld [vmem:[%s3159 + $0x40] sm:$0xf]
    %v3177 = vld [vmem:[%s3159 + $0x44] sm:$0xf]
    %v3178 = vld [vmem:[%s3159 + $0x48] sm:$0xf]
    %v3179 = vld [vmem:[%s3159 + $0x4c] sm:$0xf]
    %v3180 = vld [vmem:[%s3159 + $0x50] sm:$0xf]
    %v3181 = vld [vmem:[%s3159 + $0x54] sm:$0xf]
    %v3182 = vld [vmem:[%s3159 + $0x58] sm:$0xf]
    %v3183 = vld [vmem:[%s3159 + $0x5c] sm:$0xf]
    %v3184 = vld [vmem:[%s3159 + $0x60] sm:$0xf]
    %v3185 = vld [vmem:[%s3159 + $0x64] sm:$0xf]
    %v3186 = vld [vmem:[%s3159 + $0x68] sm:$0xf]
    %v3187 = vld [vmem:[%s3159 + $0x6c] sm:$0xf]
    %v3188 = vld [vmem:[%s3159 + $0x70] sm:$0xf]
    %v3189 = vld [vmem:[%s3159 + $0x74] sm:$0xf]
    %v3190 = vld [vmem:[%s3159 + $0x78] sm:$0xf]
    %v3191 = vld [vmem:[%s3159 + $0x7c] sm:$0xf]
    %v3224 = vunpack.c.l.b16 %v3160
    %v3225 = vunpack.c.l.b16 %v3161
    %v3226 = vunpack.c.l.b16 %v3162
    %v3227 = vunpack.c.l.b16 %v3163
    %v3228 = vunpack.c.l.b16 %v3164
    %v3229 = vunpack.c.l.b16 %v3165
    %v3230 = vunpack.c.l.b16 %v3166
    %v3231 = vunpack.c.l.b16 %v3167
    %v3232 = vunpack.c.l.b16 %v3168
    %v3233 = vunpack.c.l.b16 %v3169
    %v3234 = vunpack.c.l.b16 %v3170
    %v3235 = vunpack.c.l.b16 %v3171
    %v3236 = vunpack.c.l.b16 %v3172
    %v3237 = vunpack.c.l.b16 %v3173
    %v3238 = vunpack.c.l.b16 %v3174
    %v3239 = vunpack.c.l.b16 %v3175
    %v3240 = vunpack.c.l.b16 %v3176
    %v3241 = vunpack.c.l.b16 %v3177
    %v3242 = vunpack.c.l.b16 %v3178
    %v3243 = vunpack.c.l.b16 %v3179
    %v3244 = vunpack.c.l.b16 %v3180
    %v3245 = vunpack.c.l.b16 %v3181
    %v3246 = vunpack.c.l.b16 %v3182
    %v3247 = vunpack.c.l.b16 %v3183
    %v3248 = vunpack.c.l.b16 %v3184
    %v3249 = vunpack.c.l.b16 %v3185
    %v3250 = vunpack.c.l.b16 %v3186
    %v3251 = vunpack.c.l.b16 %v3187
    %v3252 = vunpack.c.l.b16 %v3188
    %v3253 = vunpack.c.l.b16 %v3189
    %v3254 = vunpack.c.l.b16 %v3190
    %v3255 = vunpack.c.l.b16 %v3191
    %v3256 = vpack.c.b16 %v3225, %v3224
    %v3257 = vpack.c.b16 %v3227, %v3226
    %v3258 = vpack.c.b16 %v3229, %v3228
    %v3259 = vpack.c.b16 %v3231, %v3230
    %v3260 = vpack.c.b16 %v3233, %v3232
    %v3261 = vpack.c.b16 %v3235, %v3234
    %v3262 = vpack.c.b16 %v3237, %v3236
    %v3263 = vpack.c.b16 %v3239, %v3238
    %v3264 = vpack.c.b16 %v3241, %v3240
    %v3265 = vpack.c.b16 %v3243, %v3242
    %v3266 = vpack.c.b16 %v3245, %v3244
    %v3267 = vpack.c.b16 %v3247, %v3246
    %v3268 = vpack.c.b16 %v3249, %v3248
    %v3269 = vpack.c.b16 %v3251, %v3250
    %v3270 = vpack.c.b16 %v3253, %v3252
    %v3271 = vpack.c.b16 %v3255, %v3254
    %3288 = vmatprep.subr.bf16.mxu0 0
    %3289 = vmatpush1.bf16.msra.mxu0 %v3263
    %3290 = vmatprep.subr.bf16.mxu0 0
    %3291 = vmatpush1.bf16.msra.mxu0 %v3262
    %3292 = vmatprep.subr.bf16.mxu0 0
    %3293 = vmatpush1.bf16.msra.mxu0 %v3261
    %3294 = vmatprep.subr.bf16.mxu0 0
    %3295 = vmatpush1.bf16.msra.mxu0 %v3260
    %3296 = vmatprep.subr.bf16.mxu0 0
    %3297 = vmatpush1.bf16.msra.mxu0 %v3259
    %3298 = vmatprep.subr.bf16.mxu0 0
    %3299 = vmatpush1.bf16.msra.mxu0 %v3258
    %3300 = vmatprep.subr.bf16.mxu0 0
    %3301 = vmatpush1.bf16.msra.mxu0 %v3257
    %3302 = vmatprep.subr.bf16.mxu0 0
    %3303 = vmatpush1.bf16.msra.mxu0 %v3256
    %3304 = vmatprep.subr.bf16.mxu0 0
    %3305 = vmatpush2.bf16.msra.mxu0 %v3271
    %3306 = vmatprep.subr.bf16.mxu0 0
    %3307 = vmatpush2.bf16.msra.mxu0 %v3270
    %3308 = vmatprep.subr.bf16.mxu0 0
    %3309 = vmatpush2.bf16.msra.mxu0 %v3269
    %3310 = vmatprep.subr.bf16.mxu0 0
    %3311 = vmatpush2.bf16.msra.mxu0 %v3268
    %3312 = vmatprep.subr.bf16.mxu0 0
    %3313 = vmatpush2.bf16.msra.mxu0 %v3267
    %3314 = vmatprep.subr.bf16.mxu0 0
    %3315 = vmatpush2.bf16.msra.mxu0 %v3266
    %3316 = vmatprep.subr.bf16.mxu0 0
    %3317 = vmatpush2.bf16.msra.mxu0 %v3265
    %3318 = vmatprep.subr.bf16.mxu0 0
    %3319 = vmatpush2.bf16.msra.mxu0 %v3264
    %3320 = vmatprep.mubr.bf16.mxu0 %v3148
    %3321 = vmatmul.mubr.bf16.gmra.mxu0 %v3145
    %v3322 = vpop.f32.mrf.mxu0
    %v3323 = vadd.f32 0.0, %v3322
    %v3324 = vpop.f32.mrf.mxu0
    %v3325 = vpop.f32.mrf.mxu0
    %v3326 = vadd.f32 0.0, %v3325
    %v3327 = vpop.f32.mrf.mxu0
    %3328 = vmatprep.mubr.bf16.mxu0 %v3154
    %3329 = vmatmul.mubr.bf16.gmra.mxu0 %v3151
    %v3330 = vpop.f32.mrf.mxu0
    %v3331 = vadd.f32 0.0, %v3330
    %v3332 = vpop.f32.mrf.mxu0
    %v3333 = vpop.f32.mrf.mxu0
    %v3334 = vadd.f32 0.0, %v3333
    %v3335 = vpop.f32.mrf.mxu0
    %3336 = vdwg.mxu0
    %v3337 = vadd.f32 %v3121, %v3323
    %v3338 = vadd.f32 %v3124, %v3326
    %v3339 = vadd.f32 %v3129, %v3331
    %v3340 = vadd.f32 %v3132, %v3334
    %v3341 = vrot.slane %v2761, 1
    %v3342 = vrot.slane %v2763, 2
    %v3343 = vor.u32 %v3341, %v3342
    %v3344 = vshrl.u32 %v2722, 16
    %v3346 = vrot.slane %v3344, 1
    %v3347 = vrot.slane %v2768, 2
    %v3348 = vor.u32 %v3346, %v3347
    %v3349 = vsel %vm327, %v3343, %v3348
    %v3350 = vrot.slane %v2773, 1
    %v3351 = vrot.slane %v2775, 2
    %v3352 = vor.u32 %v3350, %v3351
    %v3353 = vshrl.u32 %v2723, 16
    %v3355 = vrot.slane %v3353, 1
    %v3356 = vrot.slane %v2780, 2
    %v3357 = vor.u32 %v3355, %v3356
    %v3358 = vsel %vm327, %v3352, %v3357
    %v3359 = vrot.slane %v2785, 1
    %v3360 = vrot.slane %v2787, 2
    %v3361 = vor.u32 %v3359, %v3360
    %v3362 = vshrl.u32 %v2726, 16
    %v3364 = vrot.slane %v3362, 1
    %v3365 = vrot.slane %v2792, 2
    %v3366 = vor.u32 %v3364, %v3365
    %v3367 = vsel %vm327, %v3361, %v3366
    %v3368 = vrot.slane %v2797, 1
    %v3369 = vrot.slane %v2799, 2
    %v3370 = vor.u32 %v3368, %v3369
    %v3371 = vshrl.u32 %v2727, 16
    %v3373 = vrot.slane %v3371, 1
    %v3374 = vrot.slane %v2804, 2
    %v3375 = vor.u32 %v3373, %v3374
    %v3376 = vsel %vm327, %v3370, %v3375
    %s3381 = scalar_lea.vmem %s13, 384
    %v3382 = vld [vmem:[%s3381] sm:$0xf]
    %v3383 = vld [vmem:[%s3381 + $0x4] sm:$0xf]
    %v3384 = vld [vmem:[%s3381 + $0x8] sm:$0xf]
    %v3385 = vld [vmem:[%s3381 + $0xc] sm:$0xf]
    %v3386 = vld [vmem:[%s3381 + $0x10] sm:$0xf]
    %v3387 = vld [vmem:[%s3381 + $0x14] sm:$0xf]
    %v3388 = vld [vmem:[%s3381 + $0x18] sm:$0xf]
    %v3389 = vld [vmem:[%s3381 + $0x1c] sm:$0xf]
    %v3390 = vld [vmem:[%s3381 + $0x20] sm:$0xf]
    %v3391 = vld [vmem:[%s3381 + $0x24] sm:$0xf]
    %v3392 = vld [vmem:[%s3381 + $0x28] sm:$0xf]
    %v3393 = vld [vmem:[%s3381 + $0x2c] sm:$0xf]
    %v3394 = vld [vmem:[%s3381 + $0x30] sm:$0xf]
    %v3395 = vld [vmem:[%s3381 + $0x34] sm:$0xf]
    %v3396 = vld [vmem:[%s3381 + $0x38] sm:$0xf]
    %v3397 = vld [vmem:[%s3381 + $0x3c] sm:$0xf]
    %v3398 = vld [vmem:[%s3381 + $0x40] sm:$0xf]
    %v3399 = vld [vmem:[%s3381 + $0x44] sm:$0xf]
    %v3400 = vld [vmem:[%s3381 + $0x48] sm:$0xf]
    %v3401 = vld [vmem:[%s3381 + $0x4c] sm:$0xf]
    %v3402 = vld [vmem:[%s3381 + $0x50] sm:$0xf]
    %v3403 = vld [vmem:[%s3381 + $0x54] sm:$0xf]
    %v3404 = vld [vmem:[%s3381 + $0x58] sm:$0xf]
    %v3405 = vld [vmem:[%s3381 + $0x5c] sm:$0xf]
    %v3406 = vld [vmem:[%s3381 + $0x60] sm:$0xf]
    %v3407 = vld [vmem:[%s3381 + $0x64] sm:$0xf]
    %v3408 = vld [vmem:[%s3381 + $0x68] sm:$0xf]
    %v3409 = vld [vmem:[%s3381 + $0x6c] sm:$0xf]
    %v3410 = vld [vmem:[%s3381 + $0x70] sm:$0xf]
    %v3411 = vld [vmem:[%s3381 + $0x74] sm:$0xf]
    %v3412 = vld [vmem:[%s3381 + $0x78] sm:$0xf]
    %v3413 = vld [vmem:[%s3381 + $0x7c] sm:$0xf]
    %v3446 = vunpack.c.l.b16 %v3382
    %v3447 = vunpack.c.l.b16 %v3383
    %v3448 = vunpack.c.l.b16 %v3384
    %v3449 = vunpack.c.l.b16 %v3385
    %v3450 = vunpack.c.l.b16 %v3386
    %v3451 = vunpack.c.l.b16 %v3387
    %v3452 = vunpack.c.l.b16 %v3388
    %v3453 = vunpack.c.l.b16 %v3389
    %v3454 = vunpack.c.l.b16 %v3390
    %v3455 = vunpack.c.l.b16 %v3391
    %v3456 = vunpack.c.l.b16 %v3392
    %v3457 = vunpack.c.l.b16 %v3393
    %v3458 = vunpack.c.l.b16 %v3394
    %v3459 = vunpack.c.l.b16 %v3395
    %v3460 = vunpack.c.l.b16 %v3396
    %v3461 = vunpack.c.l.b16 %v3397
    %v3462 = vunpack.c.l.b16 %v3398
    %v3463 = vunpack.c.l.b16 %v3399
    %v3464 = vunpack.c.l.b16 %v3400
    %v3465 = vunpack.c.l.b16 %v3401
    %v3466 = vunpack.c.l.b16 %v3402
    %v3467 = vunpack.c.l.b16 %v3403
    %v3468 = vunpack.c.l.b16 %v3404
    %v3469 = vunpack.c.l.b16 %v3405
    %v3470 = vunpack.c.l.b16 %v3406
    %v3471 = vunpack.c.l.b16 %v3407
    %v3472 = vunpack.c.l.b16 %v3408
    %v3473 = vunpack.c.l.b16 %v3409
    %v3474 = vunpack.c.l.b16 %v3410
    %v3475 = vunpack.c.l.b16 %v3411
    %v3476 = vunpack.c.l.b16 %v3412
    %v3477 = vunpack.c.l.b16 %v3413
    %v3478 = vpack.c.b16 %v3447, %v3446
    %v3479 = vpack.c.b16 %v3449, %v3448
    %v3480 = vpack.c.b16 %v3451, %v3450
    %v3481 = vpack.c.b16 %v3453, %v3452
    %v3482 = vpack.c.b16 %v3455, %v3454
    %v3483 = vpack.c.b16 %v3457, %v3456
    %v3484 = vpack.c.b16 %v3459, %v3458
    %v3485 = vpack.c.b16 %v3461, %v3460
    %v3486 = vpack.c.b16 %v3463, %v3462
    %v3487 = vpack.c.b16 %v3465, %v3464
    %v3488 = vpack.c.b16 %v3467, %v3466
    %v3489 = vpack.c.b16 %v3469, %v3468
    %v3490 = vpack.c.b16 %v3471, %v3470
    %v3491 = vpack.c.b16 %v3473, %v3472
    %v3492 = vpack.c.b16 %v3475, %v3474
    %v3493 = vpack.c.b16 %v3477, %v3476
    %3510 = vmatprep.subr.bf16.mxu0 0
    %3511 = vmatpush1.bf16.msra.mxu0 %v3485
    %3512 = vmatprep.subr.bf16.mxu0 0
    %3513 = vmatpush1.bf16.msra.mxu0 %v3484
    %3514 = vmatprep.subr.bf16.mxu0 0
    %3515 = vmatpush1.bf16.msra.mxu0 %v3483
    %3516 = vmatprep.subr.bf16.mxu0 0
    %3517 = vmatpush1.bf16.msra.mxu0 %v3482
    %3518 = vmatprep.subr.bf16.mxu0 0
    %3519 = vmatpush1.bf16.msra.mxu0 %v3481
    %3520 = vmatprep.subr.bf16.mxu0 0
    %3521 = vmatpush1.bf16.msra.mxu0 %v3480
    %3522 = vmatprep.subr.bf16.mxu0 0
    %3523 = vmatpush1.bf16.msra.mxu0 %v3479
    %3524 = vmatprep.subr.bf16.mxu0 0
    %3525 = vmatpush1.bf16.msra.mxu0 %v3478
    %3526 = vmatprep.subr.bf16.mxu0 0
    %3527 = vmatpush2.bf16.msra.mxu0 %v3493
    %3528 = vmatprep.subr.bf16.mxu0 0
    %3529 = vmatpush2.bf16.msra.mxu0 %v3492
    %3530 = vmatprep.subr.bf16.mxu0 0
    %3531 = vmatpush2.bf16.msra.mxu0 %v3491
    %3532 = vmatprep.subr.bf16.mxu0 0
    %3533 = vmatpush2.bf16.msra.mxu0 %v3490
    %3534 = vmatprep.subr.bf16.mxu0 0
    %3535 = vmatpush2.bf16.msra.mxu0 %v3489
    %3536 = vmatprep.subr.bf16.mxu0 0
    %3537 = vmatpush2.bf16.msra.mxu0 %v3488
    %3538 = vmatprep.subr.bf16.mxu0 0
    %3539 = vmatpush2.bf16.msra.mxu0 %v3487
    %3540 = vmatprep.subr.bf16.mxu0 0
    %3541 = vmatpush2.bf16.msra.mxu0 %v3486
    %3542 = vmatprep.mubr.bf16.mxu0 %v3358
    %3543 = vmatmul.mubr.bf16.gmra.mxu0 %v3349
    %v3544 = vpop.f32.mrf.mxu0
    %v3545 = vadd.f32 0.0, %v3544
    %v3546 = vpop.f32.mrf.mxu0
    %v3547 = vpop.f32.mrf.mxu0
    %v3548 = vadd.f32 0.0, %v3547
    %v3549 = vpop.f32.mrf.mxu0
    %3550 = vmatprep.mubr.bf16.mxu0 %v3376
    %3551 = vmatmul.mubr.bf16.gmra.mxu0 %v3367
    %v3552 = vpop.f32.mrf.mxu0
    %v3553 = vadd.f32 0.0, %v3552
    %v3554 = vpop.f32.mrf.mxu0
    %v3555 = vpop.f32.mrf.mxu0
    %v3556 = vadd.f32 0.0, %v3555
    %v3557 = vpop.f32.mrf.mxu0
    %3558 = vdwg.mxu0
    %v3559 = vadd.f32 %v3337, %v3545
    %v3560 = vadd.f32 %v3338, %v3548
    %v3561 = vadd.f32 %v3339, %v3553
    %v3562 = vadd.f32 %v3340, %v3556
    %v3563 = vrot.slane %v2720, 2
    %v3564 = vrot.slane %v2722, 2
    %v3565 = vsel %vm410, %v3563, %v3564
    %v3566 = vrot.slane %v2721, 2
    %v3567 = vrot.slane %v2723, 2
    %v3568 = vsel %vm410, %v3566, %v3567
    %v3569 = vrot.slane %v2724, 2
    %v3570 = vrot.slane %v2726, 2
    %v3571 = vsel %vm410, %v3569, %v3570
    %v3572 = vrot.slane %v2725, 2
    %v3573 = vrot.slane %v2727, 2
    %v3574 = vsel %vm410, %v3572, %v3573
    %s3579 = scalar_lea.vmem %s13, 512
    %v3580 = vld [vmem:[%s3579] sm:$0xf]
    %v3581 = vld [vmem:[%s3579 + $0x4] sm:$0xf]
    %v3582 = vld [vmem:[%s3579 + $0x8] sm:$0xf]
    %v3583 = vld [vmem:[%s3579 + $0xc] sm:$0xf]
    %v3584 = vld [vmem:[%s3579 + $0x10] sm:$0xf]
    %v3585 = vld [vmem:[%s3579 + $0x14] sm:$0xf]
    %v3586 = vld [vmem:[%s3579 + $0x18] sm:$0xf]
    %v3587 = vld [vmem:[%s3579 + $0x1c] sm:$0xf]
    %v3588 = vld [vmem:[%s3579 + $0x20] sm:$0xf]
    %v3589 = vld [vmem:[%s3579 + $0x24] sm:$0xf]
    %v3590 = vld [vmem:[%s3579 + $0x28] sm:$0xf]
    %v3591 = vld [vmem:[%s3579 + $0x2c] sm:$0xf]
    %v3592 = vld [vmem:[%s3579 + $0x30] sm:$0xf]
    %v3593 = vld [vmem:[%s3579 + $0x34] sm:$0xf]
    %v3594 = vld [vmem:[%s3579 + $0x38] sm:$0xf]
    %v3595 = vld [vmem:[%s3579 + $0x3c] sm:$0xf]
    %v3596 = vld [vmem:[%s3579 + $0x40] sm:$0xf]
    %v3597 = vld [vmem:[%s3579 + $0x44] sm:$0xf]
    %v3598 = vld [vmem:[%s3579 + $0x48] sm:$0xf]
    %v3599 = vld [vmem:[%s3579 + $0x4c] sm:$0xf]
    %v3600 = vld [vmem:[%s3579 + $0x50] sm:$0xf]
    %v3601 = vld [vmem:[%s3579 + $0x54] sm:$0xf]
    %v3602 = vld [vmem:[%s3579 + $0x58] sm:$0xf]
    %v3603 = vld [vmem:[%s3579 + $0x5c] sm:$0xf]
    %v3604 = vld [vmem:[%s3579 + $0x60] sm:$0xf]
    %v3605 = vld [vmem:[%s3579 + $0x64] sm:$0xf]
    %v3606 = vld [vmem:[%s3579 + $0x68] sm:$0xf]
    %v3607 = vld [vmem:[%s3579 + $0x6c] sm:$0xf]
    %v3608 = vld [vmem:[%s3579 + $0x70] sm:$0xf]
    %v3609 = vld [vmem:[%s3579 + $0x74] sm:$0xf]
    %v3610 = vld [vmem:[%s3579 + $0x78] sm:$0xf]
    %v3611 = vld [vmem:[%s3579 + $0x7c] sm:$0xf]
    %v3644 = vunpack.c.l.b16 %v3580
    %v3645 = vunpack.c.l.b16 %v3581
    %v3646 = vunpack.c.l.b16 %v3582
    %v3647 = vunpack.c.l.b16 %v3583
    %v3648 = vunpack.c.l.b16 %v3584
    %v3649 = vunpack.c.l.b16 %v3585
    %v3650 = vunpack.c.l.b16 %v3586
    %v3651 = vunpack.c.l.b16 %v3587
    %v3652 = vunpack.c.l.b16 %v3588
    %v3653 = vunpack.c.l.b16 %v3589
    %v3654 = vunpack.c.l.b16 %v3590
    %v3655 = vunpack.c.l.b16 %v3591
    %v3656 = vunpack.c.l.b16 %v3592
    %v3657 = vunpack.c.l.b16 %v3593
    %v3658 = vunpack.c.l.b16 %v3594
    %v3659 = vunpack.c.l.b16 %v3595
    %v3660 = vunpack.c.l.b16 %v3596
    %v3661 = vunpack.c.l.b16 %v3597
    %v3662 = vunpack.c.l.b16 %v3598
    %v3663 = vunpack.c.l.b16 %v3599
    %v3664 = vunpack.c.l.b16 %v3600
    %v3665 = vunpack.c.l.b16 %v3601
    %v3666 = vunpack.c.l.b16 %v3602
    %v3667 = vunpack.c.l.b16 %v3603
    %v3668 = vunpack.c.l.b16 %v3604
    %v3669 = vunpack.c.l.b16 %v3605
    %v3670 = vunpack.c.l.b16 %v3606
    %v3671 = vunpack.c.l.b16 %v3607
    %v3672 = vunpack.c.l.b16 %v3608
    %v3673 = vunpack.c.l.b16 %v3609
    %v3674 = vunpack.c.l.b16 %v3610
    %v3675 = vunpack.c.l.b16 %v3611
    %v3676 = vpack.c.b16 %v3645, %v3644
    %v3677 = vpack.c.b16 %v3647, %v3646
    %v3678 = vpack.c.b16 %v3649, %v3648
    %v3679 = vpack.c.b16 %v3651, %v3650
    %v3680 = vpack.c.b16 %v3653, %v3652
    %v3681 = vpack.c.b16 %v3655, %v3654
    %v3682 = vpack.c.b16 %v3657, %v3656
    %v3683 = vpack.c.b16 %v3659, %v3658
    %v3684 = vpack.c.b16 %v3661, %v3660
    %v3685 = vpack.c.b16 %v3663, %v3662
    %v3686 = vpack.c.b16 %v3665, %v3664
    %v3687 = vpack.c.b16 %v3667, %v3666
    %v3688 = vpack.c.b16 %v3669, %v3668
    %v3689 = vpack.c.b16 %v3671, %v3670
    %v3690 = vpack.c.b16 %v3673, %v3672
    %v3691 = vpack.c.b16 %v3675, %v3674
    %3708 = vmatprep.subr.bf16.mxu0 0
    %3709 = vmatpush1.bf16.msra.mxu0 %v3683
    %3710 = vmatprep.subr.bf16.mxu0 0
    %3711 = vmatpush1.bf16.msra.mxu0 %v3682
    %3712 = vmatprep.subr.bf16.mxu0 0
    %3713 = vmatpush1.bf16.msra.mxu0 %v3681
    %3714 = vmatprep.subr.bf16.mxu0 0
    %3715 = vmatpush1.bf16.msra.mxu0 %v3680
    %3716 = vmatprep.subr.bf16.mxu0 0
    %3717 = vmatpush1.bf16.msra.mxu0 %v3679
    %3718 = vmatprep.subr.bf16.mxu0 0
    %3719 = vmatpush1.bf16.msra.mxu0 %v3678
    %3720 = vmatprep.subr.bf16.mxu0 0
    %3721 = vmatpush1.bf16.msra.mxu0 %v3677
    %3722 = vmatprep.subr.bf16.mxu0 0
    %3723 = vmatpush1.bf16.msra.mxu0 %v3676
    %3724 = vmatprep.subr.bf16.mxu0 0
    %3725 = vmatpush2.bf16.msra.mxu0 %v3691
    %3726 = vmatprep.subr.bf16.mxu0 0
    %3727 = vmatpush2.bf16.msra.mxu0 %v3690
    %3728 = vmatprep.subr.bf16.mxu0 0
    %3729 = vmatpush2.bf16.msra.mxu0 %v3689
    %3730 = vmatprep.subr.bf16.mxu0 0
    %3731 = vmatpush2.bf16.msra.mxu0 %v3688
    %3732 = vmatprep.subr.bf16.mxu0 0
    %3733 = vmatpush2.bf16.msra.mxu0 %v3687
    %3734 = vmatprep.subr.bf16.mxu0 0
    %3735 = vmatpush2.bf16.msra.mxu0 %v3686
    %3736 = vmatprep.subr.bf16.mxu0 0
    %3737 = vmatpush2.bf16.msra.mxu0 %v3685
    %3738 = vmatprep.subr.bf16.mxu0 0
    %3739 = vmatpush2.bf16.msra.mxu0 %v3684
    %3740 = vmatprep.mubr.bf16.mxu0 %v3568
    %3741 = vmatmul.mubr.bf16.gmra.mxu0 %v3565
    %v3742 = vpop.f32.mrf.mxu0
    %v3743 = vadd.f32 0.0, %v3742
    %v3744 = vpop.f32.mrf.mxu0
    %v3745 = vpop.f32.mrf.mxu0
    %v3746 = vadd.f32 0.0, %v3745
    %v3747 = vpop.f32.mrf.mxu0
    %3748 = vmatprep.mubr.bf16.mxu0 %v3574
    %3749 = vmatmul.mubr.bf16.gmra.mxu0 %v3571
    %v3750 = vpop.f32.mrf.mxu0
    %v3751 = vadd.f32 0.0, %v3750
    %v3752 = vpop.f32.mrf.mxu0
    %v3753 = vpop.f32.mrf.mxu0
    %v3754 = vadd.f32 0.0, %v3753
    %v3755 = vpop.f32.mrf.mxu0
    %3756 = vdwg.mxu0
    %v3757 = vadd.f32 %v3559, %v3743
    %v3758 = vadd.f32 %v3560, %v3746
    %v3759 = vadd.f32 %v3561, %v3751
    %v3760 = vadd.f32 %v3562, %v3754
    %v3761 = vsel %vm481, %v3757, 0.0
    %v3762 = vsel %vm481, %v3758, 0.0
    %v3763 = vadd.f32 %v3761, %v3762
    %v3764 = vsel %vm481, %v3759, 0.0
    %v3765 = vadd.f32 %v3763, %v3764
    %v3766 = vsel %vm481, %v3760, 0.0
    %v3767 = vadd.f32 %v3765, %v3766
    %v3768 = vrot.slane %v3767, 4
    %v3769 = vadd.f32 %v3767, %v3768
    %v3770 = vrot.slane %v3769, 2
    %v3771 = vadd.f32 %v3769, %v3770
    %v3772 = vrot.slane %v3771, 1
    %v3773 = vadd.f32 %v3771, %v3772
    %v3774 = vmul.f32 %v3773, %v495
    %v3775 = vmul.f32 %v3757, %v3757
    %v3776 = vmul.f32 %v3758, %v3758
    %v3777 = vmul.f32 %v3759, %v3759
    %v3778 = vmul.f32 %v3760, %v3760
    %v3779 = vsel %vm481, %v3775, 0.0
    %v3780 = vsel %vm481, %v3776, 0.0
    %v3781 = vadd.f32 %v3779, %v3780
    %v3782 = vsel %vm481, %v3777, 0.0
    %v3783 = vadd.f32 %v3781, %v3782
    %v3784 = vsel %vm481, %v3778, 0.0
    %v3785 = vadd.f32 %v3783, %v3784
    %v3786 = vrot.slane %v3785, 4
    %v3787 = vadd.f32 %v3785, %v3786
    %v3788 = vrot.slane %v3787, 2
    %v3789 = vadd.f32 %v3787, %v3788
    %v3790 = vrot.slane %v3789, 1
    %v3791 = vadd.f32 %v3789, %v3790
    %v3792 = vmul.f32 %v3791, %v495
    %v3793 = vmul.f32 %v3774, %v3774
    %v3794 = vsub.f32 %v3792, %v3793
    %v3795 = vadd.f32 %v3794, 1e-05
    %v3796 = vrsqrt.pop %v3795
    %v3797 = vmul.f32 %v2678, %v3796
    %v3798 = vmul.f32 %v3774, %v3797
    %v3799 = vsub.f32 %v2679, %v3798
    %v3801 = vlaneseq
    %v3802 = vshrl.u32 %v3801, 7
    %v3803 = vsub.s32 0, %v3802
    %v3804 = vrot.slane %v3797, %v3803
    %v3806 = vmul.f32 %v3757, %v3804
    %v3807 = vmul.f32 %v3758, %v3804
    %v3808 = vmul.f32 %v3759, %v3804
    %v3809 = vmul.f32 %v3760, %v3804
    %v3811 = vlaneseq
    %v3812 = vshrl.u32 %v3811, 7
    %v3813 = vsub.s32 0, %v3812
    %v3814 = vrot.slane %v3799, %v3813
    %v3816 = vadd.f32 %v3806, %v3814
    %v3817 = vadd.f32 %v3807, %v3814
    %v3818 = vadd.f32 %v3808, %v3814
    %v3819 = vadd.f32 %v3809, %v3814
    %v3820 = vmul.f32 %v3816, 0.01
    %v3821 = vmul.f32 %v3817, 0.01
    %v3822 = vmul.f32 %v3818, 0.01
    %v3823 = vmul.f32 %v3819, 0.01
    %v3824 = vmax.f32 %v3816, %v3820
    %v3825 = vmax.f32 %v3817, %v3821
    %v3826 = vmax.f32 %v3818, %v3822
    %v3827 = vmax.f32 %v3819, %v3823
    %v3828 = vld [vmem:[%s16] sm:$0xf]
    %v3829 = vld [vmem:[%s16 + $0x4] sm:$0xf]
    %v3830 = vld [vmem:[%s16 + $0x8] sm:$0xf]
    %v3831 = vld [vmem:[%s16 + $0xc] sm:$0xf]
    %v3832 = vld [vmem:[%s17] sm:$0xf]
    %v3833 = vld [vmem:[%s17 + $0x4] sm:$0xf]
    %v3834 = vld [vmem:[%s17 + $0x8] sm:$0xf]
    %v3835 = vld [vmem:[%s17 + $0xc] sm:$0xf]
    %v3836 = vld [vmem:[%s18] sm:$0x1]
    %v3837 = vpack.c.bf16 %v3825, %v3824
    %v3838 = vpack.c.bf16 %v3827, %v3826
    %v3840 = vlaneseq
    %v3841 = vshrl.u32 %v3840, 7
    %v3842 = vsub.s32 0, %v3841
    %v3843 = vrot.slane %v3836, %v3842
    %v3849 = vunpack.c.l.b16 %v3828
    %v3850 = vunpack.c.l.b16 %v3829
    %v3851 = vunpack.c.l.b16 %v3830
    %v3852 = vunpack.c.l.b16 %v3831
    %v3853 = vpack.c.b16 %v3850, %v3849
    %v3854 = vpack.c.b16 %v3852, %v3851
    %v3858 = vsel %vm481, %v3837, 0
    %v3861 = vsel %vm481, %v3838, 0
    %3863 = vmatprep.subr.bf16.mxu0 0
    %3864 = vmatpush1.bf16.msra.mxu0 0
    %3865 = vmatprep.subr.bf16.mxu0 0
    %3866 = vmatpush1.bf16.msra.mxu0 0
    %3867 = vmatprep.subr.bf16.mxu0 0
    %3868 = vmatpush1.bf16.msra.mxu0 0
    %3869 = vmatprep.subr.bf16.mxu0 0
    %3870 = vmatpush1.bf16.msra.mxu0 0
    %3871 = vmatprep.subr.bf16.mxu0 0
    %3872 = vmatpush1.bf16.msra.mxu0 0
    %3873 = vmatprep.subr.bf16.mxu0 0
    %3874 = vmatpush1.bf16.msra.mxu0 0
    %3875 = vmatprep.subr.bf16.mxu0 0
    %3876 = vmatpush1.bf16.msra.mxu0 %v3854
    %3877 = vmatprep.subr.bf16.mxu0 0
    %3878 = vmatpush1.bf16.msra.mxu0 %v3853
    %3879 = vmatprep.subr.bf16.mxu0 0
    %3880 = vmatpush2.bf16.msra.mxu0 0
    %3881 = vmatprep.subr.bf16.mxu0 0
    %3882 = vmatpush2.bf16.msra.mxu0 0
    %3883 = vmatprep.subr.bf16.mxu0 0
    %3884 = vmatpush2.bf16.msra.mxu0 0
    %3885 = vmatprep.subr.bf16.mxu0 0
    %3886 = vmatpush2.bf16.msra.mxu0 0
    %3887 = vmatprep.subr.bf16.mxu0 0
    %3888 = vmatpush2.bf16.msra.mxu0 0
    %3889 = vmatprep.subr.bf16.mxu0 0
    %3890 = vmatpush2.bf16.msra.mxu0 0
    %3891 = vmatprep.subr.bf16.mxu0 0
    %3892 = vmatpush2.bf16.msra.mxu0 0
    %3893 = vmatprep.subr.bf16.mxu0 0
    %3894 = vmatpush2.bf16.msra.mxu0 0
    %3895 = vmatprep.mubr.bf16.mxu0 0
    %3896 = vmatmul.mubr.bf16.gmra.mxu0 %v3858
    %v3897 = vpop.f32.mrf.mxu0
    %v3898 = vadd.f32 %v3843, %v3897
    %v3899 = vpop.f32.mrf.mxu0
    %v3900 = vpop.f32.mrf.mxu0
    %v3901 = vadd.f32 %v3843, %v3900
    %v3902 = vpop.f32.mrf.mxu0
    %3903 = vmatprep.mubr.bf16.mxu0 0
    %3904 = vmatmul.mubr.bf16.gmra.mxu0 %v3861
    %v3905 = vpop.f32.mrf.mxu0
    %v3906 = vadd.f32 %v3843, %v3905
    %v3907 = vpop.f32.mrf.mxu0
    %v3908 = vpop.f32.mrf.mxu0
    %v3909 = vadd.f32 %v3843, %v3908
    %v3910 = vpop.f32.mrf.mxu0
    %3911 = vdwg.mxu0
    %v3916 = vunpack.c.l.b16 %v3832
    %v3917 = vunpack.c.l.b16 %v3833
    %v3918 = vunpack.c.l.b16 %v3834
    %v3919 = vunpack.c.l.b16 %v3835
    %v3920 = vpack.c.b16 %v3917, %v3916
    %v3921 = vpack.c.b16 %v3919, %v3918
    %v3925 = vsel %vm481, 0, 0
    %3927 = vmatprep.subr.bf16.mxu0 0
    %3928 = vmatpush1.bf16.msra.mxu0 0
    %3929 = vmatprep.subr.bf16.mxu0 0
    %3930 = vmatpush1.bf16.msra.mxu0 0
    %3931 = vmatprep.subr.bf16.mxu0 0
    %3932 = vmatpush1.bf16.msra.mxu0 0
    %3933 = vmatprep.subr.bf16.mxu0 0
    %3934 = vmatpush1.bf16.msra.mxu0 0
    %3935 = vmatprep.subr.bf16.mxu0 0
    %3936 = vmatpush1.bf16.msra.mxu0 0
    %3937 = vmatprep.subr.bf16.mxu0 0
    %3938 = vmatpush1.bf16.msra.mxu0 0
    %3939 = vmatprep.subr.bf16.mxu0 0
    %3940 = vmatpush1.bf16.msra.mxu0 %v3921
    %3941 = vmatprep.subr.bf16.mxu0 0
    %3942 = vmatpush1.bf16.msra.mxu0 %v3920
    %3943 = vmatprep.subr.bf16.mxu0 0
    %3944 = vmatpush2.bf16.msra.mxu0 0
    %3945 = vmatprep.subr.bf16.mxu0 0
    %3946 = vmatpush2.bf16.msra.mxu0 0
    %3947 = vmatprep.subr.bf16.mxu0 0
    %3948 = vmatpush2.bf16.msra.mxu0 0
    %3949 = vmatprep.subr.bf16.mxu0 0
    %3950 = vmatpush2.bf16.msra.mxu0 0
    %3951 = vmatprep.subr.bf16.mxu0 0
    %3952 = vmatpush2.bf16.msra.mxu0 0
    %3953 = vmatprep.subr.bf16.mxu0 0
    %3954 = vmatpush2.bf16.msra.mxu0 0
    %3955 = vmatprep.subr.bf16.mxu0 0
    %3956 = vmatpush2.bf16.msra.mxu0 0
    %3957 = vmatprep.subr.bf16.mxu0 0
    %3958 = vmatpush2.bf16.msra.mxu0 0
    %3959 = vmatprep.mubr.bf16.mxu0 0
    %3960 = vmatmul.mubr.bf16.gmra.mxu0 %v3925
    %v3961 = vpop.f32.mrf.mxu0
    %v3962 = vadd.f32 0.0, %v3961
    %v3963 = vpop.f32.mrf.mxu0
    %v3964 = vpop.f32.mrf.mxu0
    %v3965 = vpop.f32.mrf.mxu0
    %3966 = vdwg.mxu0
    %v3968 = vrot.slane %v3962, 1
    %v3971 = vadd.f32 %v3898, %v3962
    %v3972 = vadd.f32 %v3906, %v3968
    %v3973 = vxor.u32 %v3971, 2147483648
    %v3974 = vxor.u32 %v3972, 2147483648
    %v3975 = vmul.f32 %v3973, 1.442695
    %v3976 = vpow.pop %v3975
    %v3977 = vmul.f32 %v3974, 1.442695
    %v3978 = vpow.pop %v3977
    %v3979 = vadd.f32 %v3976, 1.0
    %v3980 = vadd.f32 %v3978, 1.0
    %v3981 = vrcp.pop %v3979
    %v3982 = vmul.f32 1.0, %v3981
    %v3983 = vrcp.pop %v3980
    %v3984 = vmul.f32 1.0, %v3983
    %v3985 = vtanh.pop %v3971
    %v3986 = vtanh.pop %v3972
    %v3987 = vmul.f32 %v3982, 0.0
    %v3988 = vmul.f32 %v3984, 0.0
    %3991 = vrot.lane.b32.xlu0 %v3985, 32
    %v3992 = vpop.permute.xlu0 %3991
    %3993 = vrot.lane.b32.xlu0 %v3986, 32
    %v3994 = vpop.permute.xlu0 %3993
    %v3997 = vmul.f32 %v3982, %v3992
    %v3998 = vmul.f32 %v3984, %v3994
    %4001 = vrot.lane.b32.xlu0 %v3997, 32
    %v4002 = vpop.permute.xlu0 %4001
    %4003 = vrot.lane.b32.xlu0 %v3998, 32
    %v4004 = vpop.permute.xlu0 %4003
    %v4007 = vadd.f32 %v3987, %v4002
    %v4008 = vadd.f32 %v3988, %v4004
    %v4009 = vtanh.pop %v4007
    %v4010 = vtanh.pop %v4008
    %4013 = vrot.lane.b32.xlu0 %v4009, 32
    %v4014 = vpop.permute.xlu0 %4013
    %4015 = vrot.lane.b32.xlu0 %v4010, 32
    %v4016 = vpop.permute.xlu0 %4015
    %v4019 = vmul.f32 %v3982, %v4014
    %v4020 = vmul.f32 %v3984, %v4016
    %4023 = vrot.lane.b32.xlu0 %v4019, 64
    %v4024 = vpop.permute.xlu0 %4023
    %4025 = vrot.lane.b32.xlu0 %v4020, 64
    %v4026 = vpop.permute.xlu0 %4025
    %vm4029 = vcmask 253952
    %4030 = vst.msk [vmem:[#allocation5] sm:$0x1] %vm4029, %v4024
    %4031 = vst.msk [vmem:[#allocation5 + $0x10] sm:$0x1] %vm4029, %v4026
    %v4032 = vpack.c.bf16 %v4019, %v4019
    %v4033 = vpack.c.bf16 %v4020, %v4020
    %v4036 = vunpack.c.l.b16 %v4032
    %v4037 = vunpack.c.l.b16 %v4033
    %v4038 = vrot.slane %v4037, 7
    %vm4039 = vcmask 1041409
    %v4040 = vsel %vm4039, %v4038, %v4036
    %v4041 = vpack.c.b16 %v4040, %v4040
    %4042 = vrot.lane.b32.xlu0 %v4041, 64
    %v4043 = vpop.permute.xlu0 %4042
    %v4045 = vsel %vm481, %v4043, 0
    %4047 = vmatprep.subr.bf16.mxu0 0
    %4048 = vmatpush1.bf16.msra.mxu0 0
    %4049 = vmatprep.subr.bf16.mxu0 0
    %4050 = vmatpush1.bf16.msra.mxu0 0
    %4051 = vmatprep.subr.bf16.mxu0 0
    %4052 = vmatpush1.bf16.msra.mxu0 0
    %4053 = vmatprep.subr.bf16.mxu0 0
    %4054 = vmatpush1.bf16.msra.mxu0 0
    %4055 = vmatprep.subr.bf16.mxu0 0
    %4056 = vmatpush1.bf16.msra.mxu0 0
    %4057 = vmatprep.subr.bf16.mxu0 0
    %4058 = vmatpush1.bf16.msra.mxu0 0
    %4059 = vmatprep.subr.bf16.mxu0 0
    %4060 = vmatpush1.bf16.msra.mxu0 %v3921
    %4061 = vmatprep.subr.bf16.mxu0 0
    %4062 = vmatpush1.bf16.msra.mxu0 %v3920
    %4063 = vmatprep.subr.bf16.mxu0 0
    %4064 = vmatpush2.bf16.msra.mxu0 0
    %4065 = vmatprep.subr.bf16.mxu0 0
    %4066 = vmatpush2.bf16.msra.mxu0 0
    %4067 = vmatprep.subr.bf16.mxu0 0
    %4068 = vmatpush2.bf16.msra.mxu0 0
    %4069 = vmatprep.subr.bf16.mxu0 0
    %4070 = vmatpush2.bf16.msra.mxu0 0
    %4071 = vmatprep.subr.bf16.mxu0 0
    %4072 = vmatpush2.bf16.msra.mxu0 0
    %4073 = vmatprep.subr.bf16.mxu0 0
    %4074 = vmatpush2.bf16.msra.mxu0 0
    %4075 = vmatprep.subr.bf16.mxu0 0
    %4076 = vmatpush2.bf16.msra.mxu0 0
    %4077 = vmatprep.subr.bf16.mxu0 0
    %4078 = vmatpush2.bf16.msra.mxu0 0
    %4079 = vmatprep.mubr.bf16.mxu0 0
    %4080 = vmatmul.mubr.bf16.gmra.mxu0 %v4045
    %v4081 = vpop.f32.mrf.mxu0
    %v4082 = vadd.f32 0.0, %v4081
    %v4083 = vpop.f32.mrf.mxu0
    %v4084 = vpop.f32.mrf.mxu0
    %v4085 = vpop.f32.mrf.mxu0
    %4086 = vdwg.mxu0
    %v4088 = vrot.slane %v4082, 7
    %v4091 = vadd.f32 %v3898, %v4088
    %v4092 = vadd.f32 %v3906, %v4082
    %v4093 = vxor.u32 %v4091, 2147483648
    %v4094 = vxor.u32 %v4092, 2147483648
    %v4095 = vmul.f32 %v4093, 1.442695
    %v4096 = vpow.pop %v4095
    %v4097 = vmul.f32 %v4094, 1.442695
    %v4098 = vpow.pop %v4097
    %v4099 = vadd.f32 %v4096, 1.0
    %v4100 = vadd.f32 %v4098, 1.0
    %v4101 = vrcp.pop %v4099
    %v4102 = vmul.f32 1.0, %v4101
    %v4103 = vrcp.pop %v4100
    %v4104 = vmul.f32 1.0, %v4103
    %v4105 = vtanh.pop %v4091
    %v4106 = vtanh.pop %v4092
    %v4109 = vrot.slane %v4007, 7
    %v4110 = vrot.slane %v4008, 7
    %v4113 = vmul.f32 %v4102, %v4109
    %v4114 = vmul.f32 %v4104, %v4110
    %4117 = vrot.lane.b32.xlu0 %v4105, 32
    %v4118 = vpop.permute.xlu0 %4117
    %4119 = vrot.lane.b32.xlu0 %v4106, 32
    %v4120 = vpop.permute.xlu0 %4119
    %v4123 = vmul.f32 %v4102, %v4118
    %v4124 = vmul.f32 %v4104, %v4120
    %4127 = vrot.lane.b32.xlu0 %v4123, 32
    %v4128 = vpop.permute.xlu0 %4127
    %4129 = vrot.lane.b32.xlu0 %v4124, 32
    %v4130 = vpop.permute.xlu0 %4129
    %v4133 = vadd.f32 %v4113, %v4128
    %v4134 = vadd.f32 %v4114, %v4130
    %v4135 = vtanh.pop %v4133
    %v4136 = vtanh.pop %v4134
    %4139 = vrot.lane.b32.xlu0 %v4135, 32
    %v4140 = vpop.permute.xlu0 %4139
    %4141 = vrot.lane.b32.xlu0 %v4136, 32
    %v4142 = vpop.permute.xlu0 %4141
    %v4145 = vmul.f32 %v4102, %v4140
    %v4146 = vmul.f32 %v4104, %v4142
    %4149 = vrot.lane.b32.xlu0 %v4145, 64
    %v4150 = vpop.permute.xlu0 %4149
    %4151 = vrot.lane.b32.xlu0 %v4146, 64
    %v4152 = vpop.permute.xlu0 %4151
    %vm4155 = vcmask 254977
    %4156 = vst.msk [vmem:[#allocation5] sm:$0x2] %vm4155, %v4150
    %4157 = vst.msk [vmem:[#allocation5 + $0x10] sm:$0x2] %vm4155, %v4152
    %v4158 = vpack.c.bf16 %v4145, %v4145
    %v4159 = vpack.c.bf16 %v4146, %v4146
    %v4162 = vunpack.c.l.b16 %v4158
    %v4163 = vunpack.c.l.b16 %v4159
    %v4164 = vrot.slane %v4162, 1
    %v4165 = vsel %vm4039, %v4163, %v4164
    %v4166 = vpack.c.b16 %v4165, %v4165
    %4167 = vrot.lane.b32.xlu0 %v4166, 64
    %v4168 = vpop.permute.xlu0 %4167
    %v4170 = vsel %vm481, %v4168, 0
    %4172 = vmatprep.subr.bf16.mxu0 0
    %4173 = vmatpush1.bf16.msra.mxu0 0
    %4174 = vmatprep.subr.bf16.mxu0 0
    %4175 = vmatpush1.bf16.msra.mxu0 0
    %4176 = vmatprep.subr.bf16.mxu0 0
    %4177 = vmatpush1.bf16.msra.mxu0 0
    %4178 = vmatprep.subr.bf16.mxu0 0
    %4179 = vmatpush1.bf16.msra.mxu0 0
    %4180 = vmatprep.subr.bf16.mxu0 0
    %4181 = vmatpush1.bf16.msra.mxu0 0
    %4182 = vmatprep.subr.bf16.mxu0 0
    %4183 = vmatpush1.bf16.msra.mxu0 0
    %4184 = vmatprep.subr.bf16.mxu0 0
    %4185 = vmatpush1.bf16.msra.mxu0 %v3921
    %4186 = vmatprep.subr.bf16.mxu0 0
    %4187 = vmatpush1.bf16.msra.mxu0 %v3920
    %4188 = vmatprep.subr.bf16.mxu0 0
    %4189 = vmatpush2.bf16.msra.mxu0 0
    %4190 = vmatprep.subr.bf16.mxu0 0
    %4191 = vmatpush2.bf16.msra.mxu0 0
    %4192 = vmatprep.subr.bf16.mxu0 0
    %4193 = vmatpush2.bf16.msra.mxu0 0
    %4194 = vmatprep.subr.bf16.mxu0 0
    %4195 = vmatpush2.bf16.msra.mxu0 0
    %4196 = vmatprep.subr.bf16.mxu0 0
    %4197 = vmatpush2.bf16.msra.mxu0 0
    %4198 = vmatprep.subr.bf16.mxu0 0
    %4199 = vmatpush2.bf16.msra.mxu0 0
    %4200 = vmatprep.subr.bf16.mxu0 0
    %4201 = vmatpush2.bf16.msra.mxu0 0
    %4202 = vmatprep.subr.bf16.mxu0 0
    %4203 = vmatpush2.bf16.msra.mxu0 0
    %4204 = vmatprep.mubr.bf16.mxu0 0
    %4205 = vmatmul.mubr.bf16.gmra.mxu0 %v4170
    %v4206 = vpop.f32.mrf.mxu0
    %v4207 = vadd.f32 0.0, %v4206
    %v4208 = vpop.f32.mrf.mxu0
    %v4209 = vpop.f32.mrf.mxu0
    %v4210 = vpop.f32.mrf.mxu0
    %4211 = vdwg.mxu0
    %v4213 = vrot.slane %v4207, 6
    %v4214 = vrot.slane %v4207, 7
    %v4217 = vadd.f32 %v3898, %v4213
    %v4218 = vadd.f32 %v3906, %v4214
    %v4219 = vxor.u32 %v4217, 2147483648
    %v4220 = vxor.u32 %v4218, 2147483648
    %v4221 = vmul.f32 %v4219, 1.442695
    %v4222 = vpow.pop %v4221
    %v4223 = vmul.f32 %v4220, 1.442695
    %v4224 = vpow.pop %v4223
    %v4225 = vadd.f32 %v4222, 1.0
    %v4226 = vadd.f32 %v4224, 1.0
    %v4227 = vrcp.pop %v4225
    %v4228 = vmul.f32 1.0, %v4227
    %v4229 = vrcp.pop %v4226
    %v4230 = vmul.f32 1.0, %v4229
    %v4231 = vtanh.pop %v4217
    %v4232 = vtanh.pop %v4218
    %v4235 = vrot.slane %v4133, 7
    %v4236 = vrot.slane %v4134, 7
    %v4239 = vmul.f32 %v4228, %v4235
    %v4240 = vmul.f32 %v4230, %v4236
    %4243 = vrot.lane.b32.xlu0 %v4231, 32
    %v4244 = vpop.permute.xlu0 %4243
    %4245 = vrot.lane.b32.xlu0 %v4232, 32
    %v4246 = vpop.permute.xlu0 %4245
    %v4249 = vmul.f32 %v4228, %v4244
    %v4250 = vmul.f32 %v4230, %v4246
    %4253 = vrot.lane.b32.xlu0 %v4249, 32
    %v4254 = vpop.permute.xlu0 %4253
    %4255 = vrot.lane.b32.xlu0 %v4250, 32
    %v4256 = vpop.permute.xlu0 %4255
    %v4259 = vadd.f32 %v4239, %v4254
    %v4260 = vadd.f32 %v4240, %v4256
    %v4261 = vtanh.pop %v4259
    %v4262 = vtanh.pop %v4260
    %4265 = vrot.lane.b32.xlu0 %v4261, 32
    %v4266 = vpop.permute.xlu0 %4265
    %4267 = vrot.lane.b32.xlu0 %v4262, 32
    %v4268 = vpop.permute.xlu0 %4267
    %v4271 = vmul.f32 %v4228, %v4266
    %v4272 = vmul.f32 %v4230, %v4268
    %4275 = vrot.lane.b32.xlu0 %v4271, 64
    %v4276 = vpop.permute.xlu0 %4275
    %4277 = vrot.lane.b32.xlu0 %v4272, 64
    %v4278 = vpop.permute.xlu0 %4277
    %vm4281 = vcmask 256002
    %4282 = vst.msk [vmem:[#allocation5] sm:$0x4] %vm4281, %v4276
    %4283 = vst.msk [vmem:[#allocation5 + $0x10] sm:$0x4] %vm4281, %v4278
    %v4284 = vpack.c.bf16 %v4271, %v4271
    %v4285 = vpack.c.bf16 %v4272, %v4272
    %v4288 = vunpack.c.l.b16 %v4284
    %v4289 = vunpack.c.l.b16 %v4285
    %v4290 = vrot.slane %v4288, 2
    %v4291 = vrot.slane %v4289, 1
    %v4292 = vsel %vm4039, %v4291, %v4290
    %v4293 = vpack.c.b16 %v4292, %v4292
    %4294 = vrot.lane.b32.xlu0 %v4293, 64
    %v4295 = vpop.permute.xlu0 %4294
    %v4297 = vsel %vm481, %v4295, 0
    %4299 = vmatprep.subr.bf16.mxu0 0
    %4300 = vmatpush1.bf16.msra.mxu0 0
    %4301 = vmatprep.subr.bf16.mxu0 0
    %4302 = vmatpush1.bf16.msra.mxu0 0
    %4303 = vmatprep.subr.bf16.mxu0 0
    %4304 = vmatpush1.bf16.msra.mxu0 0
    %4305 = vmatprep.subr.bf16.mxu0 0
    %4306 = vmatpush1.bf16.msra.mxu0 0
    %4307 = vmatprep.subr.bf16.mxu0 0
    %4308 = vmatpush1.bf16.msra.mxu0 0
    %4309 = vmatprep.subr.bf16.mxu0 0
    %4310 = vmatpush1.bf16.msra.mxu0 0
    %4311 = vmatprep.subr.bf16.mxu0 0
    %4312 = vmatpush1.bf16.msra.mxu0 %v3921
    %4313 = vmatprep.subr.bf16.mxu0 0
    %4314 = vmatpush1.bf16.msra.mxu0 %v3920
    %4315 = vmatprep.subr.bf16.mxu0 0
    %4316 = vmatpush2.bf16.msra.mxu0 0
    %4317 = vmatprep.subr.bf16.mxu0 0
    %4318 = vmatpush2.bf16.msra.mxu0 0
    %4319 = vmatprep.subr.bf16.mxu0 0
    %4320 = vmatpush2.bf16.msra.mxu0 0
    %4321 = vmatprep.subr.bf16.mxu0 0
    %4322 = vmatpush2.bf16.msra.mxu0 0
    %4323 = vmatprep.subr.bf16.mxu0 0
    %4324 = vmatpush2.bf16.msra.mxu0 0
    %4325 = vmatprep.subr.bf16.mxu0 0
    %4326 = vmatpush2.bf16.msra.mxu0 0
    %4327 = vmatprep.subr.bf16.mxu0 0
    %4328 = vmatpush2.bf16.msra.mxu0 0
    %4329 = vmatprep.subr.bf16.mxu0 0
    %4330 = vmatpush2.bf16.msra.mxu0 0
    %4331 = vmatprep.mubr.bf16.mxu0 0
    %4332 = vmatmul.mubr.bf16.gmra.mxu0 %v4297
    %v4333 = vpop.f32.mrf.mxu0
    %v4334 = vadd.f32 0.0, %v4333
    %v4335 = vpop.f32.mrf.mxu0
    %v4336 = vpop.f32.mrf.mxu0
    %v4337 = vpop.f32.mrf.mxu0
    %4338 = vdwg.mxu0
    %v4340 = vrot.slane %v4334, 5
    %v4341 = vrot.slane %v4334, 6
    %v4344 = vadd.f32 %v3898, %v4340
    %v4345 = vadd.f32 %v3906, %v4341
    %v4346 = vxor.u32 %v4344, 2147483648
    %v4347 = vxor.u32 %v4345, 2147483648
    %v4348 = vmul.f32 %v4346, 1.442695
    %v4349 = vpow.pop %v4348
    %v4350 = vmul.f32 %v4347, 1.442695
    %v4351 = vpow.pop %v4350
    %v4352 = vadd.f32 %v4349, 1.0
    %v4353 = vadd.f32 %v4351, 1.0
    %v4354 = vrcp.pop %v4352
    %v4355 = vmul.f32 1.0, %v4354
    %v4356 = vrcp.pop %v4353
    %v4357 = vmul.f32 1.0, %v4356
    %v4358 = vtanh.pop %v4344
    %v4359 = vtanh.pop %v4345
    %v4362 = vrot.slane %v4259, 7
    %v4363 = vrot.slane %v4260, 7
    %v4366 = vmul.f32 %v4355, %v4362
    %v4367 = vmul.f32 %v4357, %v4363
    %4370 = vrot.lane.b32.xlu0 %v4358, 32
    %v4371 = vpop.permute.xlu0 %4370
    %4372 = vrot.lane.b32.xlu0 %v4359, 32
    %v4373 = vpop.permute.xlu0 %4372
    %v4376 = vmul.f32 %v4355, %v4371
    %v4377 = vmul.f32 %v4357, %v4373
    %4380 = vrot.lane.b32.xlu0 %v4376, 32
    %v4381 = vpop.permute.xlu0 %4380
    %4382 = vrot.lane.b32.xlu0 %v4377, 32
    %v4383 = vpop.permute.xlu0 %4382
    %v4386 = vadd.f32 %v4366, %v4381
    %v4387 = vadd.f32 %v4367, %v4383
    %v4388 = vtanh.pop %v4386
    %v4389 = vtanh.pop %v4387
    %4392 = vrot.lane.b32.xlu0 %v4388, 32
    %v4393 = vpop.permute.xlu0 %4392
    %4394 = vrot.lane.b32.xlu0 %v4389, 32
    %v4395 = vpop.permute.xlu0 %4394
    %v4398 = vmul.f32 %v4355, %v4393
    %v4399 = vmul.f32 %v4357, %v4395
    %4402 = vrot.lane.b32.xlu0 %v4398, 64
    %v4403 = vpop.permute.xlu0 %4402
    %4404 = vrot.lane.b32.xlu0 %v4399, 64
    %v4405 = vpop.permute.xlu0 %4404
    %vm4408 = vcmask 257027
    %4409 = vst.msk [vmem:[#allocation5] sm:$0x8] %vm4408, %v4403
    %4410 = vst.msk [vmem:[#allocation5 + $0x10] sm:$0x8] %vm4408, %v4405
    %v4411 = vpack.c.bf16 %v4398, %v4398
    %v4412 = vpack.c.bf16 %v4399, %v4399
    %v4415 = vunpack.c.l.b16 %v4411
    %v4416 = vunpack.c.l.b16 %v4412
    %v4417 = vrot.slane %v4415, 3
    %v4418 = vrot.slane %v4416, 2
    %v4419 = vsel %vm4039, %v4418, %v4417
    %v4420 = vpack.c.b16 %v4419, %v4419
    %4421 = vrot.lane.b32.xlu0 %v4420, 64
    %v4422 = vpop.permute.xlu0 %4421
    %v4424 = vsel %vm481, %v4422, 0
    %4426 = vmatprep.subr.bf16.mxu0 0
    %4427 = vmatpush1.bf16.msra.mxu0 0
    %4428 = vmatprep.subr.bf16.mxu0 0
    %4429 = vmatpush1.bf16.msra.mxu0 0
    %4430 = vmatprep.subr.bf16.mxu0 0
    %4431 = vmatpush1.bf16.msra.mxu0 0
    %4432 = vmatprep.subr.bf16.mxu0 0
    %4433 = vmatpush1.bf16.msra.mxu0 0
    %4434 = vmatprep.subr.bf16.mxu0 0
    %4435 = vmatpush1.bf16.msra.mxu0 0
    %4436 = vmatprep.subr.bf16.mxu0 0
    %4437 = vmatpush1.bf16.msra.mxu0 0
    %4438 = vmatprep.subr.bf16.mxu0 0
    %4439 = vmatpush1.bf16.msra.mxu0 %v3921
    %4440 = vmatprep.subr.bf16.mxu0 0
    %4441 = vmatpush1.bf16.msra.mxu0 %v3920
    %4442 = vmatprep.subr.bf16.mxu0 0
    %4443 = vmatpush2.bf16.msra.mxu0 0
    %4444 = vmatprep.subr.bf16.mxu0 0
    %4445 = vmatpush2.bf16.msra.mxu0 0
    %4446 = vmatprep.subr.bf16.mxu0 0
    %4447 = vmatpush2.bf16.msra.mxu0 0
    %4448 = vmatprep.subr.bf16.mxu0 0
    %4449 = vmatpush2.bf16.msra.mxu0 0
    %4450 = vmatprep.subr.bf16.mxu0 0
    %4451 = vmatpush2.bf16.msra.mxu0 0
    %4452 = vmatprep.subr.bf16.mxu0 0
    %4453 = vmatpush2.bf16.msra.mxu0 0
    %4454 = vmatprep.subr.bf16.mxu0 0
    %4455 = vmatpush2.bf16.msra.mxu0 0
    %4456 = vmatprep.subr.bf16.mxu0 0
    %4457 = vmatpush2.bf16.msra.mxu0 0
    %4458 = vmatprep.mubr.bf16.mxu0 0
    %4459 = vmatmul.mubr.bf16.gmra.mxu0 %v4424
    %v4460 = vpop.f32.mrf.mxu0
    %v4461 = vadd.f32 0.0, %v4460
    %v4462 = vpop.f32.mrf.mxu0
    %v4463 = vpop.f32.mrf.mxu0
    %v4464 = vpop.f32.mrf.mxu0
    %4465 = vdwg.mxu0
    %v4467 = vrot.slane %v4461, 4
    %v4468 = vrot.slane %v4461, 5
    %v4471 = vadd.f32 %v3898, %v4467
    %v4472 = vadd.f32 %v3906, %v4468
    %v4473 = vxor.u32 %v4471, 2147483648
    %v4474 = vxor.u32 %v4472, 2147483648
    %v4475 = vmul.f32 %v4473, 1.442695
    %v4476 = vpow.pop %v4475
    %v4477 = vmul.f32 %v4474, 1.442695
    %v4478 = vpow.pop %v4477
    %v4479 = vadd.f32 %v4476, 1.0
    %v4480 = vadd.f32 %v4478, 1.0
    %v4481 = vrcp.pop %v4479
    %v4482 = vmul.f32 1.0, %v4481
    %v4483 = vrcp.pop %v4480
    %v4484 = vmul.f32 1.0, %v4483
    %v4485 = vtanh.pop %v4471
    %v4486 = vtanh.pop %v4472
    %v4489 = vrot.slane %v4386, 7
    %v4490 = vrot.slane %v4387, 7
    %v4493 = vmul.f32 %v4482, %v4489
    %v4494 = vmul.f32 %v4484, %v4490
    %4497 = vrot.lane.b32.xlu0 %v4485, 32
    %v4498 = vpop.permute.xlu0 %4497
    %4499 = vrot.lane.b32.xlu0 %v4486, 32
    %v4500 = vpop.permute.xlu0 %4499
    %v4503 = vmul.f32 %v4482, %v4498
    %v4504 = vmul.f32 %v4484, %v4500
    %4507 = vrot.lane.b32.xlu0 %v4503, 32
    %v4508 = vpop.permute.xlu0 %4507
    %4509 = vrot.lane.b32.xlu0 %v4504, 32
    %v4510 = vpop.permute.xlu0 %4509
    %v4513 = vadd.f32 %v4493, %v4508
    %v4514 = vadd.f32 %v4494, %v4510
    %v4515 = vtanh.pop %v4513
    %v4516 = vtanh.pop %v4514
    %4519 = vrot.lane.b32.xlu0 %v4515, 32
    %v4520 = vpop.permute.xlu0 %4519
    %4521 = vrot.lane.b32.xlu0 %v4516, 32
    %v4522 = vpop.permute.xlu0 %4521
    %v4525 = vmul.f32 %v4482, %v4520
    %v4526 = vmul.f32 %v4484, %v4522
    %4529 = vrot.lane.b32.xlu0 %v4525, 64
    %v4530 = vpop.permute.xlu0 %4529
    %4531 = vrot.lane.b32.xlu0 %v4526, 64
    %v4532 = vpop.permute.xlu0 %4531
    %vm4535 = vcmask 258052
    %4536 = vst.msk [vmem:[#allocation5] sm:$0x10] %vm4535, %v4530
    %4537 = vst.msk [vmem:[#allocation5 + $0x10] sm:$0x10] %vm4535, %v4532
    %v4538 = vpack.c.bf16 %v4525, %v4525
    %v4539 = vpack.c.bf16 %v4526, %v4526
    %v4542 = vunpack.c.l.b16 %v4538
    %v4543 = vunpack.c.l.b16 %v4539
    %v4544 = vrot.slane %v4542, 4
    %v4545 = vrot.slane %v4543, 3
    %v4546 = vsel %vm4039, %v4545, %v4544
    %v4547 = vpack.c.b16 %v4546, %v4546
    %4548 = vrot.lane.b32.xlu0 %v4547, 64
    %v4549 = vpop.permute.xlu0 %4548
    %v4551 = vsel %vm481, %v4549, 0
    %4553 = vmatprep.subr.bf16.mxu0 0
    %4554 = vmatpush1.bf16.msra.mxu0 0
    %4555 = vmatprep.subr.bf16.mxu0 0
    %4556 = vmatpush1.bf16.msra.mxu0 0
    %4557 = vmatprep.subr.bf16.mxu0 0
    %4558 = vmatpush1.bf16.msra.mxu0 0
    %4559 = vmatprep.subr.bf16.mxu0 0
    %4560 = vmatpush1.bf16.msra.mxu0 0
    %4561 = vmatprep.subr.bf16.mxu0 0
    %4562 = vmatpush1.bf16.msra.mxu0 0
    %4563 = vmatprep.subr.bf16.mxu0 0
    %4564 = vmatpush1.bf16.msra.mxu0 0
    %4565 = vmatprep.subr.bf16.mxu0 0
    %4566 = vmatpush1.bf16.msra.mxu0 %v3921
    %4567 = vmatprep.subr.bf16.mxu0 0
    %4568 = vmatpush1.bf16.msra.mxu0 %v3920
    %4569 = vmatprep.subr.bf16.mxu0 0
    %4570 = vmatpush2.bf16.msra.mxu0 0
    %4571 = vmatprep.subr.bf16.mxu0 0
    %4572 = vmatpush2.bf16.msra.mxu0 0
    %4573 = vmatprep.subr.bf16.mxu0 0
    %4574 = vmatpush2.bf16.msra.mxu0 0
    %4575 = vmatprep.subr.bf16.mxu0 0
    %4576 = vmatpush2.bf16.msra.mxu0 0
    %4577 = vmatprep.subr.bf16.mxu0 0
    %4578 = vmatpush2.bf16.msra.mxu0 0
    %4579 = vmatprep.subr.bf16.mxu0 0
    %4580 = vmatpush2.bf16.msra.mxu0 0
    %4581 = vmatprep.subr.bf16.mxu0 0
    %4582 = vmatpush2.bf16.msra.mxu0 0
    %4583 = vmatprep.subr.bf16.mxu0 0
    %4584 = vmatpush2.bf16.msra.mxu0 0
    %4585 = vmatprep.mubr.bf16.mxu0 0
    %4586 = vmatmul.mubr.bf16.gmra.mxu0 %v4551
    %v4587 = vpop.f32.mrf.mxu0
    %v4588 = vadd.f32 0.0, %v4587
    %v4589 = vpop.f32.mrf.mxu0
    %v4590 = vpop.f32.mrf.mxu0
    %v4591 = vpop.f32.mrf.mxu0
    %4592 = vdwg.mxu0
    %v4594 = vrot.slane %v4588, 3
    %v4595 = vrot.slane %v4588, 4
    %v4598 = vadd.f32 %v3898, %v4594
    %v4599 = vadd.f32 %v3906, %v4595
    %v4600 = vxor.u32 %v4598, 2147483648
    %v4601 = vxor.u32 %v4599, 2147483648
    %v4602 = vmul.f32 %v4600, 1.442695
    %v4603 = vpow.pop %v4602
    %v4604 = vmul.f32 %v4601, 1.442695
    %v4605 = vpow.pop %v4604
    %v4606 = vadd.f32 %v4603, 1.0
    %v4607 = vadd.f32 %v4605, 1.0
    %v4608 = vrcp.pop %v4606
    %v4609 = vmul.f32 1.0, %v4608
    %v4610 = vrcp.pop %v4607
    %v4611 = vmul.f32 1.0, %v4610
    %v4612 = vtanh.pop %v4598
    %v4613 = vtanh.pop %v4599
    %v4616 = vrot.slane %v4513, 7
    %v4617 = vrot.slane %v4514, 7
    %v4620 = vmul.f32 %v4609, %v4616
    %v4621 = vmul.f32 %v4611, %v4617
    %4624 = vrot.lane.b32.xlu0 %v4612, 32
    %v4625 = vpop.permute.xlu0 %4624
    %4626 = vrot.lane.b32.xlu0 %v4613, 32
    %v4627 = vpop.permute.xlu0 %4626
    %v4630 = vmul.f32 %v4609, %v4625
    %v4631 = vmul.f32 %v4611, %v4627
    %4634 = vrot.lane.b32.xlu0 %v4630, 32
    %v4635 = vpop.permute.xlu0 %4634
    %4636 = vrot.lane.b32.xlu0 %v4631, 32
    %v4637 = vpop.permute.xlu0 %4636
    %v4640 = vadd.f32 %v4620, %v4635
    %v4641 = vadd.f32 %v4621, %v4637
    %v4642 = vtanh.pop %v4640
    %v4643 = vtanh.pop %v4641
    %4646 = vrot.lane.b32.xlu0 %v4642, 32
    %v4647 = vpop.permute.xlu0 %4646
    %4648 = vrot.lane.b32.xlu0 %v4643, 32
    %v4649 = vpop.permute.xlu0 %4648
    %v4652 = vmul.f32 %v4609, %v4647
    %v4653 = vmul.f32 %v4611, %v4649
    %4656 = vrot.lane.b32.xlu0 %v4652, 64
    %v4657 = vpop.permute.xlu0 %4656
    %4658 = vrot.lane.b32.xlu0 %v4653, 64
    %v4659 = vpop.permute.xlu0 %4658
    %vm4662 = vcmask 259077
    %4663 = vst.msk [vmem:[#allocation5] sm:$0x20] %vm4662, %v4657
    %4664 = vst.msk [vmem:[#allocation5 + $0x10] sm:$0x20] %vm4662, %v4659
    %v4665 = vpack.c.bf16 %v4652, %v4652
    %v4666 = vpack.c.bf16 %v4653, %v4653
    %v4669 = vunpack.c.l.b16 %v4665
    %v4670 = vunpack.c.l.b16 %v4666
    %v4671 = vrot.slane %v4669, 5
    %v4672 = vrot.slane %v4670, 4
    %v4673 = vsel %vm4039, %v4672, %v4671
    %v4674 = vpack.c.b16 %v4673, %v4673
    %4675 = vrot.lane.b32.xlu0 %v4674, 64
    %v4676 = vpop.permute.xlu0 %4675
    %v4678 = vsel %vm481, %v4676, 0
    %4680 = vmatprep.subr.bf16.mxu0 0
    %4681 = vmatpush1.bf16.msra.mxu0 0
    %4682 = vmatprep.subr.bf16.mxu0 0
    %4683 = vmatpush1.bf16.msra.mxu0 0
    %4684 = vmatprep.subr.bf16.mxu0 0
    %4685 = vmatpush1.bf16.msra.mxu0 0
    %4686 = vmatprep.subr.bf16.mxu0 0
    %4687 = vmatpush1.bf16.msra.mxu0 0
    %4688 = vmatprep.subr.bf16.mxu0 0
    %4689 = vmatpush1.bf16.msra.mxu0 0
    %4690 = vmatprep.subr.bf16.mxu0 0
    %4691 = vmatpush1.bf16.msra.mxu0 0
    %4692 = vmatprep.subr.bf16.mxu0 0
    %4693 = vmatpush1.bf16.msra.mxu0 %v3921
    %4694 = vmatprep.subr.bf16.mxu0 0
    %4695 = vmatpush1.bf16.msra.mxu0 %v3920
    %4696 = vmatprep.subr.bf16.mxu0 0
    %4697 = vmatpush2.bf16.msra.mxu0 0
    %4698 = vmatprep.subr.bf16.mxu0 0
    %4699 = vmatpush2.bf16.msra.mxu0 0
    %4700 = vmatprep.subr.bf16.mxu0 0
    %4701 = vmatpush2.bf16.msra.mxu0 0
    %4702 = vmatprep.subr.bf16.mxu0 0
    %4703 = vmatpush2.bf16.msra.mxu0 0
    %4704 = vmatprep.subr.bf16.mxu0 0
    %4705 = vmatpush2.bf16.msra.mxu0 0
    %4706 = vmatprep.subr.bf16.mxu0 0
    %4707 = vmatpush2.bf16.msra.mxu0 0
    %4708 = vmatprep.subr.bf16.mxu0 0
    %4709 = vmatpush2.bf16.msra.mxu0 0
    %4710 = vmatprep.subr.bf16.mxu0 0
    %4711 = vmatpush2.bf16.msra.mxu0 0
    %4712 = vmatprep.mubr.bf16.mxu0 0
    %4713 = vmatmul.mubr.bf16.gmra.mxu0 %v4678
    %v4714 = vpop.f32.mrf.mxu0
    %v4715 = vadd.f32 0.0, %v4714
    %v4716 = vpop.f32.mrf.mxu0
    %v4717 = vpop.f32.mrf.mxu0
    %v4718 = vpop.f32.mrf.mxu0
    %4719 = vdwg.mxu0
    %v4721 = vrot.slane %v4715, 2
    %v4722 = vrot.slane %v4715, 3
    %v4725 = vadd.f32 %v3898, %v4721
    %v4726 = vadd.f32 %v3906, %v4722
    %v4727 = vxor.u32 %v4725, 2147483648
    %v4728 = vxor.u32 %v4726, 2147483648
    %v4729 = vmul.f32 %v4727, 1.442695
    %v4730 = vpow.pop %v4729
    %v4731 = vmul.f32 %v4728, 1.442695
    %v4732 = vpow.pop %v4731
    %v4733 = vadd.f32 %v4730, 1.0
    %v4734 = vadd.f32 %v4732, 1.0
    %v4735 = vrcp.pop %v4733
    %v4736 = vmul.f32 1.0, %v4735
    %v4737 = vrcp.pop %v4734
    %v4738 = vmul.f32 1.0, %v4737
    %v4739 = vtanh.pop %v4725
    %v4740 = vtanh.pop %v4726
    %v4743 = vrot.slane %v4640, 7
    %v4744 = vrot.slane %v4641, 7
    %v4747 = vmul.f32 %v4736, %v4743
    %v4748 = vmul.f32 %v4738, %v4744
    %4751 = vrot.lane.b32.xlu0 %v4739, 32
    %v4752 = vpop.permute.xlu0 %4751
    %4753 = vrot.lane.b32.xlu0 %v4740, 32
    %v4754 = vpop.permute.xlu0 %4753
    %v4757 = vmul.f32 %v4736, %v4752
    %v4758 = vmul.f32 %v4738, %v4754
    %4761 = vrot.lane.b32.xlu0 %v4757, 32
    %v4762 = vpop.permute.xlu0 %4761
    %4763 = vrot.lane.b32.xlu0 %v4758, 32
    %v4764 = vpop.permute.xlu0 %4763
    %v4767 = vadd.f32 %v4747, %v4762
    %v4768 = vadd.f32 %v4748, %v4764
    %v4769 = vtanh.pop %v4767
    %v4770 = vtanh.pop %v4768
    %4773 = vrot.lane.b32.xlu0 %v4769, 32
    %v4774 = vpop.permute.xlu0 %4773
    %4775 = vrot.lane.b32.xlu0 %v4770, 32
    %v4776 = vpop.permute.xlu0 %4775
    %v4779 = vmul.f32 %v4736, %v4774
    %v4780 = vmul.f32 %v4738, %v4776
    %4783 = vrot.lane.b32.xlu0 %v4779, 64
    %v4784 = vpop.permute.xlu0 %4783
    %4785 = vrot.lane.b32.xlu0 %v4780, 64
    %v4786 = vpop.permute.xlu0 %4785
    %vm4789 = vcmask 260102
    %4790 = vst.msk [vmem:[#allocation5] sm:$0x40] %vm4789, %v4784
    %4791 = vst.msk [vmem:[#allocation5 + $0x10] sm:$0x40] %vm4789, %v4786
    %v4792 = vpack.c.bf16 %v4779, %v4779
    %v4793 = vpack.c.bf16 %v4780, %v4780
    %v4796 = vunpack.c.l.b16 %v4792
    %v4797 = vunpack.c.l.b16 %v4793
    %v4798 = vrot.slane %v4796, 6
    %v4799 = vrot.slane %v4797, 5
    %v4800 = vsel %vm4039, %v4799, %v4798
    %v4801 = vpack.c.b16 %v4800, %v4800
    %4802 = vrot.lane.b32.xlu0 %v4801, 64
    %v4803 = vpop.permute.xlu0 %4802
    %v4805 = vsel %vm481, %v4803, 0
    %4807 = vmatprep.subr.bf16.mxu0 0
    %4808 = vmatpush1.bf16.msra.mxu0 0
    %4809 = vmatprep.subr.bf16.mxu0 0
    %4810 = vmatpush1.bf16.msra.mxu0 0
    %4811 = vmatprep.subr.bf16.mxu0 0
    %4812 = vmatpush1.bf16.msra.mxu0 0
    %4813 = vmatprep.subr.bf16.mxu0 0
    %4814 = vmatpush1.bf16.msra.mxu0 0
    %4815 = vmatprep.subr.bf16.mxu0 0
    %4816 = vmatpush1.bf16.msra.mxu0 0
    %4817 = vmatprep.subr.bf16.mxu0 0
    %4818 = vmatpush1.bf16.msra.mxu0 0
    %4819 = vmatprep.subr.bf16.mxu0 0
    %4820 = vmatpush1.bf16.msra.mxu0 %v3921
    %4821 = vmatprep.subr.bf16.mxu0 0
    %4822 = vmatpush1.bf16.msra.mxu0 %v3920
    %4823 = vmatprep.subr.bf16.mxu0 0
    %4824 = vmatpush2.bf16.msra.mxu0 0
    %4825 = vmatprep.subr.bf16.mxu0 0
    %4826 = vmatpush2.bf16.msra.mxu0 0
    %4827 = vmatprep.subr.bf16.mxu0 0
    %4828 = vmatpush2.bf16.msra.mxu0 0
    %4829 = vmatprep.subr.bf16.mxu0 0
    %4830 = vmatpush2.bf16.msra.mxu0 0
    %4831 = vmatprep.subr.bf16.mxu0 0
    %4832 = vmatpush2.bf16.msra.mxu0 0
    %4833 = vmatprep.subr.bf16.mxu0 0
    %4834 = vmatpush2.bf16.msra.mxu0 0
    %4835 = vmatprep.subr.bf16.mxu0 0
    %4836 = vmatpush2.bf16.msra.mxu0 0
    %4837 = vmatprep.subr.bf16.mxu0 0
    %4838 = vmatpush2.bf16.msra.mxu0 0
    %4839 = vmatprep.mubr.bf16.mxu0 0
    %4840 = vmatmul.mubr.bf16.gmra.mxu0 %v4805
    %v4841 = vpop.f32.mrf.mxu0
    %v4842 = vadd.f32 0.0, %v4841
    %v4843 = vpop.f32.mrf.mxu0
    %v4844 = vpop.f32.mrf.mxu0
    %v4845 = vpop.f32.mrf.mxu0
    %4846 = vdwg.mxu0
    %v4848 = vrot.slane %v4842, 1
    %v4849 = vrot.slane %v4842, 2
    %v4852 = vadd.f32 %v3898, %v4848
    %v4853 = vadd.f32 %v3906, %v4849
    %v4854 = vxor.u32 %v4852, 2147483648
    %v4855 = vxor.u32 %v4853, 2147483648
    %v4856 = vmul.f32 %v4854, 1.442695
    %v4857 = vpow.pop %v4856
    %v4858 = vmul.f32 %v4855, 1.442695
    %v4859 = vpow.pop %v4858
    %v4860 = vadd.f32 %v4857, 1.0
    %v4861 = vadd.f32 %v4859, 1.0
    %v4862 = vrcp.pop %v4860
    %v4863 = vmul.f32 1.0, %v4862
    %v4864 = vrcp.pop %v4861
    %v4865 = vmul.f32 1.0, %v4864
    %v4866 = vtanh.pop %v4852
    %v4867 = vtanh.pop %v4853
    %v4870 = vrot.slane %v4767, 7
    %v4871 = vrot.slane %v4768, 7
    %v4874 = vmul.f32 %v4863, %v4870
    %v4875 = vmul.f32 %v4865, %v4871
    %4878 = vrot.lane.b32.xlu0 %v4866, 32
    %v4879 = vpop.permute.xlu0 %4878
    %4880 = vrot.lane.b32.xlu0 %v4867, 32
    %v4881 = vpop.permute.xlu0 %4880
    %v4884 = vmul.f32 %v4863, %v4879
    %v4885 = vmul.f32 %v4865, %v4881
    %4888 = vrot.lane.b32.xlu0 %v4884, 32
    %v4889 = vpop.permute.xlu0 %4888
    %4890 = vrot.lane.b32.xlu0 %v4885, 32
    %v4891 = vpop.permute.xlu0 %4890
    %v4894 = vadd.f32 %v4874, %v4889
    %v4895 = vadd.f32 %v4875, %v4891
    %v4896 = vtanh.pop %v4894
    %v4897 = vtanh.pop %v4895
    %4900 = vrot.lane.b32.xlu0 %v4896, 32
    %v4901 = vpop.permute.xlu0 %4900
    %4902 = vrot.lane.b32.xlu0 %v4897, 32
    %v4903 = vpop.permute.xlu0 %4902
    %v4906 = vmul.f32 %v4863, %v4901
    %v4907 = vmul.f32 %v4865, %v4903
    %4910 = vrot.lane.b32.xlu0 %v4906, 64
    %v4911 = vpop.permute.xlu0 %4910
    %4912 = vrot.lane.b32.xlu0 %v4907, 64
    %v4913 = vpop.permute.xlu0 %4912
    %vm4916 = vcmask 261127
    %4917 = vst.msk [vmem:[#allocation5] sm:$0x80] %vm4916, %v4911
    %4918 = vst.msk [vmem:[#allocation5 + $0x10] sm:$0x80] %vm4916, %v4913
    %v4919 = vpack.c.bf16 %v4906, %v4906
    %v4920 = vpack.c.bf16 %v4907, %v4907
    %v4923 = vunpack.c.l.b16 %v4919
    %v4924 = vunpack.c.l.b16 %v4920
    %v4925 = vrot.slane %v4923, 7
    %v4926 = vrot.slane %v4924, 6
    %v4927 = vsel %vm4039, %v4926, %v4925
    %v4928 = vpack.c.b16 %v4927, %v4927
    %4929 = vrot.lane.b32.xlu0 %v4928, 64
    %v4930 = vpop.permute.xlu0 %4929
    %v4932 = vsel %vm481, %v4930, 0
    %4934 = vmatprep.subr.bf16.mxu0 0
    %4935 = vmatpush1.bf16.msra.mxu0 0
    %4936 = vmatprep.subr.bf16.mxu0 0
    %4937 = vmatpush1.bf16.msra.mxu0 0
    %4938 = vmatprep.subr.bf16.mxu0 0
    %4939 = vmatpush1.bf16.msra.mxu0 0
    %4940 = vmatprep.subr.bf16.mxu0 0
    %4941 = vmatpush1.bf16.msra.mxu0 0
    %4942 = vmatprep.subr.bf16.mxu0 0
    %4943 = vmatpush1.bf16.msra.mxu0 0
    %4944 = vmatprep.subr.bf16.mxu0 0
    %4945 = vmatpush1.bf16.msra.mxu0 0
    %4946 = vmatprep.subr.bf16.mxu0 0
    %4947 = vmatpush1.bf16.msra.mxu0 %v3921
    %4948 = vmatprep.subr.bf16.mxu0 0
    %4949 = vmatpush1.bf16.msra.mxu0 %v3920
    %4950 = vmatprep.subr.bf16.mxu0 0
    %4951 = vmatpush2.bf16.msra.mxu0 0
    %4952 = vmatprep.subr.bf16.mxu0 0
    %4953 = vmatpush2.bf16.msra.mxu0 0
    %4954 = vmatprep.subr.bf16.mxu0 0
    %4955 = vmatpush2.bf16.msra.mxu0 0
    %4956 = vmatprep.subr.bf16.mxu0 0
    %4957 = vmatpush2.bf16.msra.mxu0 0
    %4958 = vmatprep.subr.bf16.mxu0 0
    %4959 = vmatpush2.bf16.msra.mxu0 0
    %4960 = vmatprep.subr.bf16.mxu0 0
    %4961 = vmatpush2.bf16.msra.mxu0 0
    %4962 = vmatprep.subr.bf16.mxu0 0
    %4963 = vmatpush2.bf16.msra.mxu0 0
    %4964 = vmatprep.subr.bf16.mxu0 0
    %4965 = vmatpush2.bf16.msra.mxu0 0
    %4966 = vmatprep.mubr.bf16.mxu0 0
    %4967 = vmatmul.mubr.bf16.gmra.mxu0 %v4932
    %v4968 = vpop.f32.mrf.mxu0
    %v4969 = vadd.f32 0.0, %v4968
    %v4970 = vpop.f32.mrf.mxu0
    %v4971 = vpop.f32.mrf.mxu0
    %v4972 = vpop.f32.mrf.mxu0
    %4973 = vdwg.mxu0
    %v4975 = vrot.slane %v4969, 1
    %v4978 = vadd.f32 %v3901, %v4969
    %v4979 = vadd.f32 %v3909, %v4975
    %v4980 = vxor.u32 %v4978, 2147483648
    %v4981 = vxor.u32 %v4979, 2147483648
    %v4982 = vmul.f32 %v4980, 1.442695
    %v4983 = vpow.pop %v4982
    %v4984 = vmul.f32 %v4981, 1.442695
    %v4985 = vpow.pop %v4984
    %v4986 = vadd.f32 %v4983, 1.0
    %v4987 = vadd.f32 %v4985, 1.0
    %v4988 = vrcp.pop %v4986
    %v4989 = vmul.f32 1.0, %v4988
    %v4990 = vrcp.pop %v4987
    %v4991 = vmul.f32 1.0, %v4990
    %v4992 = vtanh.pop %v4978
    %v4993 = vtanh.pop %v4979
    %v4996 = vrot.slane %v4894, 7
    %v4997 = vrot.slane %v4895, 7
    %v5000 = vmul.f32 %v4989, %v4996
    %v5001 = vmul.f32 %v4991, %v4997
    %5004 = vrot.lane.b32.xlu0 %v4992, 32
    %v5005 = vpop.permute.xlu0 %5004
    %5006 = vrot.lane.b32.xlu0 %v4993, 32
    %v5007 = vpop.permute.xlu0 %5006
    %v5010 = vmul.f32 %v4989, %v5005
    %v5011 = vmul.f32 %v4991, %v5007
    %5014 = vrot.lane.b32.xlu0 %v5010, 32
    %v5015 = vpop.permute.xlu0 %5014
    %5016 = vrot.lane.b32.xlu0 %v5011, 32
    %v5017 = vpop.permute.xlu0 %5016
    %v5020 = vadd.f32 %v5000, %v5015
    %v5021 = vadd.f32 %v5001, %v5017
    %v5022 = vtanh.pop %v5020
    %v5023 = vtanh.pop %v5021
    %5026 = vrot.lane.b32.xlu0 %v5022, 32
    %v5027 = vpop.permute.xlu0 %5026
    %5028 = vrot.lane.b32.xlu0 %v5023, 32
    %v5029 = vpop.permute.xlu0 %5028
    %v5032 = vmul.f32 %v4989, %v5027
    %v5033 = vmul.f32 %v4991, %v5029
    %5036 = vrot.lane.b32.xlu0 %v5032, 64
    %v5037 = vpop.permute.xlu0 %5036
    %5038 = vrot.lane.b32.xlu0 %v5033, 64
    %v5039 = vpop.permute.xlu0 %5038
    %5042 = vst.msk [vmem:[#allocation5 + $0x8] sm:$0x1] %vm4029, %v5037
    %5043 = vst.msk [vmem:[#allocation5 + $0x18] sm:$0x1] %vm4029, %v5039
    %v5044 = vpack.c.bf16 %v5032, %v5032
    %v5045 = vpack.c.bf16 %v5033, %v5033
    %v5048 = vunpack.c.l.b16 %v5044
    %v5049 = vunpack.c.l.b16 %v5045
    %v5050 = vrot.slane %v5049, 7
    %v5051 = vsel %vm4039, %v5050, %v5048
    %v5052 = vpack.c.b16 %v5051, %v5051
    %5053 = vrot.lane.b32.xlu0 %v5052, 64
    %v5054 = vpop.permute.xlu0 %5053
    %v5056 = vsel %vm481, %v5054, 0
    %5058 = vmatprep.subr.bf16.mxu0 0
    %5059 = vmatpush1.bf16.msra.mxu0 0
    %5060 = vmatprep.subr.bf16.mxu0 0
    %5061 = vmatpush1.bf16.msra.mxu0 0
    %5062 = vmatprep.subr.bf16.mxu0 0
    %5063 = vmatpush1.bf16.msra.mxu0 0
    %5064 = vmatprep.subr.bf16.mxu0 0
    %5065 = vmatpush1.bf16.msra.mxu0 0
    %5066 = vmatprep.subr.bf16.mxu0 0
    %5067 = vmatpush1.bf16.msra.mxu0 0
    %5068 = vmatprep.subr.bf16.mxu0 0
    %5069 = vmatpush1.bf16.msra.mxu0 0
    %5070 = vmatprep.subr.bf16.mxu0 0
    %5071 = vmatpush1.bf16.msra.mxu0 %v3921
    %5072 = vmatprep.subr.bf16.mxu0 0
    %5073 = vmatpush1.bf16.msra.mxu0 %v3920
    %5074 = vmatprep.subr.bf16.mxu0 0
    %5075 = vmatpush2.bf16.msra.mxu0 0
    %5076 = vmatprep.subr.bf16.mxu0 0
    %5077 = vmatpush2.bf16.msra.mxu0 0
    %5078 = vmatprep.subr.bf16.mxu0 0
    %5079 = vmatpush2.bf16.msra.mxu0 0
    %5080 = vmatprep.subr.bf16.mxu0 0
    %5081 = vmatpush2.bf16.msra.mxu0 0
    %5082 = vmatprep.subr.bf16.mxu0 0
    %5083 = vmatpush2.bf16.msra.mxu0 0
    %5084 = vmatprep.subr.bf16.mxu0 0
    %5085 = vmatpush2.bf16.msra.mxu0 0
    %5086 = vmatprep.subr.bf16.mxu0 0
    %5087 = vmatpush2.bf16.msra.mxu0 0
    %5088 = vmatprep.subr.bf16.mxu0 0
    %5089 = vmatpush2.bf16.msra.mxu0 0
    %5090 = vmatprep.mubr.bf16.mxu0 0
    %5091 = vmatmul.mubr.bf16.gmra.mxu0 %v5056
    %v5092 = vpop.f32.mrf.mxu0
    %v5093 = vadd.f32 0.0, %v5092
    %v5094 = vpop.f32.mrf.mxu0
    %v5095 = vpop.f32.mrf.mxu0
    %v5096 = vpop.f32.mrf.mxu0
    %5097 = vdwg.mxu0
    %v5099 = vrot.slane %v5093, 7
    %v5102 = vadd.f32 %v3901, %v5099
    %v5103 = vadd.f32 %v3909, %v5093
    %v5104 = vxor.u32 %v5102, 2147483648
    %v5105 = vxor.u32 %v5103, 2147483648
    %v5106 = vmul.f32 %v5104, 1.442695
    %v5107 = vpow.pop %v5106
    %v5108 = vmul.f32 %v5105, 1.442695
    %v5109 = vpow.pop %v5108
    %v5110 = vadd.f32 %v5107, 1.0
    %v5111 = vadd.f32 %v5109, 1.0
    %v5112 = vrcp.pop %v5110
    %v5113 = vmul.f32 1.0, %v5112
    %v5114 = vrcp.pop %v5111
    %v5115 = vmul.f32 1.0, %v5114
    %v5116 = vtanh.pop %v5102
    %v5117 = vtanh.pop %v5103
    %v5120 = vrot.slane %v5020, 7
    %v5121 = vrot.slane %v5021, 7
    %v5124 = vmul.f32 %v5113, %v5120
    %v5125 = vmul.f32 %v5115, %v5121
    %5128 = vrot.lane.b32.xlu0 %v5116, 32
    %v5129 = vpop.permute.xlu0 %5128
    %5130 = vrot.lane.b32.xlu0 %v5117, 32
    %v5131 = vpop.permute.xlu0 %5130
    %v5134 = vmul.f32 %v5113, %v5129
    %v5135 = vmul.f32 %v5115, %v5131
    %5138 = vrot.lane.b32.xlu0 %v5134, 32
    %v5139 = vpop.permute.xlu0 %5138
    %5140 = vrot.lane.b32.xlu0 %v5135, 32
    %v5141 = vpop.permute.xlu0 %5140
    %v5144 = vadd.f32 %v5124, %v5139
    %v5145 = vadd.f32 %v5125, %v5141
    %v5146 = vtanh.pop %v5144
    %v5147 = vtanh.pop %v5145
    %5150 = vrot.lane.b32.xlu0 %v5146, 32
    %v5151 = vpop.permute.xlu0 %5150
    %5152 = vrot.lane.b32.xlu0 %v5147, 32
    %v5153 = vpop.permute.xlu0 %5152
    %v5156 = vmul.f32 %v5113, %v5151
    %v5157 = vmul.f32 %v5115, %v5153
    %5160 = vrot.lane.b32.xlu0 %v5156, 64
    %v5161 = vpop.permute.xlu0 %5160
    %5162 = vrot.lane.b32.xlu0 %v5157, 64
    %v5163 = vpop.permute.xlu0 %5162
    %5166 = vst.msk [vmem:[#allocation5 + $0x8] sm:$0x2] %vm4155, %v5161
    %5167 = vst.msk [vmem:[#allocation5 + $0x18] sm:$0x2] %vm4155, %v5163
    %v5168 = vpack.c.bf16 %v5156, %v5156
    %v5169 = vpack.c.bf16 %v5157, %v5157
    %v5172 = vunpack.c.l.b16 %v5168
    %v5173 = vunpack.c.l.b16 %v5169
    %v5174 = vrot.slane %v5172, 1
    %v5175 = vsel %vm4039, %v5173, %v5174
    %v5176 = vpack.c.b16 %v5175, %v5175
    %5177 = vrot.lane.b32.xlu0 %v5176, 64
    %v5178 = vpop.permute.xlu0 %5177
    %v5180 = vsel %vm481, %v5178, 0
    %5182 = vmatprep.subr.bf16.mxu0 0
    %5183 = vmatpush1.bf16.msra.mxu0 0
    %5184 = vmatprep.subr.bf16.mxu0 0
    %5185 = vmatpush1.bf16.msra.mxu0 0
    %5186 = vmatprep.subr.bf16.mxu0 0
    %5187 = vmatpush1.bf16.msra.mxu0 0
    %5188 = vmatprep.subr.bf16.mxu0 0
    %5189 = vmatpush1.bf16.msra.mxu0 0
    %5190 = vmatprep.subr.bf16.mxu0 0
    %5191 = vmatpush1.bf16.msra.mxu0 0
    %5192 = vmatprep.subr.bf16.mxu0 0
    %5193 = vmatpush1.bf16.msra.mxu0 0
    %5194 = vmatprep.subr.bf16.mxu0 0
    %5195 = vmatpush1.bf16.msra.mxu0 %v3921
    %5196 = vmatprep.subr.bf16.mxu0 0
    %5197 = vmatpush1.bf16.msra.mxu0 %v3920
    %5198 = vmatprep.subr.bf16.mxu0 0
    %5199 = vmatpush2.bf16.msra.mxu0 0
    %5200 = vmatprep.subr.bf16.mxu0 0
    %5201 = vmatpush2.bf16.msra.mxu0 0
    %5202 = vmatprep.subr.bf16.mxu0 0
    %5203 = vmatpush2.bf16.msra.mxu0 0
    %5204 = vmatprep.subr.bf16.mxu0 0
    %5205 = vmatpush2.bf16.msra.mxu0 0
    %5206 = vmatprep.subr.bf16.mxu0 0
    %5207 = vmatpush2.bf16.msra.mxu0 0
    %5208 = vmatprep.subr.bf16.mxu0 0
    %5209 = vmatpush2.bf16.msra.mxu0 0
    %5210 = vmatprep.subr.bf16.mxu0 0
    %5211 = vmatpush2.bf16.msra.mxu0 0
    %5212 = vmatprep.subr.bf16.mxu0 0
    %5213 = vmatpush2.bf16.msra.mxu0 0
    %5214 = vmatprep.mubr.bf16.mxu0 0
    %5215 = vmatmul.mubr.bf16.gmra.mxu0 %v5180
    %v5216 = vpop.f32.mrf.mxu0
    %v5217 = vadd.f32 0.0, %v5216
    %v5218 = vpop.f32.mrf.mxu0
    %v5219 = vpop.f32.mrf.mxu0
    %v5220 = vpop.f32.mrf.mxu0
    %5221 = vdwg.mxu0
    %v5223 = vrot.slane %v5217, 6
    %v5224 = vrot.slane %v5217, 7
    %v5227 = vadd.f32 %v3901, %v5223
    %v5228 = vadd.f32 %v3909, %v5224
    %v5229 = vxor.u32 %v5227, 2147483648
    %v5230 = vxor.u32 %v5228, 2147483648
    %v5231 = vmul.f32 %v5229, 1.442695
    %v5232 = vpow.pop %v5231
    %v5233 = vmul.f32 %v5230, 1.442695
    %v5234 = vpow.pop %v5233
    %v5235 = vadd.f32 %v5232, 1.0
    %v5236 = vadd.f32 %v5234, 1.0
    %v5237 = vrcp.pop %v5235
    %v5238 = vmul.f32 1.0, %v5237
    %v5239 = vrcp.pop %v5236
    %v5240 = vmul.f32 1.0, %v5239
    %v5241 = vtanh.pop %v5227
    %v5242 = vtanh.pop %v5228
    %v5245 = vrot.slane %v5144, 7
    %v5246 = vrot.slane %v5145, 7
    %v5249 = vmul.f32 %v5238, %v5245
    %v5250 = vmul.f32 %v5240, %v5246
    %5253 = vrot.lane.b32.xlu0 %v5241, 32
    %v5254 = vpop.permute.xlu0 %5253
    %5255 = vrot.lane.b32.xlu0 %v5242, 32
    %v5256 = vpop.permute.xlu0 %5255
    %v5259 = vmul.f32 %v5238, %v5254
    %v5260 = vmul.f32 %v5240, %v5256
    %5263 = vrot.lane.b32.xlu0 %v5259, 32
    %v5264 = vpop.permute.xlu0 %5263
    %5265 = vrot.lane.b32.xlu0 %v5260, 32
    %v5266 = vpop.permute.xlu0 %5265
    %v5269 = vadd.f32 %v5249, %v5264
    %v5270 = vadd.f32 %v5250, %v5266
    %v5271 = vtanh.pop %v5269
    %v5272 = vtanh.pop %v5270
    %5275 = vrot.lane.b32.xlu0 %v5271, 32
    %v5276 = vpop.permute.xlu0 %5275
    %5277 = vrot.lane.b32.xlu0 %v5272, 32
    %v5278 = vpop.permute.xlu0 %5277
    %v5281 = vmul.f32 %v5238, %v5276
    %v5282 = vmul.f32 %v5240, %v5278
    %5285 = vrot.lane.b32.xlu0 %v5281, 64
    %v5286 = vpop.permute.xlu0 %5285
    %5287 = vrot.lane.b32.xlu0 %v5282, 64
    %v5288 = vpop.permute.xlu0 %5287
    %5291 = vst.msk [vmem:[#allocation5 + $0x8] sm:$0x4] %vm4281, %v5286
    %5292 = vst.msk [vmem:[#allocation5 + $0x18] sm:$0x4] %vm4281, %v5288
    %v5293 = vpack.c.bf16 %v5281, %v5281
    %v5294 = vpack.c.bf16 %v5282, %v5282
    %v5297 = vunpack.c.l.b16 %v5293
    %v5298 = vunpack.c.l.b16 %v5294
    %v5299 = vrot.slane %v5297, 2
    %v5300 = vrot.slane %v5298, 1
    %v5301 = vsel %vm4039, %v5300, %v5299
    %v5302 = vpack.c.b16 %v5301, %v5301
    %5303 = vrot.lane.b32.xlu0 %v5302, 64
    %v5304 = vpop.permute.xlu0 %5303
    %v5306 = vsel %vm481, %v5304, 0
    %5308 = vmatprep.subr.bf16.mxu0 0
    %5309 = vmatpush1.bf16.msra.mxu0 0
    %5310 = vmatprep.subr.bf16.mxu0 0
    %5311 = vmatpush1.bf16.msra.mxu0 0
    %5312 = vmatprep.subr.bf16.mxu0 0
    %5313 = vmatpush1.bf16.msra.mxu0 0
    %5314 = vmatprep.subr.bf16.mxu0 0
    %5315 = vmatpush1.bf16.msra.mxu0 0
    %5316 = vmatprep.subr.bf16.mxu0 0
    %5317 = vmatpush1.bf16.msra.mxu0 0
    %5318 = vmatprep.subr.bf16.mxu0 0
    %5319 = vmatpush1.bf16.msra.mxu0 0
    %5320 = vmatprep.subr.bf16.mxu0 0
    %5321 = vmatpush1.bf16.msra.mxu0 %v3921
    %5322 = vmatprep.subr.bf16.mxu0 0
    %5323 = vmatpush1.bf16.msra.mxu0 %v3920
    %5324 = vmatprep.subr.bf16.mxu0 0
    %5325 = vmatpush2.bf16.msra.mxu0 0
    %5326 = vmatprep.subr.bf16.mxu0 0
    %5327 = vmatpush2.bf16.msra.mxu0 0
    %5328 = vmatprep.subr.bf16.mxu0 0
    %5329 = vmatpush2.bf16.msra.mxu0 0
    %5330 = vmatprep.subr.bf16.mxu0 0
    %5331 = vmatpush2.bf16.msra.mxu0 0
    %5332 = vmatprep.subr.bf16.mxu0 0
    %5333 = vmatpush2.bf16.msra.mxu0 0
    %5334 = vmatprep.subr.bf16.mxu0 0
    %5335 = vmatpush2.bf16.msra.mxu0 0
    %5336 = vmatprep.subr.bf16.mxu0 0
    %5337 = vmatpush2.bf16.msra.mxu0 0
    %5338 = vmatprep.subr.bf16.mxu0 0
    %5339 = vmatpush2.bf16.msra.mxu0 0
    %5340 = vmatprep.mubr.bf16.mxu0 0
    %5341 = vmatmul.mubr.bf16.gmra.mxu0 %v5306
    %v5342 = vpop.f32.mrf.mxu0
    %v5343 = vadd.f32 0.0, %v5342
    %v5344 = vpop.f32.mrf.mxu0
    %v5345 = vpop.f32.mrf.mxu0
    %v5346 = vpop.f32.mrf.mxu0
    %5347 = vdwg.mxu0
    %v5349 = vrot.slane %v5343, 5
    %v5350 = vrot.slane %v5343, 6
    %v5353 = vadd.f32 %v3901, %v5349
    %v5354 = vadd.f32 %v3909, %v5350
    %v5355 = vxor.u32 %v5353, 2147483648
    %v5356 = vxor.u32 %v5354, 2147483648
    %v5357 = vmul.f32 %v5355, 1.442695
    %v5358 = vpow.pop %v5357
    %v5359 = vmul.f32 %v5356, 1.442695
    %v5360 = vpow.pop %v5359
    %v5361 = vadd.f32 %v5358, 1.0
    %v5362 = vadd.f32 %v5360, 1.0
    %v5363 = vrcp.pop %v5361
    %v5364 = vmul.f32 1.0, %v5363
    %v5365 = vrcp.pop %v5362
    %v5366 = vmul.f32 1.0, %v5365
    %v5367 = vtanh.pop %v5353
    %v5368 = vtanh.pop %v5354
    %v5371 = vrot.slane %v5269, 7
    %v5372 = vrot.slane %v5270, 7
    %v5375 = vmul.f32 %v5364, %v5371
    %v5376 = vmul.f32 %v5366, %v5372
    %5379 = vrot.lane.b32.xlu0 %v5367, 32
    %v5380 = vpop.permute.xlu0 %5379
    %5381 = vrot.lane.b32.xlu0 %v5368, 32
    %v5382 = vpop.permute.xlu0 %5381
    %v5385 = vmul.f32 %v5364, %v5380
    %v5386 = vmul.f32 %v5366, %v5382
    %5389 = vrot.lane.b32.xlu0 %v5385, 32
    %v5390 = vpop.permute.xlu0 %5389
    %5391 = vrot.lane.b32.xlu0 %v5386, 32
    %v5392 = vpop.permute.xlu0 %5391
    %v5395 = vadd.f32 %v5375, %v5390
    %v5396 = vadd.f32 %v5376, %v5392
    %v5397 = vtanh.pop %v5395
    %v5398 = vtanh.pop %v5396
    %5401 = vrot.lane.b32.xlu0 %v5397, 32
    %v5402 = vpop.permute.xlu0 %5401
    %5403 = vrot.lane.b32.xlu0 %v5398, 32
    %v5404 = vpop.permute.xlu0 %5403
    %v5407 = vmul.f32 %v5364, %v5402
    %v5408 = vmul.f32 %v5366, %v5404
    %5411 = vrot.lane.b32.xlu0 %v5407, 64
    %v5412 = vpop.permute.xlu0 %5411
    %5413 = vrot.lane.b32.xlu0 %v5408, 64
    %v5414 = vpop.permute.xlu0 %5413
    %5417 = vst.msk [vmem:[#allocation5 + $0x8] sm:$0x8] %vm4408, %v5412
    %5418 = vst.msk [vmem:[#allocation5 + $0x18] sm:$0x8] %vm4408, %v5414
    %v5419 = vpack.c.bf16 %v5407, %v5407
    %v5420 = vpack.c.bf16 %v5408, %v5408
    %v5423 = vunpack.c.l.b16 %v5419
    %v5424 = vunpack.c.l.b16 %v5420
    %v5425 = vrot.slane %v5423, 3
    %v5426 = vrot.slane %v5424, 2
    %v5427 = vsel %vm4039, %v5426, %v5425
    %v5428 = vpack.c.b16 %v5427, %v5427
    %5429 = vrot.lane.b32.xlu0 %v5428, 64
    %v5430 = vpop.permute.xlu0 %5429
    %v5432 = vsel %vm481, %v5430, 0
    %5434 = vmatprep.subr.bf16.mxu0 0
    %5435 = vmatpush1.bf16.msra.mxu0 0
    %5436 = vmatprep.subr.bf16.mxu0 0
    %5437 = vmatpush1.bf16.msra.mxu0 0
    %5438 = vmatprep.subr.bf16.mxu0 0
    %5439 = vmatpush1.bf16.msra.mxu0 0
    %5440 = vmatprep.subr.bf16.mxu0 0
    %5441 = vmatpush1.bf16.msra.mxu0 0
    %5442 = vmatprep.subr.bf16.mxu0 0
    %5443 = vmatpush1.bf16.msra.mxu0 0
    %5444 = vmatprep.subr.bf16.mxu0 0
    %5445 = vmatpush1.bf16.msra.mxu0 0
    %5446 = vmatprep.subr.bf16.mxu0 0
    %5447 = vmatpush1.bf16.msra.mxu0 %v3921
    %5448 = vmatprep.subr.bf16.mxu0 0
    %5449 = vmatpush1.bf16.msra.mxu0 %v3920
    %5450 = vmatprep.subr.bf16.mxu0 0
    %5451 = vmatpush2.bf16.msra.mxu0 0
    %5452 = vmatprep.subr.bf16.mxu0 0
    %5453 = vmatpush2.bf16.msra.mxu0 0
    %5454 = vmatprep.subr.bf16.mxu0 0
    %5455 = vmatpush2.bf16.msra.mxu0 0
    %5456 = vmatprep.subr.bf16.mxu0 0
    %5457 = vmatpush2.bf16.msra.mxu0 0
    %5458 = vmatprep.subr.bf16.mxu0 0
    %5459 = vmatpush2.bf16.msra.mxu0 0
    %5460 = vmatprep.subr.bf16.mxu0 0
    %5461 = vmatpush2.bf16.msra.mxu0 0
    %5462 = vmatprep.subr.bf16.mxu0 0
    %5463 = vmatpush2.bf16.msra.mxu0 0
    %5464 = vmatprep.subr.bf16.mxu0 0
    %5465 = vmatpush2.bf16.msra.mxu0 0
    %5466 = vmatprep.mubr.bf16.mxu0 0
    %5467 = vmatmul.mubr.bf16.gmra.mxu0 %v5432
    %v5468 = vpop.f32.mrf.mxu0
    %v5469 = vadd.f32 0.0, %v5468
    %v5470 = vpop.f32.mrf.mxu0
    %v5471 = vpop.f32.mrf.mxu0
    %v5472 = vpop.f32.mrf.mxu0
    %5473 = vdwg.mxu0
    %v5475 = vrot.slane %v5469, 4
    %v5476 = vrot.slane %v5469, 5
    %v5479 = vadd.f32 %v3901, %v5475
    %v5480 = vadd.f32 %v3909, %v5476
    %v5481 = vxor.u32 %v5479, 2147483648
    %v5482 = vxor.u32 %v5480, 2147483648
    %v5483 = vmul.f32 %v5481, 1.442695
    %v5484 = vpow.pop %v5483
    %v5485 = vmul.f32 %v5482, 1.442695
    %v5486 = vpow.pop %v5485
    %v5487 = vadd.f32 %v5484, 1.0
    %v5488 = vadd.f32 %v5486, 1.0
    %v5489 = vrcp.pop %v5487
    %v5490 = vmul.f32 1.0, %v5489
    %v5491 = vrcp.pop %v5488
    %v5492 = vmul.f32 1.0, %v5491
    %v5493 = vtanh.pop %v5479
    %v5494 = vtanh.pop %v5480
    %v5497 = vrot.slane %v5395, 7
    %v5498 = vrot.slane %v5396, 7
    %v5501 = vmul.f32 %v5490, %v5497
    %v5502 = vmul.f32 %v5492, %v5498
    %5505 = vrot.lane.b32.xlu0 %v5493, 32
    %v5506 = vpop.permute.xlu0 %5505
    %5507 = vrot.lane.b32.xlu0 %v5494, 32
    %v5508 = vpop.permute.xlu0 %5507
    %v5511 = vmul.f32 %v5490, %v5506
    %v5512 = vmul.f32 %v5492, %v5508
    %5515 = vrot.lane.b32.xlu0 %v5511, 32
    %v5516 = vpop.permute.xlu0 %5515
    %5517 = vrot.lane.b32.xlu0 %v5512, 32
    %v5518 = vpop.permute.xlu0 %5517
    %v5521 = vadd.f32 %v5501, %v5516
    %v5522 = vadd.f32 %v5502, %v5518
    %v5523 = vtanh.pop %v5521
    %v5524 = vtanh.pop %v5522
    %5527 = vrot.lane.b32.xlu0 %v5523, 32
    %v5528 = vpop.permute.xlu0 %5527
    %5529 = vrot.lane.b32.xlu0 %v5524, 32
    %v5530 = vpop.permute.xlu0 %5529
    %v5533 = vmul.f32 %v5490, %v5528
    %v5534 = vmul.f32 %v5492, %v5530
    %5537 = vrot.lane.b32.xlu0 %v5533, 64
    %v5538 = vpop.permute.xlu0 %5537
    %5539 = vrot.lane.b32.xlu0 %v5534, 64
    %v5540 = vpop.permute.xlu0 %5539
    %5543 = vst.msk [vmem:[#allocation5 + $0x8] sm:$0x10] %vm4535, %v5538
    %5544 = vst.msk [vmem:[#allocation5 + $0x18] sm:$0x10] %vm4535, %v5540
    %v5545 = vpack.c.bf16 %v5533, %v5533
    %v5546 = vpack.c.bf16 %v5534, %v5534
    %v5549 = vunpack.c.l.b16 %v5545
    %v5550 = vunpack.c.l.b16 %v5546
    %v5551 = vrot.slane %v5549, 4
    %v5552 = vrot.slane %v5550, 3
    %v5553 = vsel %vm4039, %v5552, %v5551
    %v5554 = vpack.c.b16 %v5553, %v5553
    %5555 = vrot.lane.b32.xlu0 %v5554, 64
    %v5556 = vpop.permute.xlu0 %5555
    %v5558 = vsel %vm481, %v5556, 0
    %5560 = vmatprep.subr.bf16.mxu0 0
    %5561 = vmatpush1.bf16.msra.mxu0 0
    %5562 = vmatprep.subr.bf16.mxu0 0
    %5563 = vmatpush1.bf16.msra.mxu0 0
    %5564 = vmatprep.subr.bf16.mxu0 0
    %5565 = vmatpush1.bf16.msra.mxu0 0
    %5566 = vmatprep.subr.bf16.mxu0 0
    %5567 = vmatpush1.bf16.msra.mxu0 0
    %5568 = vmatprep.subr.bf16.mxu0 0
    %5569 = vmatpush1.bf16.msra.mxu0 0
    %5570 = vmatprep.subr.bf16.mxu0 0
    %5571 = vmatpush1.bf16.msra.mxu0 0
    %5572 = vmatprep.subr.bf16.mxu0 0
    %5573 = vmatpush1.bf16.msra.mxu0 %v3921
    %5574 = vmatprep.subr.bf16.mxu0 0
    %5575 = vmatpush1.bf16.msra.mxu0 %v3920
    %5576 = vmatprep.subr.bf16.mxu0 0
    %5577 = vmatpush2.bf16.msra.mxu0 0
    %5578 = vmatprep.subr.bf16.mxu0 0
    %5579 = vmatpush2.bf16.msra.mxu0 0
    %5580 = vmatprep.subr.bf16.mxu0 0
    %5581 = vmatpush2.bf16.msra.mxu0 0
    %5582 = vmatprep.subr.bf16.mxu0 0
    %5583 = vmatpush2.bf16.msra.mxu0 0
    %5584 = vmatprep.subr.bf16.mxu0 0
    %5585 = vmatpush2.bf16.msra.mxu0 0
    %5586 = vmatprep.subr.bf16.mxu0 0
    %5587 = vmatpush2.bf16.msra.mxu0 0
    %5588 = vmatprep.subr.bf16.mxu0 0
    %5589 = vmatpush2.bf16.msra.mxu0 0
    %5590 = vmatprep.subr.bf16.mxu0 0
    %5591 = vmatpush2.bf16.msra.mxu0 0
    %5592 = vmatprep.mubr.bf16.mxu0 0
    %5593 = vmatmul.mubr.bf16.gmra.mxu0 %v5558
    %v5594 = vpop.f32.mrf.mxu0
    %v5595 = vadd.f32 0.0, %v5594
    %v5596 = vpop.f32.mrf.mxu0
    %v5597 = vpop.f32.mrf.mxu0
    %v5598 = vpop.f32.mrf.mxu0
    %5599 = vdwg.mxu0
    %v5601 = vrot.slane %v5595, 3
    %v5602 = vrot.slane %v5595, 4
    %v5605 = vadd.f32 %v3901, %v5601
    %v5606 = vadd.f32 %v3909, %v5602
    %v5607 = vxor.u32 %v5605, 2147483648
    %v5608 = vxor.u32 %v5606, 2147483648
    %v5609 = vmul.f32 %v5607, 1.442695
    %v5610 = vpow.pop %v5609
    %v5611 = vmul.f32 %v5608, 1.442695
    %v5612 = vpow.pop %v5611
    %v5613 = vadd.f32 %v5610, 1.0
    %v5614 = vadd.f32 %v5612, 1.0
    %v5615 = vrcp.pop %v5613
    %v5616 = vmul.f32 1.0, %v5615
    %v5617 = vrcp.pop %v5614
    %v5618 = vmul.f32 1.0, %v5617
    %v5619 = vtanh.pop %v5605
    %v5620 = vtanh.pop %v5606
    %v5623 = vrot.slane %v5521, 7
    %v5624 = vrot.slane %v5522, 7
    %v5627 = vmul.f32 %v5616, %v5623
    %v5628 = vmul.f32 %v5618, %v5624
    %5631 = vrot.lane.b32.xlu0 %v5619, 32
    %v5632 = vpop.permute.xlu0 %5631
    %5633 = vrot.lane.b32.xlu0 %v5620, 32
    %v5634 = vpop.permute.xlu0 %5633
    %v5637 = vmul.f32 %v5616, %v5632
    %v5638 = vmul.f32 %v5618, %v5634
    %5641 = vrot.lane.b32.xlu0 %v5637, 32
    %v5642 = vpop.permute.xlu0 %5641
    %5643 = vrot.lane.b32.xlu0 %v5638, 32
    %v5644 = vpop.permute.xlu0 %5643
    %v5647 = vadd.f32 %v5627, %v5642
    %v5648 = vadd.f32 %v5628, %v5644
    %v5649 = vtanh.pop %v5647
    %v5650 = vtanh.pop %v5648
    %5653 = vrot.lane.b32.xlu0 %v5649, 32
    %v5654 = vpop.permute.xlu0 %5653
    %5655 = vrot.lane.b32.xlu0 %v5650, 32
    %v5656 = vpop.permute.xlu0 %5655
    %v5659 = vmul.f32 %v5616, %v5654
    %v5660 = vmul.f32 %v5618, %v5656
    %5663 = vrot.lane.b32.xlu0 %v5659, 64
    %v5664 = vpop.permute.xlu0 %5663
    %5665 = vrot.lane.b32.xlu0 %v5660, 64
    %v5666 = vpop.permute.xlu0 %5665
    %5669 = vst.msk [vmem:[#allocation5 + $0x8] sm:$0x20] %vm4662, %v5664
    %5670 = vst.msk [vmem:[#allocation5 + $0x18] sm:$0x20] %vm4662, %v5666
    %v5671 = vpack.c.bf16 %v5659, %v5659
    %v5672 = vpack.c.bf16 %v5660, %v5660
    %v5675 = vunpack.c.l.b16 %v5671
    %v5676 = vunpack.c.l.b16 %v5672
    %v5677 = vrot.slane %v5675, 5
    %v5678 = vrot.slane %v5676, 4
    %v5679 = vsel %vm4039, %v5678, %v5677
    %v5680 = vpack.c.b16 %v5679, %v5679
    %5681 = vrot.lane.b32.xlu0 %v5680, 64
    %v5682 = vpop.permute.xlu0 %5681
    %v5684 = vsel %vm481, %v5682, 0
    %5686 = vmatprep.subr.bf16.mxu0 0
    %5687 = vmatpush1.bf16.msra.mxu0 0
    %5688 = vmatprep.subr.bf16.mxu0 0
    %5689 = vmatpush1.bf16.msra.mxu0 0
    %5690 = vmatprep.subr.bf16.mxu0 0
    %5691 = vmatpush1.bf16.msra.mxu0 0
    %5692 = vmatprep.subr.bf16.mxu0 0
    %5693 = vmatpush1.bf16.msra.mxu0 0
    %5694 = vmatprep.subr.bf16.mxu0 0
    %5695 = vmatpush1.bf16.msra.mxu0 0
    %5696 = vmatprep.subr.bf16.mxu0 0
    %5697 = vmatpush1.bf16.msra.mxu0 0
    %5698 = vmatprep.subr.bf16.mxu0 0
    %5699 = vmatpush1.bf16.msra.mxu0 %v3921
    %5700 = vmatprep.subr.bf16.mxu0 0
    %5701 = vmatpush1.bf16.msra.mxu0 %v3920
    %5702 = vmatprep.subr.bf16.mxu0 0
    %5703 = vmatpush2.bf16.msra.mxu0 0
    %5704 = vmatprep.subr.bf16.mxu0 0
    %5705 = vmatpush2.bf16.msra.mxu0 0
    %5706 = vmatprep.subr.bf16.mxu0 0
    %5707 = vmatpush2.bf16.msra.mxu0 0
    %5708 = vmatprep.subr.bf16.mxu0 0
    %5709 = vmatpush2.bf16.msra.mxu0 0
    %5710 = vmatprep.subr.bf16.mxu0 0
    %5711 = vmatpush2.bf16.msra.mxu0 0
    %5712 = vmatprep.subr.bf16.mxu0 0
    %5713 = vmatpush2.bf16.msra.mxu0 0
    %5714 = vmatprep.subr.bf16.mxu0 0
    %5715 = vmatpush2.bf16.msra.mxu0 0
    %5716 = vmatprep.subr.bf16.mxu0 0
    %5717 = vmatpush2.bf16.msra.mxu0 0
    %5718 = vmatprep.mubr.bf16.mxu0 0
    %5719 = vmatmul.mubr.bf16.gmra.mxu0 %v5684
    %v5720 = vpop.f32.mrf.mxu0
    %v5721 = vadd.f32 0.0, %v5720
    %v5722 = vpop.f32.mrf.mxu0
    %v5723 = vpop.f32.mrf.mxu0
    %v5724 = vpop.f32.mrf.mxu0
    %5725 = vdwg.mxu0
    %v5727 = vrot.slane %v5721, 2
    %v5728 = vrot.slane %v5721, 3
    %v5731 = vadd.f32 %v3901, %v5727
    %v5732 = vadd.f32 %v3909, %v5728
    %v5733 = vxor.u32 %v5731, 2147483648
    %v5734 = vxor.u32 %v5732, 2147483648
    %v5735 = vmul.f32 %v5733, 1.442695
    %v5736 = vpow.pop %v5735
    %v5737 = vmul.f32 %v5734, 1.442695
    %v5738 = vpow.pop %v5737
    %v5739 = vadd.f32 %v5736, 1.0
    %v5740 = vadd.f32 %v5738, 1.0
    %v5741 = vrcp.pop %v5739
    %v5742 = vmul.f32 1.0, %v5741
    %v5743 = vrcp.pop %v5740
    %v5744 = vmul.f32 1.0, %v5743
    %v5745 = vtanh.pop %v5731
    %v5746 = vtanh.pop %v5732
    %v5749 = vrot.slane %v5647, 7
    %v5750 = vrot.slane %v5648, 7
    %v5753 = vmul.f32 %v5742, %v5749
    %v5754 = vmul.f32 %v5744, %v5750
    %5757 = vrot.lane.b32.xlu0 %v5745, 32
    %v5758 = vpop.permute.xlu0 %5757
    %5759 = vrot.lane.b32.xlu0 %v5746, 32
    %v5760 = vpop.permute.xlu0 %5759
    %v5763 = vmul.f32 %v5742, %v5758
    %v5764 = vmul.f32 %v5744, %v5760
    %5767 = vrot.lane.b32.xlu0 %v5763, 32
    %v5768 = vpop.permute.xlu0 %5767
    %5769 = vrot.lane.b32.xlu0 %v5764, 32
    %v5770 = vpop.permute.xlu0 %5769
    %v5773 = vadd.f32 %v5753, %v5768
    %v5774 = vadd.f32 %v5754, %v5770
    %v5775 = vtanh.pop %v5773
    %v5776 = vtanh.pop %v5774
    %5779 = vrot.lane.b32.xlu0 %v5775, 32
    %v5780 = vpop.permute.xlu0 %5779
    %5781 = vrot.lane.b32.xlu0 %v5776, 32
    %v5782 = vpop.permute.xlu0 %5781
    %v5785 = vmul.f32 %v5742, %v5780
    %v5786 = vmul.f32 %v5744, %v5782
    %5789 = vrot.lane.b32.xlu0 %v5785, 64
    %v5790 = vpop.permute.xlu0 %5789
    %5791 = vrot.lane.b32.xlu0 %v5786, 64
    %v5792 = vpop.permute.xlu0 %5791
    %5795 = vst.msk [vmem:[#allocation5 + $0x8] sm:$0x40] %vm4789, %v5790
    %5796 = vst.msk [vmem:[#allocation5 + $0x18] sm:$0x40] %vm4789, %v5792
    %v5797 = vpack.c.bf16 %v5785, %v5785
    %v5798 = vpack.c.bf16 %v5786, %v5786
    %v5801 = vunpack.c.l.b16 %v5797
    %v5802 = vunpack.c.l.b16 %v5798
    %v5803 = vrot.slane %v5801, 6
    %v5804 = vrot.slane %v5802, 5
    %v5805 = vsel %vm4039, %v5804, %v5803
    %v5806 = vpack.c.b16 %v5805, %v5805
    %5807 = vrot.lane.b32.xlu0 %v5806, 64
    %v5808 = vpop.permute.xlu0 %5807
    %v5810 = vsel %vm481, %v5808, 0
    %5812 = vmatprep.subr.bf16.mxu0 0
    %5813 = vmatpush1.bf16.msra.mxu0 0
    %5814 = vmatprep.subr.bf16.mxu0 0
    %5815 = vmatpush1.bf16.msra.mxu0 0
    %5816 = vmatprep.subr.bf16.mxu0 0
    %5817 = vmatpush1.bf16.msra.mxu0 0
    %5818 = vmatprep.subr.bf16.mxu0 0
    %5819 = vmatpush1.bf16.msra.mxu0 0
    %5820 = vmatprep.subr.bf16.mxu0 0
    %5821 = vmatpush1.bf16.msra.mxu0 0
    %5822 = vmatprep.subr.bf16.mxu0 0
    %5823 = vmatpush1.bf16.msra.mxu0 0
    %5824 = vmatprep.subr.bf16.mxu0 0
    %5825 = vmatpush1.bf16.msra.mxu0 %v3921
    %5826 = vmatprep.subr.bf16.mxu0 0
    %5827 = vmatpush1.bf16.msra.mxu0 %v3920
    %5828 = vmatprep.subr.bf16.mxu0 0
    %5829 = vmatpush2.bf16.msra.mxu0 0
    %5830 = vmatprep.subr.bf16.mxu0 0
    %5831 = vmatpush2.bf16.msra.mxu0 0
    %5832 = vmatprep.subr.bf16.mxu0 0
    %5833 = vmatpush2.bf16.msra.mxu0 0
    %5834 = vmatprep.subr.bf16.mxu0 0
    %5835 = vmatpush2.bf16.msra.mxu0 0
    %5836 = vmatprep.subr.bf16.mxu0 0
    %5837 = vmatpush2.bf16.msra.mxu0 0
    %5838 = vmatprep.subr.bf16.mxu0 0
    %5839 = vmatpush2.bf16.msra.mxu0 0
    %5840 = vmatprep.subr.bf16.mxu0 0
    %5841 = vmatpush2.bf16.msra.mxu0 0
    %5842 = vmatprep.subr.bf16.mxu0 0
    %5843 = vmatpush2.bf16.msra.mxu0 0
    %5844 = vmatprep.mubr.bf16.mxu0 0
    %5845 = vmatmul.mubr.bf16.gmra.mxu0 %v5810
    %v5846 = vpop.f32.mrf.mxu0
    %v5847 = vadd.f32 0.0, %v5846
    %v5848 = vpop.f32.mrf.mxu0
    %v5849 = vpop.f32.mrf.mxu0
    %v5850 = vpop.f32.mrf.mxu0
    %5851 = vdwg.mxu0
    %v5853 = vrot.slane %v5847, 1
    %v5854 = vrot.slane %v5847, 2
    %v5857 = vadd.f32 %v3901, %v5853
    %v5858 = vadd.f32 %v3909, %v5854
    %v5859 = vxor.u32 %v5857, 2147483648
    %v5860 = vxor.u32 %v5858, 2147483648
    %v5861 = vmul.f32 %v5859, 1.442695
    %v5862 = vpow.pop %v5861
    %v5863 = vmul.f32 %v5860, 1.442695
    %v5864 = vpow.pop %v5863
    %v5865 = vadd.f32 %v5862, 1.0
    %v5866 = vadd.f32 %v5864, 1.0
    %v5867 = vrcp.pop %v5865
    %v5868 = vmul.f32 1.0, %v5867
    %v5869 = vrcp.pop %v5866
    %v5870 = vmul.f32 1.0, %v5869
    %v5871 = vtanh.pop %v5857
    %v5872 = vtanh.pop %v5858
    %v5875 = vrot.slane %v5773, 7
    %v5876 = vrot.slane %v5774, 7
    %v5879 = vmul.f32 %v5868, %v5875
    %v5880 = vmul.f32 %v5870, %v5876
    %5883 = vrot.lane.b32.xlu0 %v5871, 32
    %v5884 = vpop.permute.xlu0 %5883
    %5885 = vrot.lane.b32.xlu0 %v5872, 32
    %v5886 = vpop.permute.xlu0 %5885
    %v5889 = vmul.f32 %v5868, %v5884
    %v5890 = vmul.f32 %v5870, %v5886
    %5893 = vrot.lane.b32.xlu0 %v5889, 32
    %v5894 = vpop.permute.xlu0 %5893
    %5895 = vrot.lane.b32.xlu0 %v5890, 32
    %v5896 = vpop.permute.xlu0 %5895
    %v5899 = vadd.f32 %v5879, %v5894
    %v5900 = vadd.f32 %v5880, %v5896
    %v5901 = vtanh.pop %v5899
    %v5902 = vtanh.pop %v5900
    %5905 = vrot.lane.b32.xlu0 %v5901, 32
    %v5906 = vpop.permute.xlu0 %5905
    %5907 = vrot.lane.b32.xlu0 %v5902, 32
    %v5908 = vpop.permute.xlu0 %5907
    %v5911 = vmul.f32 %v5868, %v5906
    %v5912 = vmul.f32 %v5870, %v5908
    %5915 = vrot.lane.b32.xlu0 %v5911, 64
    %v5916 = vpop.permute.xlu0 %5915
    %5917 = vrot.lane.b32.xlu0 %v5912, 64
    %v5918 = vpop.permute.xlu0 %5917
    %5921 = vst.msk [vmem:[#allocation5 + $0x8] sm:$0x80] %vm4916, %v5916
    %5922 = vst.msk [vmem:[#allocation5 + $0x18] sm:$0x80] %vm4916, %v5918
    // Predicated region
    $region82: #{encoder_forward.1} parent=1 // pred_check
      _
    $region83: #{encoder_forward.1} parent=1 // pred_check_branch
      %5924 = sbr.rel (0) target = $region85
    $region84: #{encoder_forward.1} parent=1 // pred_region
      %s5926 = ssub.s32 512, 512
      %5927 = vsyncadd [#allocation4], %s5926
      %s5928 = sshll.u32 [#allocation5], 4
      %s5929 = int_to_ptr.vmem [resolvable:$true] %s5928
      %5934 = dma.vmem_to_hbm [thread:$0]  %s5929, 512, %s19, [#allocation4], 128, 128, 8
    $region85: #{encoder_forward.1} parent=1 // pred_fallthru
      _
    // Predicated region
    $region86: #{encoder_forward.1} parent=1 // pred_check
      _
    $region87: #{encoder_forward.1} parent=1 // pred_check_branch
      %5936 = sbr.rel (0) target = $region89
    $region88: #{encoder_forward.1} parent=1 // pred_region
      %5937 = dma.done [#allocation4], 512
    $region89: #{encoder_forward.1} parent=1 // pred_fallthru
      _
    %5938 = vsyncpa [#allocation3], 1
    %5939 = vsyncpa [#allocation4], 1

</llo_original>
